<compile_context>
chip_gen: v5e
topology: v5e:2x2
jax: 0.10.0
libtpu: 0.0.40
codegen_flags: <defaults>
</compile_context>

<pallas_src>
import functools

import jax
import jax.numpy as jnp
import numpy as np
from jax.experimental import pallas as pl
from jax.experimental.pallas import tpu as pltpu


_NEG_BIG = -1e30  # finite "minus infinity" for the diagonal mask


# ----------------------------- Pallas kernel ------------------------------ #
def _cca_kernel(x_ref, wqkv_ref, bqkv_ref, mask_ref, gamma_ref, o_ref):
    x = x_ref[0]                                   # (H, W, C) fp32
    H, W, C = x.shape
    total = wqkv_ref.shape[1]
    Cq = (total - C) // 2

    # Fused 1x1-conv projections: single MXU matmul, single bias broadcast.
    # (H, W, C) -> (H*W, C) is a pure sublane-merge (C stays minor): free.
    xf = x.reshape(H * W, C)
    qkv = (jnp.dot(xf, wqkv_ref[...], preferred_element_type=jnp.float32)
           + bqkv_ref[...]).reshape(H, W, total)
    # Vertical branch lives in W-major layout: one transpose in ...
    qkv_t = jnp.transpose(qkv, (1, 0, 2))          # (W, H, total)

    q, k, v = qkv[:, :, :Cq], qkv[:, :, Cq:2 * Cq], qkv[:, :, 2 * Cq:]
    q_t = qkv_t[:, :, :Cq]
    k_t = qkv_t[:, :, Cq:2 * Cq]
    v_t = qkv_t[:, :, 2 * Cq:]

    # Vertical (column) logits, W-major: e_h_t[w,h,g] = <q[h,w,:], k[g,w,:]>,
    # with a large-negative additive mask on g == h (broadcast over w).
    e_h_t = jnp.einsum('whc,wgc->whg', q_t, k_t,
                       preferred_element_type=jnp.float32) + mask_ref[...]
    # Horizontal (row) logits: e_w[h,w,v'] = <q[h,w,:], k[h,v',:]>.
    e_w = jnp.einsum('hwc,hvc->hwv', q, k,
                     preferred_element_type=jnp.float32)

    # Split joint softmax over the H + W logits (the concatenated tensor is
    # never built): shared max, shared denominator, deferred normalization.
    m_h = jnp.max(e_h_t, axis=-1).T                # (H, W)
    m_w = jnp.max(e_w, axis=-1)                    # (H, W)
    m = jnp.maximum(m_h, m_w)                      # (H, W)
    m_t = m.T                                      # (W, H)

    p_h_t = jnp.exp(e_h_t - m_t[:, :, None])       # (W, H, H)  (EUP)
    p_w = jnp.exp(e_w - m[:, :, None])             # (H, W, W)  (EUP)
    denom = jnp.sum(p_w, axis=-1) + jnp.sum(p_h_t, axis=-1).T   # (H, W)
    # Exact reciprocal (approx=True gives ~2e-4 rel err; keep 1e-4 tolerance).
    inv = pl.reciprocal(denom, approx=False)

    # Unnormalized attention-weighted sums; ... one transpose out.
    out_h = jnp.transpose(
        jnp.einsum('whg,wgc->whc', p_h_t, v_t,
                   preferred_element_type=jnp.float32), (1, 0, 2))  # (H, W, C)
    out_w = jnp.einsum('hwv,hvc->hwc', p_w, v,
                       preferred_element_type=jnp.float32)          # (H, W, C)

    gamma = gamma_ref[0]
    o_ref[0] = gamma * (inv[:, :, None] * (out_h + out_w)) + x


# ------------------------------- wrapper ----------------------------------- #
@jax.jit
def criss_cross_attention(x_nchw, wq, bq, wk, bk, wv, bv, gamma):
    """x_nchw: (B, C, H, W) fp32; weights are (Cin, Cout); returns NCHW."""
    B, C, H, W = x_nchw.shape
    Cq = wq.shape[1]
    total = 2 * Cq + C

    x = jnp.transpose(x_nchw, (0, 2, 3, 1)).astype(jnp.float32)   # NHWC
    wqkv = jnp.concatenate([wq, wk, wv], axis=1).astype(jnp.float32)
    bqkv = jnp.concatenate([bq, bk, bv]).reshape(1, total).astype(jnp.float32)
    mask = jnp.where(jnp.eye(H, dtype=bool),
                     jnp.float32(_NEG_BIG), jnp.float32(0.0))      # (H, H)

    out_nhwc = pl.pallas_call(
        _cca_kernel,
        out_shape=jax.ShapeDtypeStruct((B, H, W, C), jnp.float32),
        grid_spec=pltpu.PrefetchScalarGridSpec(
            num_scalar_prefetch=0,
            grid=(B,),
            in_specs=[
                pl.BlockSpec((1, H, W, C), lambda b: (b, 0, 0, 0)),    # x
                pl.BlockSpec((C, total), lambda b: (0, 0)),            # wqkv
                pl.BlockSpec((1, total), lambda b: (0, 0)),            # bqkv
                pl.BlockSpec((H, H), lambda b: (0, 0)),                # mask
                pl.BlockSpec(memory_space=pltpu.MemorySpace.SMEM),     # gamma
            ],
            out_specs=pl.BlockSpec((1, H, W, C), lambda b: (b, 0, 0, 0)),
        ),
        compiler_params=pltpu.CompilerParams(
            dimension_semantics=("parallel",),
            vmem_limit_bytes=32 * 1024 * 1024),
    )(x, wqkv, bqkv, mask, gamma)

    return jnp.transpose(out_nhwc, (0, 3, 1, 2))


# --------------------- pure-JAX reference (mirrors torch) ------------------ #
def cca_reference(x, wq, bq, wk, bk, wv, bv, gamma):
    B, C, H, W = x.shape
    Cq = wq.shape[1]

    def conv1x1(inp, w, b):
        return jnp.einsum('bchw,cd->bdhw', inp, w) + b[None, :, None, None]

    pq = conv1x1(x, wq, bq)
    pk = conv1x1(x, wk, bk)
    pv = conv1x1(x, wv, bv)

    q_H = jnp.transpose(pq, (0, 3, 1, 2)).reshape(B * W, Cq, H).transpose(0, 2, 1)
    q_W = jnp.transpose(pq, (0, 2, 1, 3)).reshape(B * H, Cq, W).transpose(0, 2, 1)
    k_H = jnp.transpose(pk, (0, 3, 1, 2)).reshape(B * W, Cq, H)
    k_W = jnp.transpose(pk, (0, 2, 1, 3)).reshape(B * H, Cq, W)
    v_H = jnp.transpose(pv, (0, 3, 1, 2)).reshape(B * W, C, H)
    v_W = jnp.transpose(pv, (0, 2, 1, 3)).reshape(B * H, C, W)

    inf_mask = jnp.where(jnp.eye(H, dtype=bool), -jnp.inf, 0.0)[None]
    energy_H = (jnp.matmul(q_H, k_H) + inf_mask).reshape(
        B, W, H, H).transpose(0, 2, 1, 3)
    energy_W = jnp.matmul(q_W, k_W).reshape(B, H, W, W)
    concate = jax.nn.softmax(
        jnp.concatenate([energy_H, energy_W], axis=3), axis=3)
    att_H = concate[:, :, :, :H].transpose(0, 2, 1, 3).reshape(B * W, H, H)
    att_W = concate[:, :, :, H:].reshape(B * H, W, W)
    out_H = jnp.matmul(v_H, att_H.transpose(0, 2, 1)).reshape(
        B, W, C, H).transpose(0, 2, 3, 1)
    out_W = jnp.matmul(v_W, att_W.transpose(0, 2, 1)).reshape(
        B, H, C, W).transpose(0, 2, 1, 3)
    return gamma[0] * (out_H + out_W) + x


# --------------------------------- main ------------------------------------ #
if __name__ == "__main__":
    B, C, H, W = 2, 32, 16, 16
    Cq = C // 8

    key = jax.random.PRNGKey(0)
    kx, k1, k2, k3, k4, k5, k6 = jax.random.split(key, 7)

    x = jax.random.normal(kx, (B, C, H, W), dtype=jnp.float32)
    # Deterministic parameter init (Conv2d 1x1 weights stored as (Cin, Cout)).
    wq = 0.1 * jax.random.normal(k1, (C, Cq), dtype=jnp.float32)
    bq = 0.1 * jax.random.normal(k2, (Cq,), dtype=jnp.float32)
    wk = 0.1 * jax.random.normal(k3, (C, Cq), dtype=jnp.float32)
    bk = 0.1 * jax.random.normal(k4, (Cq,), dtype=jnp.float32)
    wv = 0.1 * jax.random.normal(k5, (C, C), dtype=jnp.float32)
    bv = 0.1 * jax.random.normal(k6, (C,), dtype=jnp.float32)
    # nn.Parameter(torch.zeros(1)) -> gamma starts at 0 in PyTorch; use a
    # nonzero value so the attention path actually contributes to the check.
    gamma = jnp.array([0.5], dtype=jnp.float32)

    out = criss_cross_attention(x, wq, bq, wk, bk, wv, bv, gamma)
    out = jax.block_until_ready(out)

    ref = cca_reference(x, wq, bq, wk, bk, wv, bv, gamma)
    np.testing.assert_allclose(np.asarray(out), np.asarray(ref),
                               rtol=1e-4, atol=1e-4)
    print("KERNEL_OK")
</pallas_src>

<mosaic_0001>
module attributes {stable_mosaic.version = 11 : i64} {
  func.func @_cca_kernel(%arg0: i32, %arg1: memref<1x16x16x32xf32, #tpu.memory_space<vmem>>, %arg2: memref<32x40xf32, #tpu.memory_space<vmem>>, %arg3: memref<1x40xf32, #tpu.memory_space<vmem>>, %arg4: memref<16x16xf32, #tpu.memory_space<vmem>>, %arg5: memref<1xf32, #tpu.memory_space<smem>>, %arg6: memref<1x16x16x32xf32, #tpu.memory_space<vmem>>) attributes {dimension_semantics = [#tpu.dimension_semantics<parallel>], iteration_bounds = array<i64: 2>, scalar_prefetch = 0 : i64, scratch_operands = 0 : i64, tpu.core_type = #tpu.core_type<tc>, window_params = [{transform_indices = @transform_0, window_bounds = array<i64: 1, 16, 16, 32>}, {pipeline_mode = #tpu.pipeline_mode<synchronous>, transform_indices = @transform_1, window_bounds = array<i64: 32, 40>}, {pipeline_mode = #tpu.pipeline_mode<synchronous>, transform_indices = @transform_2, window_bounds = array<i64: 1, 40>}, {pipeline_mode = #tpu.pipeline_mode<synchronous>, transform_indices = @transform_3, window_bounds = array<i64: 16, 16>}, {transform_indices = @transform_4, window_bounds = array<i64: 1>}, {transform_indices = @transform_5, window_bounds = array<i64: 1, 16, 16, 32>}]} {
    %c0 = arith.constant 0 : index
    %c0_0 = arith.constant 0 : index
    %c0_1 = arith.constant 0 : index
    %c0_2 = arith.constant 0 : index
    %0 = vector.load %arg1[%c0, %c0_0, %c0_1, %c0_2] : memref<1x16x16x32xf32, #tpu.memory_space<vmem>>, vector<1x16x16x32xf32>
    %1 = vector.shape_cast %0 : vector<1x16x16x32xf32> to vector<16x16x32xf32>
    %2 = vector.shape_cast %1 : vector<16x16x32xf32> to vector<256x32xf32>
    %c0_3 = arith.constant 0 : index
    %c0_4 = arith.constant 0 : index
    %3 = vector.load %arg2[%c0_3, %c0_4] : memref<32x40xf32, #tpu.memory_space<vmem>>, vector<32x40xf32>
    %cst = arith.constant dense<0.000000e+00> : vector<256x40xf32>
    %4 = tpu.matmul %2, %3, %cst {dimension_numbers = #tpu.dot_dimension_numbers<[1], [0], [0], [1], [0, 0, 1, 1], [], []>} : vector<256x32xf32>, vector<32x40xf32>, vector<256x40xf32> -> vector<256x40xf32>
    %c0_5 = arith.constant 0 : index
    %c0_6 = arith.constant 0 : index
    %5 = vector.load %arg3[%c0_5, %c0_6] : memref<1x40xf32, #tpu.memory_space<vmem>>, vector<1x40xf32>
    %6 = vector.broadcast %5 : vector<1x40xf32> to vector<256x40xf32>
    %7 = arith.addf %4, %6 : vector<256x40xf32>
    %8 = vector.shape_cast %7 : vector<256x40xf32> to vector<16x16x40xf32>
    %9 = tpu.transpose %8, [1, 0, 2] : vector<16x16x40xf32> -> vector<16x16x40xf32>
    %10 = vector.extract_strided_slice %8 {offsets = [0, 0, 0], sizes = [16, 16, 4], strides = [1, 1, 1]} : vector<16x16x40xf32> to vector<16x16x4xf32>
    %11 = vector.extract_strided_slice %8 {offsets = [0, 0, 4], sizes = [16, 16, 4], strides = [1, 1, 1]} : vector<16x16x40xf32> to vector<16x16x4xf32>
    %12 = vector.extract_strided_slice %8 {offsets = [0, 0, 8], sizes = [16, 16, 32], strides = [1, 1, 1]} : vector<16x16x40xf32> to vector<16x16x32xf32>
    %13 = vector.extract_strided_slice %9 {offsets = [0, 0, 0], sizes = [16, 16, 4], strides = [1, 1, 1]} : vector<16x16x40xf32> to vector<16x16x4xf32>
    %14 = vector.extract_strided_slice %9 {offsets = [0, 0, 4], sizes = [16, 16, 4], strides = [1, 1, 1]} : vector<16x16x40xf32> to vector<16x16x4xf32>
    %15 = vector.extract_strided_slice %9 {offsets = [0, 0, 8], sizes = [16, 16, 32], strides = [1, 1, 1]} : vector<16x16x40xf32> to vector<16x16x32xf32>
    "tpu.trace_start"() <{level = 10 : i32, message = "whc,wgc->whg"}> : () -> ()
    %cst_7 = arith.constant dense<0.000000e+00> : vector<16x16x16xf32>
    %16 = tpu.matmul %13, %14, %cst_7 {dimension_numbers = #tpu.dot_dimension_numbers<[2], [2], [1], [1], [0, 0, 0, 1, 1, 1], [0], [0]>} : vector<16x16x4xf32>, vector<16x16x4xf32>, vector<16x16x16xf32> -> vector<16x16x16xf32>
    "tpu.trace_stop"() : () -> ()
    %c0_8 = arith.constant 0 : index
    %c0_9 = arith.constant 0 : index
    %17 = vector.load %arg4[%c0_8, %c0_9] : memref<16x16xf32, #tpu.memory_space<vmem>>, vector<16x16xf32>
    %18 = vector.shape_cast %17 : vector<16x16xf32> to vector<1x16x16xf32>
    %19 = vector.broadcast %18 : vector<1x16x16xf32> to vector<16x16x16xf32>
    %20 = arith.addf %16, %19 : vector<16x16x16xf32>
    "tpu.trace_start"() <{level = 10 : i32, message = "hwc,hvc->hwv"}> : () -> ()
    %cst_10 = arith.constant dense<0.000000e+00> : vector<16x16x16xf32>
    %21 = tpu.matmul %10, %11, %cst_10 {dimension_numbers = #tpu.dot_dimension_numbers<[2], [2], [1], [1], [0, 0, 0, 1, 1, 1], [0], [0]>} : vector<16x16x4xf32>, vector<16x16x4xf32>, vector<16x16x16xf32> -> vector<16x16x16xf32>
    "tpu.trace_stop"() : () -> ()
    %cst_11 = arith.constant dense<0xFF800000> : vector<16x16xf32>
    %22 = vector.multi_reduction <maximumf>, %20, %cst_11 [2] : vector<16x16x16xf32> to vector<16x16xf32>
    %23 = tpu.transpose %22, [1, 0] : vector<16x16xf32> -> vector<16x16xf32>
    %cst_12 = arith.constant dense<0xFF800000> : vector<16x16xf32>
    %24 = vector.multi_reduction <maximumf>, %21, %cst_12 [2] : vector<16x16x16xf32> to vector<16x16xf32>
    %25 = arith.maximumf %23, %24 : vector<16x16xf32>
    %26 = tpu.transpose %25, [1, 0] : vector<16x16xf32> -> vector<16x16xf32>
    %27 = vector.shape_cast %26 : vector<16x16xf32> to vector<16x16x1xf32>
    %28 = vector.broadcast %27 : vector<16x16x1xf32> to vector<16x16x16xf32>
    %29 = arith.subf %20, %28 : vector<16x16x16xf32>
    %30 = math.exp %29 : vector<16x16x16xf32>
    %31 = vector.shape_cast %25 : vector<16x16xf32> to vector<16x16x1xf32>
    %32 = vector.broadcast %31 : vector<16x16x1xf32> to vector<16x16x16xf32>
    %33 = arith.subf %21, %32 : vector<16x16x16xf32>
    %34 = math.exp %33 : vector<16x16x16xf32>
    %cst_13 = arith.constant dense<0.000000e+00> : vector<16x16xf32>
    %35 = vector.multi_reduction <add>, %34, %cst_13 [2] : vector<16x16x16xf32> to vector<16x16xf32>
    %cst_14 = arith.constant dense<0.000000e+00> : vector<16x16xf32>
    %36 = vector.multi_reduction <add>, %30, %cst_14 [2] : vector<16x16x16xf32> to vector<16x16xf32>
    %37 = tpu.transpose %36, [1, 0] : vector<16x16xf32> -> vector<16x16xf32>
    %38 = arith.addf %35, %37 : vector<16x16xf32>
    %39 = tpu.reciprocal %38 : vector<16x16xf32> -> vector<16x16xf32>
    "tpu.trace_start"() <{level = 10 : i32, message = "whg,wgc->whc"}> : () -> ()
    %cst_15 = arith.constant dense<0.000000e+00> : vector<16x16x32xf32>
    %40 = tpu.matmul %30, %15, %cst_15 {dimension_numbers = #tpu.dot_dimension_numbers<[2], [1], [1], [2], [0, 0, 0, 1, 1, 2], [0], [0]>} : vector<16x16x16xf32>, vector<16x16x32xf32>, vector<16x16x32xf32> -> vector<16x16x32xf32>
    "tpu.trace_stop"() : () -> ()
    %41 = tpu.transpose %40, [1, 0, 2] : vector<16x16x32xf32> -> vector<16x16x32xf32>
    "tpu.trace_start"() <{level = 10 : i32, message = "hwv,hvc->hwc"}> : () -> ()
    %cst_16 = arith.constant dense<0.000000e+00> : vector<16x16x32xf32>
    %42 = tpu.matmul %34, %12, %cst_16 {dimension_numbers = #tpu.dot_dimension_numbers<[2], [1], [1], [2], [0, 0, 0, 1, 1, 2], [0], [0]>} : vector<16x16x16xf32>, vector<16x16x32xf32>, vector<16x16x32xf32> -> vector<16x16x32xf32>
    "tpu.trace_stop"() : () -> ()
    %c0_17 = arith.constant 0 : index
    %43 = memref.load %arg5[%c0_17] : memref<1xf32, #tpu.memory_space<smem>>
    %44 = vector.shape_cast %39 : vector<16x16xf32> to vector<16x16x1xf32>
    %45 = arith.addf %41, %42 : vector<16x16x32xf32>
    %46 = vector.broadcast %44 : vector<16x16x1xf32> to vector<16x16x32xf32>
    %47 = arith.mulf %46, %45 : vector<16x16x32xf32>
    %48 = vector.broadcast %43 : f32 to vector<16x16x32xf32>
    %49 = arith.mulf %48, %47 : vector<16x16x32xf32>
    %50 = arith.addf %49, %1 : vector<16x16x32xf32>
    %c0_18 = arith.constant 0 : index
    %c0_19 = arith.constant 0 : index
    %c0_20 = arith.constant 0 : index
    %c0_21 = arith.constant 0 : index
    %51 = vector.load %arg6[%c0_18, %c0_19, %c0_20, %c0_21] : memref<1x16x16x32xf32, #tpu.memory_space<vmem>>, vector<1x16x16x32xf32>
    %52 = vector.shape_cast %51 : vector<1x16x16x32xf32> to vector<16x16x32xf32>
    %53 = vector.shape_cast %50 : vector<16x16x32xf32> to vector<1x16x16x32xf32>
    tpu.vector_store %arg6[%c0_18, %c0_19, %c0_20, %c0_21], %53 {strides = array<i32>} : memref<1x16x16x32xf32, #tpu.memory_space<vmem>>, vector<1x16x16x32xf32>,
    return
  }
  func.func @transform_0(%arg0: i32) -> (i32, i32, i32, i32) {
    %c0_i32 = arith.constant 0 : i32
    %c0_i32_0 = arith.constant 0 : i32
    %c0_i32_1 = arith.constant 0 : i32
    %c0_i32_2 = arith.constant 0 : i32
    return %arg0, %c0_i32, %c0_i32_0, %c0_i32_1 : i32, i32, i32, i32
  }
  func.func @transform_1(%arg0: i32) -> (i32, i32) {
    %c0_i32 = arith.constant 0 : i32
    %c0_i32_0 = arith.constant 0 : i32
    %c0_i32_1 = arith.constant 0 : i32
    return %c0_i32, %c0_i32_0 : i32, i32
  }
  func.func @transform_2(%arg0: i32) -> (i32, i32) {
    %c0_i32 = arith.constant 0 : i32
    %c0_i32_0 = arith.constant 0 : i32
    %c0_i32_1 = arith.constant 0 : i32
    return %c0_i32, %c0_i32_0 : i32, i32
  }
  func.func @transform_3(%arg0: i32) -> (i32, i32) {
    %c0_i32 = arith.constant 0 : i32
    %c0_i32_0 = arith.constant 0 : i32
    %c0_i32_1 = arith.constant 0 : i32
    return %c0_i32, %c0_i32_0 : i32, i32
  }
  func.func @transform_4(%arg0: i32) -> i32 {
    %c0_i32 = arith.constant 0 : i32
    %c0_i32_0 = arith.constant 0 : i32
    return %c0_i32 : i32
  }
  func.func @transform_5(%arg0: i32) -> (i32, i32, i32, i32) {
    %c0_i32 = arith.constant 0 : i32
    %c0_i32_0 = arith.constant 0 : i32
    %c0_i32_1 = arith.constant 0 : i32
    %c0_i32_2 = arith.constant 0 : i32
    return %arg0, %c0_i32, %c0_i32_0, %c0_i32_1 : i32, i32, i32, i32
  }
}

</mosaic_0001>

<llo_original>
// kernel: criss_cross_attention.1
$region0: #{criss_cross_attention.1}
  #allocation0 [shape = 'u32[]', space=smem, size = 0x4, offset = 0x4, fixed_abs, tag = 'smem constant byte address 0x4 - core index']
  #allocation1 [shape = 'u32[72,128]{1,0:T(1,128)}', space=vmem, size = 0x9000, scoped, tag = 'internal scratch']
  #allocation2 [shape = 'f32[1]{0:T(128)S(6)}', space=smem, size = 0x200, scoped, tag = 'scoped memory for criss_cross_attention.1']
  %s0 = inlined_call_operand.hbm [shape: f32[2,16,16,32], index: 0, kind: input, shape index: {}]
  %s1 = inlined_call_operand.vmem [shape: f32[32,40], index: 1, kind: input, shape index: {}]
  %s2 = inlined_call_operand.vmem [shape: f32[1,40], index: 2, kind: input, shape index: {}]
  %s3 = inlined_call_operand.vmem [shape: f32[16,16], index: 3, kind: input, shape index: {}]
  %s4 = inlined_call_operand.<no memory space> [shape: f32[1], index: 4, kind: input, shape index: {}]
  %s5 = inlined_call_operand.hbm [shape: f32[2,16,16,32], index: 5, kind: output, shape index: {}]
  %s6 = sld [smem:[#allocation0]]
  $region57: #{criss_cross_attention.1} parent=0
    _
  %s8 = ssub.s32 1, %s6
  %s9 = scalar_select 0, %s8, %s6
  %10 = sst [smem:[#allocation2]] %s4
  $region1: #{criss_cross_attention.1} parent=0
    #allocation3 [shape = 'u8[262144]{0}', space=vmem, size = 0x40000, scoped, tag = 'input window, operand 0']
    #allocation4 [shape = 's32[2]{0}', space=sflag, size = 0x8, scoped, tag = 'scoped memory for criss_cross_attention.1']
    #allocation5 [shape = 's32[2]{0}', space=sflag, size = 0x8, scoped, tag = 'scoped memory for criss_cross_attention.1']
    #allocation6 [shape = 'u8[262144]{0}', space=vmem, size = 0x40000, scoped, tag = 'output window, operand 0']
    %11 = vsyncpa [#allocation4], 0
    %s12 = scalar_lea.sflag [#allocation4], 1
    %13 = vsyncpa %s12, 0
    %14 = vsyncpa [#allocation5], 0
    %s15 = scalar_lea.sflag [#allocation5], 1
    %16 = vsyncpa %s15, 0
    loop: start=0, step=1, limit=4
    $region2: #{criss_cross_attention.1} parent=1 // loop_pre_header
      _
    $region3: #{criss_cross_attention.1} parent=1 // loop_header
      %s18 = sphi 0, %s22
      %p19 = scmp.ge.s32.totalorder %s18, 4
      %s28 = sphi 0, %s30
      %s31 = sphi 0, %s28
      %s32 = sphi 0, %s31
      %s48 = sphi 0, %s32
      %s52 = sphi 0, %s52
      %s54 = sphi 0, %s52
      %s55 = sphi 0, %s54
      %s69 = sphi 0, %s55
      %s73 = sphi 0, %s73
      %s75 = sphi 0, %s73
      %s76 = sphi 0, %s75
      %s90 = sphi 0, %s76
      %s94 = sphi 0, %s94
      %s96 = sphi 0, %s94
      %s97 = sphi 0, %s96
      %s111 = sphi 0, %s97
      %s115 = sphi 0, %s115
      %s117 = sphi 0, %s115
      %s118 = sphi 0, %s117
      %s132 = sphi 0, %s118
      %s138 = sphi 0, %s140
      %s141 = sphi 0, %s138
      %s142 = sphi 0, %s141
      %s158 = sphi 0, %s142
    $region4: #{criss_cross_attention.1} parent=1 // loop_header_branch
      %21 = sbr.rel (%p19) target = $region8
    $region5: #{criss_cross_attention.1} parent=1 // loop_body
      %s23 = ssub.s32 %s18, 1
      %s24 = ssub.s32 %s18, 2
      %s25 = sadd.s32 %s18, 1
      %s26 = ssub.s32 %s18, %s25
      %p27 = scmp.eq.s32.totalorder %s26, 0
      %s29 = sadd.s32 %s28, 1
      %s30 = scalar_select %p27, %s28, %s29
      %p33 = pneg %p27
      %p34 = scmp.eq.s32.totalorder %s18, 1
      %p35 = por %p33, %p34
      %p36 = scmp.ne.s32.totalorder %s28, %s31
      %p37 = scmp.eq.s32.totalorder %s18, 0
      %p38 = por %p36, %p37
      %p39 = scmp.ne.s32.totalorder %s28, %s31
      %p40 = scmp.eq.s32.totalorder %s23, 1
      %p41 = por %p39, %p40
      %p42 = scmp.ne.s32.totalorder %s31, %s32
      %p43 = scmp.eq.s32.totalorder %s23, 0
      %p44 = por %p42, %p43
      %p45 = scmp.ne.s32.totalorder %s31, %s32
      %p46 = scmp.eq.s32.totalorder %s24, 1
      %p47 = por %p45, %p46
      %p49 = scmp.ne.s32.totalorder %s32, %s48
      %p50 = scmp.eq.s32.totalorder %s24, 0
      %p51 = por %p49, %p50
      %s53 = sadd.s32 %s52, 1
      %p56 = scmp.eq.s32.totalorder %s18, 1
      %p57 = scmp.ne.s32.totalorder %s52, %s54
      %p58 = scmp.eq.s32.totalorder %s18, 0
      %p59 = por %p57, %p58
      %p60 = scmp.ne.s32.totalorder %s52, %s54
      %p61 = scmp.eq.s32.totalorder %s23, 1
      %p62 = por %p60, %p61
      %p63 = scmp.ne.s32.totalorder %s54, %s55
      %p64 = scmp.eq.s32.totalorder %s23, 0
      %p65 = por %p63, %p64
      %p66 = scmp.ne.s32.totalorder %s54, %s55
      %p67 = scmp.eq.s32.totalorder %s24, 1
      %p68 = por %p66, %p67
      %p70 = scmp.ne.s32.totalorder %s55, %s69
      %p71 = scmp.eq.s32.totalorder %s24, 0
      %p72 = por %p70, %p71
      %s74 = sadd.s32 %s73, 1
      %p77 = scmp.eq.s32.totalorder %s18, 1
      %p78 = scmp.ne.s32.totalorder %s73, %s75
      %p79 = scmp.eq.s32.totalorder %s18, 0
      %p80 = por %p78, %p79
      %p81 = scmp.ne.s32.totalorder %s73, %s75
      %p82 = scmp.eq.s32.totalorder %s23, 1
      %p83 = por %p81, %p82
      %p84 = scmp.ne.s32.totalorder %s75, %s76
      %p85 = scmp.eq.s32.totalorder %s23, 0
      %p86 = por %p84, %p85
      %p87 = scmp.ne.s32.totalorder %s75, %s76
      %p88 = scmp.eq.s32.totalorder %s24, 1
      %p89 = por %p87, %p88
      %p91 = scmp.ne.s32.totalorder %s76, %s90
      %p92 = scmp.eq.s32.totalorder %s24, 0
      %p93 = por %p91, %p92
      %s95 = sadd.s32 %s94, 1
      %p98 = scmp.eq.s32.totalorder %s18, 1
      %p99 = scmp.ne.s32.totalorder %s94, %s96
      %p100 = scmp.eq.s32.totalorder %s18, 0
      %p101 = por %p99, %p100
      %p102 = scmp.ne.s32.totalorder %s94, %s96
      %p103 = scmp.eq.s32.totalorder %s23, 1
      %p104 = por %p102, %p103
      %p105 = scmp.ne.s32.totalorder %s96, %s97
      %p106 = scmp.eq.s32.totalorder %s23, 0
      %p107 = por %p105, %p106
      %p108 = scmp.ne.s32.totalorder %s96, %s97
      %p109 = scmp.eq.s32.totalorder %s24, 1
      %p110 = por %p108, %p109
      %p112 = scmp.ne.s32.totalorder %s97, %s111
      %p113 = scmp.eq.s32.totalorder %s24, 0
      %p114 = por %p112, %p113
      %s116 = sadd.s32 %s115, 1
      %p119 = scmp.eq.s32.totalorder %s18, 1
      %p120 = scmp.ne.s32.totalorder %s115, %s117
      %p121 = scmp.eq.s32.totalorder %s18, 0
      %p122 = por %p120, %p121
      %p123 = scmp.ne.s32.totalorder %s115, %s117
      %p124 = scmp.eq.s32.totalorder %s23, 1
      %p125 = por %p123, %p124
      %p126 = scmp.ne.s32.totalorder %s117, %s118
      %p127 = scmp.eq.s32.totalorder %s23, 0
      %p128 = por %p126, %p127
      %p129 = scmp.ne.s32.totalorder %s117, %s118
      %p130 = scmp.eq.s32.totalorder %s24, 1
      %p131 = por %p129, %p130
      %p133 = scmp.ne.s32.totalorder %s118, %s132
      %p134 = scmp.eq.s32.totalorder %s24, 0
      %p135 = por %p133, %p134
      %s136 = ssub.s32 %s18, %s25
      %p137 = scmp.eq.s32.totalorder %s136, 0
      %s139 = sadd.s32 %s138, 1
      %s140 = scalar_select %p137, %s138, %s139
      %p143 = pneg %p137
      %p144 = scmp.eq.s32.totalorder %s18, 1
      %p145 = por %p143, %p144
      %p146 = scmp.ne.s32.totalorder %s138, %s141
      %p147 = scmp.eq.s32.totalorder %s18, 0
      %p148 = por %p146, %p147
      %p149 = scmp.ne.s32.totalorder %s138, %s141
      %p150 = scmp.eq.s32.totalorder %s23, 1
      %p151 = por %p149, %p150
      %p152 = scmp.ne.s32.totalorder %s141, %s142
      %p153 = scmp.eq.s32.totalorder %s23, 0
      %p154 = por %p152, %p153
      %p155 = scmp.ne.s32.totalorder %s141, %s142
      %p156 = scmp.eq.s32.totalorder %s24, 1
      %p157 = por %p155, %p156
      %p159 = scmp.ne.s32.totalorder %s142, %s158
      %p160 = scmp.eq.s32.totalorder %s24, 0
      %p161 = por %p159, %p160
      %p162 = scmp.le.s32.totalorder 1, %s18
      %p163 = scmp.lt.s32.totalorder %s18, 3
      %p164 = pnand %p162, %p163
      %p165 = pneg %p164
      // Predicated region
      $region9: #{criss_cross_attention.1} parent=5 // pred_check
        _
      $region10: #{criss_cross_attention.1} parent=5 // pred_check_branch
        %167 = sbr.rel (%p164) target = $region12
      $region11: #{criss_cross_attention.1} parent=5 // pred_region
        %s168 = ssub.s32 %s18, 1
        // Predicated region
        $region13: #{criss_cross_attention.1} parent=11 // pred_check
          %p169 = pneg %p65
        $region14: #{criss_cross_attention.1} parent=11 // pred_check_branch
          %171 = sbr.rel (%p169) target = $region16
        $region15: #{criss_cross_attention.1} parent=11 // pred_region
          _
        $region16: #{criss_cross_attention.1} parent=11 // pred_fallthru
          _
        // Predicated region
        $region17: #{criss_cross_attention.1} parent=11 // pred_check
          %p172 = pneg %p86
        $region18: #{criss_cross_attention.1} parent=11 // pred_check_branch
          %174 = sbr.rel (%p172) target = $region20
        $region19: #{criss_cross_attention.1} parent=11 // pred_region
          _
        $region20: #{criss_cross_attention.1} parent=11 // pred_fallthru
          _
        // Predicated region
        $region21: #{criss_cross_attention.1} parent=11 // pred_check
          %p175 = pneg %p107
        $region22: #{criss_cross_attention.1} parent=11 // pred_check_branch
          %177 = sbr.rel (%p175) target = $region24
        $region23: #{criss_cross_attention.1} parent=11 // pred_region
          _
        $region24: #{criss_cross_attention.1} parent=11 // pred_fallthru
          _
        // Predicated region
        $region25: #{criss_cross_attention.1} parent=11 // pred_check
          %p178 = pneg %p128
        $region26: #{criss_cross_attention.1} parent=11 // pred_check_branch
          %180 = sbr.rel (%p178) target = $region28
        $region27: #{criss_cross_attention.1} parent=11 // pred_region
          _
        $region28: #{criss_cross_attention.1} parent=11 // pred_fallthru
          _
      $region12: #{criss_cross_attention.1} parent=5 // pred_fallthru
        _
      %p181 = scmp.lt.s32.totalorder %s18, 2
      // Predicated region
      $region29: #{criss_cross_attention.1} parent=5 // pred_check
        %p182 = pneg %p181
      $region30: #{criss_cross_attention.1} parent=5 // pred_check_branch
        %184 = sbr.rel (%p182) target = $region32
      $region31: #{criss_cross_attention.1} parent=5 // pred_region
        // Predicated region
        $region33: #{criss_cross_attention.1} parent=31 // pred_check
          %p185 = pneg %p38
        $region34: #{criss_cross_attention.1} parent=31 // pred_check_branch
          %187 = sbr.rel (%p185) target = $region36
        $region35: #{criss_cross_attention.1} parent=31 // pred_region
          %s188 = sand.u32 %s28, 1
          %s189 = scalar_lea.sflag [#allocation4], %s188
          %s190 = sand.u32 %s28, 1
          %s191 = smul.addr %s190, 256
          %s192 = scalar_lea.vmem [#allocation3], %s191
          %194 = vsyncadd %s189, 0
          %s195 = smul.addr %s18, 32
          %s196 = smul.addr %s195, 8
          %s197 = scalar_lea.hbm %s0, %s196
          %s198 = sshll.u32 %s197, 4
          %s199 = int_to_ptr.hbm [resolvable:$true] %s198
          %s200 = sshll.u32 %s192, 4
          %s201 = int_to_ptr.vmem [resolvable:$true] %s200
          %206 = dma.hbm_to_vmem [thread:$0]  %s199, 4096, %s201, %s189, 128, 128, 8
        $region36: #{criss_cross_attention.1} parent=31 // pred_fallthru
          _
      $region32: #{criss_cross_attention.1} parent=5 // pred_fallthru
        _
      %p207 = scmp.le.s32.totalorder 1, %s18
      %p208 = scmp.lt.s32.totalorder %s18, 3
      %p209 = pnand %p207, %p208
      %p210 = pneg %p209
      // Predicated region
      $region37: #{criss_cross_attention.1} parent=5 // pred_check
        _
      $region38: #{criss_cross_attention.1} parent=5 // pred_check_branch
        %212 = sbr.rel (%p209) target = $region40
      $region39: #{criss_cross_attention.1} parent=5 // pred_region
        %s213 = ssub.s32 %s18, 1
        %s214 = sand.u32 %s31, 1
        %s215 = scalar_lea.sflag [#allocation4], %s214
        %s216 = sand.u32 %s31, 1
        %s217 = smul.addr %s216, 256
        %s218 = scalar_lea.vmem [#allocation3], %s217
        // Predicated region
        $region41: #{criss_cross_attention.1} parent=39 // pred_check
          %p219 = pneg %p44
        $region42: #{criss_cross_attention.1} parent=39 // pred_check_branch
          %221 = sbr.rel (%p219) target = $region44
        $region43: #{criss_cross_attention.1} parent=39 // pred_region
          %223 = dma.done %s215, 4096
        $region44: #{criss_cross_attention.1} parent=39 // pred_fallthru
          _
        %s224 = sand.u32 %s31, 1
        %s225 = scalar_lea.sflag [#allocation4], %s224
        %s226 = sand.u32 %s31, 1
        %s227 = smul.addr %s226, 256
        %s228 = scalar_lea.vmem [#allocation3], %s227
        %p229 = pneg %p44
        %p230 = pneg %p41
        %p231 = pneg %p65
        %p232 = pneg %p62
        %p233 = pneg %p86
        %p234 = pneg %p83
        %p235 = pneg %p107
        %p236 = pneg %p104
        %p237 = pneg %p128
        %p238 = pneg %p125
        %p239 = pneg %p154
        %p240 = pneg %p151
        %s241 = sand.u32 %s141, 1
        %s242 = scalar_lea.sflag [#allocation5], %s241
        %s243 = sand.u32 %s141, 1
        %s244 = smul.addr %s243, 256
        %s245 = scalar_lea.vmem [#allocation6], %s244
        %v246 = vld [vmem:[%s218] sm:$0xff]
        %v247 = vld [vmem:[%s218 + $0x8] sm:$0xff]
        %v248 = vld [vmem:[%s218 + $0x10] sm:$0xff]
        %v249 = vld [vmem:[%s218 + $0x18] sm:$0xff]
        %v250 = vld [vmem:[%s218 + $0x20] sm:$0xff]
        %v251 = vld [vmem:[%s218 + $0x28] sm:$0xff]
        %v252 = vld [vmem:[%s218 + $0x30] sm:$0xff]
        %v253 = vld [vmem:[%s218 + $0x38] sm:$0xff]
        %v254 = vld [vmem:[%s218 + $0x40] sm:$0xff]
        %v255 = vld [vmem:[%s218 + $0x48] sm:$0xff]
        %v256 = vld [vmem:[%s218 + $0x50] sm:$0xff]
        %v257 = vld [vmem:[%s218 + $0x58] sm:$0xff]
        %v258 = vld [vmem:[%s218 + $0x60] sm:$0xff]
        %v259 = vld [vmem:[%s218 + $0x68] sm:$0xff]
        %v260 = vld [vmem:[%s218 + $0x70] sm:$0xff]
        %v261 = vld [vmem:[%s218 + $0x78] sm:$0xff]
        %v262 = vld [vmem:[%s218 + $0x80] sm:$0xff]
        %v263 = vld [vmem:[%s218 + $0x88] sm:$0xff]
        %v264 = vld [vmem:[%s218 + $0x90] sm:$0xff]
        %v265 = vld [vmem:[%s218 + $0x98] sm:$0xff]
        %v266 = vld [vmem:[%s218 + $0xa0] sm:$0xff]
        %v267 = vld [vmem:[%s218 + $0xa8] sm:$0xff]
        %v268 = vld [vmem:[%s218 + $0xb0] sm:$0xff]
        %v269 = vld [vmem:[%s218 + $0xb8] sm:$0xff]
        %v270 = vld [vmem:[%s218 + $0xc0] sm:$0xff]
        %v271 = vld [vmem:[%s218 + $0xc8] sm:$0xff]
        %v272 = vld [vmem:[%s218 + $0xd0] sm:$0xff]
        %v273 = vld [vmem:[%s218 + $0xd8] sm:$0xff]
        %v274 = vld [vmem:[%s218 + $0xe0] sm:$0xff]
        %v275 = vld [vmem:[%s218 + $0xe8] sm:$0xff]
        %v276 = vld [vmem:[%s218 + $0xf0] sm:$0xff]
        %v277 = vld [vmem:[%s218 + $0xf8] sm:$0xff]
        %v278 = vld [vmem:[%s1] sm:$0xff]
        %v279 = vld [vmem:[%s1 + $0x8] sm:$0xff]
        %v280 = vld [vmem:[%s1 + $0x10] sm:$0xff]
        %v281 = vld [vmem:[%s1 + $0x18] sm:$0xff]
        %v282 = vld [vmem:[%s2] sm:$0x1]
        %v284 = vperm.slane %v282, 0
        %vm286 = vcmask 261120
        %v288 = vsel %vm286, %v246, 0
        %v291 = vsel %vm286, %v247, 0
        %v294 = vsel %vm286, %v248, 0
        %v297 = vsel %vm286, %v249, 0
        %v300 = vsel %vm286, %v250, 0
        %v303 = vsel %vm286, %v251, 0
        %v306 = vsel %vm286, %v252, 0
        %v309 = vsel %vm286, %v253, 0
        %v312 = vsel %vm286, %v254, 0
        %v315 = vsel %vm286, %v255, 0
        %v318 = vsel %vm286, %v256, 0
        %v321 = vsel %vm286, %v257, 0
        %v324 = vsel %vm286, %v258, 0
        %v327 = vsel %vm286, %v259, 0
        %v330 = vsel %vm286, %v260, 0
        %v333 = vsel %vm286, %v261, 0
        %v336 = vsel %vm286, %v262, 0
        %v339 = vsel %vm286, %v263, 0
        %v342 = vsel %vm286, %v264, 0
        %v345 = vsel %vm286, %v265, 0
        %v348 = vsel %vm286, %v266, 0
        %v351 = vsel %vm286, %v267, 0
        %v354 = vsel %vm286, %v268, 0
        %v357 = vsel %vm286, %v269, 0
        %v360 = vsel %vm286, %v270, 0
        %v363 = vsel %vm286, %v271, 0
        %v366 = vsel %vm286, %v272, 0
        %v369 = vsel %vm286, %v273, 0
        %v372 = vsel %vm286, %v274, 0
        %v375 = vsel %vm286, %v275, 0
        %v378 = vsel %vm286, %v276, 0
        %v381 = vsel %vm286, %v277, 0
        %383 = vmatpush.msra.mxu0 0.0
        %384 = vmatpush.msra.mxu0 0.0
        %385 = vmatpush.msra.mxu0 0.0
        %386 = vmatpush.msra.mxu0 0.0
        %387 = vmatpush.msra.mxu0 0.0
        %388 = vmatpush.msra.mxu0 0.0
        %389 = vmatpush.msra.mxu0 0.0
        %390 = vmatpush.msra.mxu0 0.0
        %391 = vmatpush.msra.mxu0 0.0
        %392 = vmatpush.msra.mxu0 0.0
        %393 = vmatpush.msra.mxu0 0.0
        %394 = vmatpush.msra.mxu0 0.0
        %395 = vmatpush.msra.mxu0 %v281
        %396 = vmatpush.msra.mxu0 %v280
        %397 = vmatpush.msra.mxu0 %v279
        %398 = vmatpush.msra.mxu0 %v278
        %399 = vmatmul.f32.gmra.mxu0 %v288
        %v400 = vpop.f32.mrf.mxu0
        %v401 = vadd.f32 %v284, %v400
        %402 = vmatmul.f32.gmra.mxu0 %v291
        %v403 = vpop.f32.mrf.mxu0
        %v404 = vadd.f32 %v284, %v403
        %405 = vmatmul.f32.gmra.mxu0 %v294
        %v406 = vpop.f32.mrf.mxu0
        %v407 = vadd.f32 %v284, %v406
        %408 = vmatmul.f32.gmra.mxu0 %v297
        %v409 = vpop.f32.mrf.mxu0
        %v410 = vadd.f32 %v284, %v409
        %411 = vmatmul.f32.gmra.mxu0 %v300
        %v412 = vpop.f32.mrf.mxu0
        %v413 = vadd.f32 %v284, %v412
        %414 = vmatmul.f32.gmra.mxu0 %v303
        %v415 = vpop.f32.mrf.mxu0
        %v416 = vadd.f32 %v284, %v415
        %417 = vmatmul.f32.gmra.mxu0 %v306
        %v418 = vpop.f32.mrf.mxu0
        %v419 = vadd.f32 %v284, %v418
        %420 = vmatmul.f32.gmra.mxu0 %v309
        %v421 = vpop.f32.mrf.mxu0
        %v422 = vadd.f32 %v284, %v421
        %423 = vmatmul.f32.gmra.mxu0 %v312
        %v424 = vpop.f32.mrf.mxu0
        %v425 = vadd.f32 %v284, %v424
        %426 = vmatmul.f32.gmra.mxu0 %v315
        %v427 = vpop.f32.mrf.mxu0
        %v428 = vadd.f32 %v284, %v427
        %429 = vmatmul.f32.gmra.mxu0 %v318
        %v430 = vpop.f32.mrf.mxu0
        %v431 = vadd.f32 %v284, %v430
        %432 = vmatmul.f32.gmra.mxu0 %v321
        %v433 = vpop.f32.mrf.mxu0
        %v434 = vadd.f32 %v284, %v433
        %435 = vmatmul.f32.gmra.mxu0 %v324
        %v436 = vpop.f32.mrf.mxu0
        %v437 = vadd.f32 %v284, %v436
        %438 = vmatmul.f32.gmra.mxu0 %v327
        %v439 = vpop.f32.mrf.mxu0
        %v440 = vadd.f32 %v284, %v439
        %441 = vmatmul.f32.gmra.mxu0 %v330
        %v442 = vpop.f32.mrf.mxu0
        %v443 = vadd.f32 %v284, %v442
        %444 = vmatmul.f32.gmra.mxu0 %v333
        %v445 = vpop.f32.mrf.mxu0
        %v446 = vadd.f32 %v284, %v445
        %447 = vmatmul.f32.gmra.mxu0 %v336
        %v448 = vpop.f32.mrf.mxu0
        %v449 = vadd.f32 %v284, %v448
        %450 = vmatmul.f32.gmra.mxu0 %v339
        %v451 = vpop.f32.mrf.mxu0
        %v452 = vadd.f32 %v284, %v451
        %453 = vmatmul.f32.gmra.mxu0 %v342
        %v454 = vpop.f32.mrf.mxu0
        %v455 = vadd.f32 %v284, %v454
        %456 = vmatmul.f32.gmra.mxu0 %v345
        %v457 = vpop.f32.mrf.mxu0
        %v458 = vadd.f32 %v284, %v457
        %459 = vmatmul.f32.gmra.mxu0 %v348
        %v460 = vpop.f32.mrf.mxu0
        %v461 = vadd.f32 %v284, %v460
        %462 = vmatmul.f32.gmra.mxu0 %v351
        %v463 = vpop.f32.mrf.mxu0
        %v464 = vadd.f32 %v284, %v463
        %465 = vmatmul.f32.gmra.mxu0 %v354
        %v466 = vpop.f32.mrf.mxu0
        %v467 = vadd.f32 %v284, %v466
        %468 = vmatmul.f32.gmra.mxu0 %v357
        %v469 = vpop.f32.mrf.mxu0
        %v470 = vadd.f32 %v284, %v469
        %471 = vmatmul.f32.gmra.mxu0 %v360
        %v472 = vpop.f32.mrf.mxu0
        %v473 = vadd.f32 %v284, %v472
        %474 = vmatmul.f32.gmra.mxu0 %v363
        %v475 = vpop.f32.mrf.mxu0
        %v476 = vadd.f32 %v284, %v475
        %477 = vmatmul.f32.gmra.mxu0 %v366
        %v478 = vpop.f32.mrf.mxu0
        %v479 = vadd.f32 %v284, %v478
        %480 = vmatmul.f32.gmra.mxu0 %v369
        %v481 = vpop.f32.mrf.mxu0
        %v482 = vadd.f32 %v284, %v481
        %483 = vmatmul.f32.gmra.mxu0 %v372
        %v484 = vpop.f32.mrf.mxu0
        %v485 = vadd.f32 %v284, %v484
        %486 = vmatmul.f32.gmra.mxu0 %v375
        %v487 = vpop.f32.mrf.mxu0
        %v488 = vadd.f32 %v284, %v487
        %489 = vmatmul.f32.gmra.mxu0 %v378
        %v490 = vpop.f32.mrf.mxu0
        %v491 = vadd.f32 %v284, %v490
        %492 = vmatmul.f32.gmra.mxu0 %v381
        %v493 = vpop.f32.mrf.mxu0
        %v494 = vadd.f32 %v284, %v493
        %495 = vdwg.mxu0
        %v496 = vrot.slane %v413, 4
        %vm497 = vcmask 1047556
        %v498 = vsel %vm497, %v496, %v401
        %v499 = vrot.slane %v401, 4
        %v500 = vsel %vm497, %v413, %v499
        %v502 = vunpack.c.l.s4 1983009808
        %v503 = vunpack.c.0.s8 %v502
        %v504 = vperm.slane %v498, %v503
        %v506 = vunpack.c.l.s4 1983009808
        %v507 = vunpack.c.0.s8 %v506
        %v508 = vperm.slane %v500, %v507
        %v509 = vrot.slane %v419, 4
        %v510 = vsel %vm497, %v509, %v407
        %v511 = vrot.slane %v407, 4
        %v512 = vsel %vm497, %v419, %v511
        %v514 = vunpack.c.l.s4 1983009808
        %v515 = vunpack.c.0.s8 %v514
        %v516 = vperm.slane %v510, %v515
        %v518 = vunpack.c.l.s4 1983009808
        %v519 = vunpack.c.0.s8 %v518
        %v520 = vperm.slane %v512, %v519
        %v521 = vrot.slane %v437, 4
        %v522 = vsel %vm497, %v521, %v425
        %v523 = vrot.slane %v425, 4
        %v524 = vsel %vm497, %v437, %v523
        %v526 = vunpack.c.l.s4 1983009808
        %v527 = vunpack.c.0.s8 %v526
        %v528 = vperm.slane %v522, %v527
        %v530 = vunpack.c.l.s4 1983009808
        %v531 = vunpack.c.0.s8 %v530
        %v532 = vperm.slane %v524, %v531
        %v533 = vrot.slane %v443, 4
        %v534 = vsel %vm497, %v533, %v431
        %v535 = vrot.slane %v431, 4
        %v536 = vsel %vm497, %v443, %v535
        %v538 = vunpack.c.l.s4 1983009808
        %v539 = vunpack.c.0.s8 %v538
        %v540 = vperm.slane %v534, %v539
        %v542 = vunpack.c.l.s4 1983009808
        %v543 = vunpack.c.0.s8 %v542
        %v544 = vperm.slane %v536, %v543
        %v545 = vrot.slane %v516, 4
        %v546 = vsel %vm497, %v545, %v504
        %v547 = vrot.slane %v504, 4
        %v548 = vsel %vm497, %v516, %v547
        %v550 = vunpack.c.l.s4 1934713408
        %v551 = vunpack.c.0.s8 %v550
        %v552 = vperm.slane %v546, %v551
        %v554 = vunpack.c.l.s4 1934713408
        %v555 = vunpack.c.0.s8 %v554
        %v556 = vperm.slane %v548, %v555
        %v557 = vrot.slane %v520, 4
        %v558 = vsel %vm497, %v557, %v508
        %v559 = vrot.slane %v508, 4
        %v560 = vsel %vm497, %v520, %v559
        %v562 = vunpack.c.l.s4 1934713408
        %v563 = vunpack.c.0.s8 %v562
        %v564 = vperm.slane %v558, %v563
        %v566 = vunpack.c.l.s4 1934713408
        %v567 = vunpack.c.0.s8 %v566
        %v568 = vperm.slane %v560, %v567
        %v569 = vrot.slane %v540, 4
        %v570 = vsel %vm497, %v569, %v528
        %v571 = vrot.slane %v528, 4
        %v572 = vsel %vm497, %v540, %v571
        %v574 = vunpack.c.l.s4 1934713408
        %v575 = vunpack.c.0.s8 %v574
        %v576 = vperm.slane %v570, %v575
        %v578 = vunpack.c.l.s4 1934713408
        %v579 = vunpack.c.0.s8 %v578
        %v580 = vperm.slane %v572, %v579
        %v581 = vrot.slane %v544, 4
        %v582 = vsel %vm497, %v581, %v532
        %v583 = vrot.slane %v532, 4
        %v584 = vsel %vm497, %v544, %v583
        %v586 = vunpack.c.l.s4 1934713408
        %v587 = vunpack.c.0.s8 %v586
        %v588 = vperm.slane %v582, %v587
        %v590 = vunpack.c.l.s4 1934713408
        %v591 = vunpack.c.0.s8 %v590
        %v592 = vperm.slane %v584, %v591
        %v593 = vrot.slane %v576, 4
        %v594 = vsel %vm497, %v593, %v552
        %v595 = vrot.slane %v552, 4
        %v596 = vsel %vm497, %v576, %v595
        %v597 = vrot.slane %v580, 4
        %v598 = vsel %vm497, %v597, %v556
        %v599 = vrot.slane %v556, 4
        %v600 = vsel %vm497, %v580, %v599
        %v601 = vrot.slane %v588, 4
        %v602 = vsel %vm497, %v601, %v564
        %v603 = vrot.slane %v564, 4
        %v604 = vsel %vm497, %v588, %v603
        %v605 = vrot.slane %v592, 4
        %v606 = vsel %vm497, %v605, %v568
        %v607 = vrot.slane %v568, 4
        %v608 = vsel %vm497, %v592, %v607
        %v609 = vrot.slane %v461, 4
        %v610 = vsel %vm497, %v609, %v449
        %v611 = vrot.slane %v449, 4
        %v612 = vsel %vm497, %v461, %v611
        %v614 = vunpack.c.l.s4 1983009808
        %v615 = vunpack.c.0.s8 %v614
        %v616 = vperm.slane %v610, %v615
        %v618 = vunpack.c.l.s4 1983009808
        %v619 = vunpack.c.0.s8 %v618
        %v620 = vperm.slane %v612, %v619
        %v621 = vrot.slane %v467, 4
        %v622 = vsel %vm497, %v621, %v455
        %v623 = vrot.slane %v455, 4
        %v624 = vsel %vm497, %v467, %v623
        %v626 = vunpack.c.l.s4 1983009808
        %v627 = vunpack.c.0.s8 %v626
        %v628 = vperm.slane %v622, %v627
        %v630 = vunpack.c.l.s4 1983009808
        %v631 = vunpack.c.0.s8 %v630
        %v632 = vperm.slane %v624, %v631
        %v633 = vrot.slane %v485, 4
        %v634 = vsel %vm497, %v633, %v473
        %v635 = vrot.slane %v473, 4
        %v636 = vsel %vm497, %v485, %v635
        %v638 = vunpack.c.l.s4 1983009808
        %v639 = vunpack.c.0.s8 %v638
        %v640 = vperm.slane %v634, %v639
        %v642 = vunpack.c.l.s4 1983009808
        %v643 = vunpack.c.0.s8 %v642
        %v644 = vperm.slane %v636, %v643
        %v645 = vrot.slane %v491, 4
        %v646 = vsel %vm497, %v645, %v479
        %v647 = vrot.slane %v479, 4
        %v648 = vsel %vm497, %v491, %v647
        %v650 = vunpack.c.l.s4 1983009808
        %v651 = vunpack.c.0.s8 %v650
        %v652 = vperm.slane %v646, %v651
        %v654 = vunpack.c.l.s4 1983009808
        %v655 = vunpack.c.0.s8 %v654
        %v656 = vperm.slane %v648, %v655
        %v657 = vrot.slane %v628, 4
        %v658 = vsel %vm497, %v657, %v616
        %v659 = vrot.slane %v616, 4
        %v660 = vsel %vm497, %v628, %v659
        %v662 = vunpack.c.l.s4 1934713408
        %v663 = vunpack.c.0.s8 %v662
        %v664 = vperm.slane %v658, %v663
        %v666 = vunpack.c.l.s4 1934713408
        %v667 = vunpack.c.0.s8 %v666
        %v668 = vperm.slane %v660, %v667
        %v669 = vrot.slane %v632, 4
        %v670 = vsel %vm497, %v669, %v620
        %v671 = vrot.slane %v620, 4
        %v672 = vsel %vm497, %v632, %v671
        %v674 = vunpack.c.l.s4 1934713408
        %v675 = vunpack.c.0.s8 %v674
        %v676 = vperm.slane %v670, %v675
        %v678 = vunpack.c.l.s4 1934713408
        %v679 = vunpack.c.0.s8 %v678
        %v680 = vperm.slane %v672, %v679
        %v681 = vrot.slane %v652, 4
        %v682 = vsel %vm497, %v681, %v640
        %v683 = vrot.slane %v640, 4
        %v684 = vsel %vm497, %v652, %v683
        %v686 = vunpack.c.l.s4 1934713408
        %v687 = vunpack.c.0.s8 %v686
        %v688 = vperm.slane %v682, %v687
        %v690 = vunpack.c.l.s4 1934713408
        %v691 = vunpack.c.0.s8 %v690
        %v692 = vperm.slane %v684, %v691
        %v693 = vrot.slane %v656, 4
        %v694 = vsel %vm497, %v693, %v644
        %v695 = vrot.slane %v644, 4
        %v696 = vsel %vm497, %v656, %v695
        %v698 = vunpack.c.l.s4 1934713408
        %v699 = vunpack.c.0.s8 %v698
        %v700 = vperm.slane %v694, %v699
        %v702 = vunpack.c.l.s4 1934713408
        %v703 = vunpack.c.0.s8 %v702
        %v704 = vperm.slane %v696, %v703
        %v705 = vrot.slane %v688, 4
        %v706 = vsel %vm497, %v705, %v664
        %v707 = vrot.slane %v664, 4
        %v708 = vsel %vm497, %v688, %v707
        %v709 = vrot.slane %v692, 4
        %v710 = vsel %vm497, %v709, %v668
        %v711 = vrot.slane %v668, 4
        %v712 = vsel %vm497, %v692, %v711
        %v713 = vrot.slane %v700, 4
        %v714 = vsel %vm497, %v713, %v676
        %v715 = vrot.slane %v676, 4
        %v716 = vsel %vm497, %v700, %v715
        %v717 = vrot.slane %v704, 4
        %v718 = vsel %vm497, %v717, %v680
        %v719 = vrot.slane %v680, 4
        %v720 = vsel %vm497, %v704, %v719
        %v721 = vrot.slane %v416, 4
        %v722 = vsel %vm497, %v721, %v404
        %v723 = vrot.slane %v404, 4
        %v724 = vsel %vm497, %v416, %v723
        %v726 = vunpack.c.l.s4 1983009808
        %v727 = vunpack.c.0.s8 %v726
        %v728 = vperm.slane %v722, %v727
        %v730 = vunpack.c.l.s4 1983009808
        %v731 = vunpack.c.0.s8 %v730
        %v732 = vperm.slane %v724, %v731
        %v733 = vrot.slane %v422, 4
        %v734 = vsel %vm497, %v733, %v410
        %v735 = vrot.slane %v410, 4
        %v736 = vsel %vm497, %v422, %v735
        %v738 = vunpack.c.l.s4 1983009808
        %v739 = vunpack.c.0.s8 %v738
        %v740 = vperm.slane %v734, %v739
        %v742 = vunpack.c.l.s4 1983009808
        %v743 = vunpack.c.0.s8 %v742
        %v744 = vperm.slane %v736, %v743
        %v745 = vrot.slane %v440, 4
        %v746 = vsel %vm497, %v745, %v428
        %v747 = vrot.slane %v428, 4
        %v748 = vsel %vm497, %v440, %v747
        %v750 = vunpack.c.l.s4 1983009808
        %v751 = vunpack.c.0.s8 %v750
        %v752 = vperm.slane %v746, %v751
        %v754 = vunpack.c.l.s4 1983009808
        %v755 = vunpack.c.0.s8 %v754
        %v756 = vperm.slane %v748, %v755
        %v757 = vrot.slane %v446, 4
        %v758 = vsel %vm497, %v757, %v434
        %v759 = vrot.slane %v434, 4
        %v760 = vsel %vm497, %v446, %v759
        %v762 = vunpack.c.l.s4 1983009808
        %v763 = vunpack.c.0.s8 %v762
        %v764 = vperm.slane %v758, %v763
        %v766 = vunpack.c.l.s4 1983009808
        %v767 = vunpack.c.0.s8 %v766
        %v768 = vperm.slane %v760, %v767
        %v769 = vrot.slane %v740, 4
        %v770 = vsel %vm497, %v769, %v728
        %v771 = vrot.slane %v728, 4
        %v772 = vsel %vm497, %v740, %v771
        %v774 = vunpack.c.l.s4 1934713408
        %v775 = vunpack.c.0.s8 %v774
        %v776 = vperm.slane %v770, %v775
        %v778 = vunpack.c.l.s4 1934713408
        %v779 = vunpack.c.0.s8 %v778
        %v780 = vperm.slane %v772, %v779
        %v781 = vrot.slane %v744, 4
        %v782 = vsel %vm497, %v781, %v732
        %v783 = vrot.slane %v732, 4
        %v784 = vsel %vm497, %v744, %v783
        %v786 = vunpack.c.l.s4 1934713408
        %v787 = vunpack.c.0.s8 %v786
        %v788 = vperm.slane %v782, %v787
        %v790 = vunpack.c.l.s4 1934713408
        %v791 = vunpack.c.0.s8 %v790
        %v792 = vperm.slane %v784, %v791
        %v793 = vrot.slane %v764, 4
        %v794 = vsel %vm497, %v793, %v752
        %v795 = vrot.slane %v752, 4
        %v796 = vsel %vm497, %v764, %v795
        %v798 = vunpack.c.l.s4 1934713408
        %v799 = vunpack.c.0.s8 %v798
        %v800 = vperm.slane %v794, %v799
        %v802 = vunpack.c.l.s4 1934713408
        %v803 = vunpack.c.0.s8 %v802
        %v804 = vperm.slane %v796, %v803
        %v805 = vrot.slane %v768, 4
        %v806 = vsel %vm497, %v805, %v756
        %v807 = vrot.slane %v756, 4
        %v808 = vsel %vm497, %v768, %v807
        %v810 = vunpack.c.l.s4 1934713408
        %v811 = vunpack.c.0.s8 %v810
        %v812 = vperm.slane %v806, %v811
        %v814 = vunpack.c.l.s4 1934713408
        %v815 = vunpack.c.0.s8 %v814
        %v816 = vperm.slane %v808, %v815
        %v817 = vrot.slane %v800, 4
        %v818 = vsel %vm497, %v817, %v776
        %v819 = vrot.slane %v776, 4
        %v820 = vsel %vm497, %v800, %v819
        %v821 = vrot.slane %v804, 4
        %v822 = vsel %vm497, %v821, %v780
        %v823 = vrot.slane %v780, 4
        %v824 = vsel %vm497, %v804, %v823
        %v825 = vrot.slane %v812, 4
        %v826 = vsel %vm497, %v825, %v788
        %v827 = vrot.slane %v788, 4
        %v828 = vsel %vm497, %v812, %v827
        %v829 = vrot.slane %v816, 4
        %v830 = vsel %vm497, %v829, %v792
        %v831 = vrot.slane %v792, 4
        %v832 = vsel %vm497, %v816, %v831
        %v833 = vrot.slane %v464, 4
        %v834 = vsel %vm497, %v833, %v452
        %v835 = vrot.slane %v452, 4
        %v836 = vsel %vm497, %v464, %v835
        %v838 = vunpack.c.l.s4 1983009808
        %v839 = vunpack.c.0.s8 %v838
        %v840 = vperm.slane %v834, %v839
        %v842 = vunpack.c.l.s4 1983009808
        %v843 = vunpack.c.0.s8 %v842
        %v844 = vperm.slane %v836, %v843
        %v845 = vrot.slane %v470, 4
        %v846 = vsel %vm497, %v845, %v458
        %v847 = vrot.slane %v458, 4
        %v848 = vsel %vm497, %v470, %v847
        %v850 = vunpack.c.l.s4 1983009808
        %v851 = vunpack.c.0.s8 %v850
        %v852 = vperm.slane %v846, %v851
        %v854 = vunpack.c.l.s4 1983009808
        %v855 = vunpack.c.0.s8 %v854
        %v856 = vperm.slane %v848, %v855
        %v857 = vrot.slane %v488, 4
        %v858 = vsel %vm497, %v857, %v476
        %v859 = vrot.slane %v476, 4
        %v860 = vsel %vm497, %v488, %v859
        %v862 = vunpack.c.l.s4 1983009808
        %v863 = vunpack.c.0.s8 %v862
        %v864 = vperm.slane %v858, %v863
        %v866 = vunpack.c.l.s4 1983009808
        %v867 = vunpack.c.0.s8 %v866
        %v868 = vperm.slane %v860, %v867
        %v869 = vrot.slane %v494, 4
        %v870 = vsel %vm497, %v869, %v482
        %v871 = vrot.slane %v482, 4
        %v872 = vsel %vm497, %v494, %v871
        %v874 = vunpack.c.l.s4 1983009808
        %v875 = vunpack.c.0.s8 %v874
        %v876 = vperm.slane %v870, %v875
        %v878 = vunpack.c.l.s4 1983009808
        %v879 = vunpack.c.0.s8 %v878
        %v880 = vperm.slane %v872, %v879
        %v881 = vrot.slane %v852, 4
        %v882 = vsel %vm497, %v881, %v840
        %v883 = vrot.slane %v840, 4
        %v884 = vsel %vm497, %v852, %v883
        %v886 = vunpack.c.l.s4 1934713408
        %v887 = vunpack.c.0.s8 %v886
        %v888 = vperm.slane %v882, %v887
        %v890 = vunpack.c.l.s4 1934713408
        %v891 = vunpack.c.0.s8 %v890
        %v892 = vperm.slane %v884, %v891
        %v893 = vrot.slane %v856, 4
        %v894 = vsel %vm497, %v893, %v844
        %v895 = vrot.slane %v844, 4
        %v896 = vsel %vm497, %v856, %v895
        %v898 = vunpack.c.l.s4 1934713408
        %v899 = vunpack.c.0.s8 %v898
        %v900 = vperm.slane %v894, %v899
        %v902 = vunpack.c.l.s4 1934713408
        %v903 = vunpack.c.0.s8 %v902
        %v904 = vperm.slane %v896, %v903
        %v905 = vrot.slane %v876, 4
        %v906 = vsel %vm497, %v905, %v864
        %v907 = vrot.slane %v864, 4
        %v908 = vsel %vm497, %v876, %v907
        %v910 = vunpack.c.l.s4 1934713408
        %v911 = vunpack.c.0.s8 %v910
        %v912 = vperm.slane %v906, %v911
        %v914 = vunpack.c.l.s4 1934713408
        %v915 = vunpack.c.0.s8 %v914
        %v916 = vperm.slane %v908, %v915
        %v917 = vrot.slane %v880, 4
        %v918 = vsel %vm497, %v917, %v868
        %v919 = vrot.slane %v868, 4
        %v920 = vsel %vm497, %v880, %v919
        %v922 = vunpack.c.l.s4 1934713408
        %v923 = vunpack.c.0.s8 %v922
        %v924 = vperm.slane %v918, %v923
        %v926 = vunpack.c.l.s4 1934713408
        %v927 = vunpack.c.0.s8 %v926
        %v928 = vperm.slane %v920, %v927
        %v929 = vrot.slane %v912, 4
        %v930 = vsel %vm497, %v929, %v888
        %v931 = vrot.slane %v888, 4
        %v932 = vsel %vm497, %v912, %v931
        %v933 = vrot.slane %v916, 4
        %v934 = vsel %vm497, %v933, %v892
        %v935 = vrot.slane %v892, 4
        %v936 = vsel %vm497, %v916, %v935
        %v937 = vrot.slane %v924, 4
        %v938 = vsel %vm497, %v937, %v900
        %v939 = vrot.slane %v900, 4
        %v940 = vsel %vm497, %v924, %v939
        %v941 = vrot.slane %v928, 4
        %v942 = vsel %vm497, %v941, %v904
        %v943 = vrot.slane %v904, 4
        %v944 = vsel %vm497, %v928, %v943
        %v945 = vld [vmem:[%s3] sm:$0xff]
        %v946 = vld [vmem:[%s3 + $0x8] sm:$0xff]
        %949 = vrot.lane.b32.xlu0 %v594, 124
        %v950 = vpop.permute.xlu0 %949
        %951 = vrot.lane.b32.xlu0 %v706, 124
        %v952 = vpop.permute.xlu0 %951
        %vm953 = vcmask 31744
        %v954 = vsel %vm953, %v594, 0
        %v956 = vsel %vm953, %v706, 0
        %v958 = vsel %vm953, %v950, 0
        %v960 = vsel %vm953, %v952, 0
        %962 = vmatpush.xpose.msra.mxu0 0.0
        %963 = vmatpush.xpose.msra.mxu0 0.0
        %964 = vmatpush.xpose.msra.mxu0 0.0
        %965 = vmatpush.xpose.msra.mxu0 0.0
        %966 = vmatpush.xpose.msra.mxu0 0.0
        %967 = vmatpush.xpose.msra.mxu0 0.0
        %968 = vmatpush.xpose.msra.mxu0 0.0
        %969 = vmatpush.xpose.msra.mxu0 0.0
        %970 = vmatpush.xpose.msra.mxu0 0.0
        %971 = vmatpush.xpose.msra.mxu0 0.0
        %972 = vmatpush.xpose.msra.mxu0 0.0
        %973 = vmatpush.xpose.msra.mxu0 0.0
        %974 = vmatpush.xpose.msra.mxu0 0.0
        %975 = vmatpush.xpose.msra.mxu0 0.0
        %976 = vmatpush.xpose.msra.mxu0 %v960
        %977 = vmatpush.xpose.msra.mxu0 %v958
        %978 = vmatmul.f32.gmra.mxu0 %v954
        %v979 = vpop.f32.mrf.mxu0
        %v980 = vadd.f32 %v945, %v979
        %981 = vmatmul.f32.gmra.mxu0 %v956
        %v982 = vpop.f32.mrf.mxu0
        %v983 = vadd.f32 %v946, %v982
        %984 = vdwg.mxu0
        %987 = vrot.lane.b32.xlu0 %v596, 124
        %v988 = vpop.permute.xlu0 %987
        %989 = vrot.lane.b32.xlu0 %v708, 124
        %v990 = vpop.permute.xlu0 %989
        %v991 = vsel %vm953, %v596, 0
        %v993 = vsel %vm953, %v708, 0
        %v995 = vsel %vm953, %v988, 0
        %v997 = vsel %vm953, %v990, 0
        %999 = vmatpush.xpose.msra.mxu0 0.0
        %1000 = vmatpush.xpose.msra.mxu0 0.0
        %1001 = vmatpush.xpose.msra.mxu0 0.0
        %1002 = vmatpush.xpose.msra.mxu0 0.0
        %1003 = vmatpush.xpose.msra.mxu0 0.0
        %1004 = vmatpush.xpose.msra.mxu0 0.0
        %1005 = vmatpush.xpose.msra.mxu0 0.0
        %1006 = vmatpush.xpose.msra.mxu0 0.0
        %1007 = vmatpush.xpose.msra.mxu0 0.0
        %1008 = vmatpush.xpose.msra.mxu0 0.0
        %1009 = vmatpush.xpose.msra.mxu0 0.0
        %1010 = vmatpush.xpose.msra.mxu0 0.0
        %1011 = vmatpush.xpose.msra.mxu0 0.0
        %1012 = vmatpush.xpose.msra.mxu0 0.0
        %1013 = vmatpush.xpose.msra.mxu0 %v997
        %1014 = vmatpush.xpose.msra.mxu0 %v995
        %1015 = vmatmul.f32.gmra.mxu0 %v991
        %v1016 = vpop.f32.mrf.mxu0
        %v1017 = vadd.f32 %v945, %v1016
        %1018 = vmatmul.f32.gmra.mxu0 %v993
        %v1019 = vpop.f32.mrf.mxu0
        %v1020 = vadd.f32 %v946, %v1019
        %1021 = vdwg.mxu0
        %1024 = vrot.lane.b32.xlu0 %v598, 124
        %v1025 = vpop.permute.xlu0 %1024
        %1026 = vrot.lane.b32.xlu0 %v710, 124
        %v1027 = vpop.permute.xlu0 %1026
        %v1028 = vsel %vm953, %v598, 0
        %v1030 = vsel %vm953, %v710, 0
        %v1032 = vsel %vm953, %v1025, 0
        %v1034 = vsel %vm953, %v1027, 0
        %1036 = vmatpush.xpose.msra.mxu0 0.0
        %1037 = vmatpush.xpose.msra.mxu0 0.0
        %1038 = vmatpush.xpose.msra.mxu0 0.0
        %1039 = vmatpush.xpose.msra.mxu0 0.0
        %1040 = vmatpush.xpose.msra.mxu0 0.0
        %1041 = vmatpush.xpose.msra.mxu0 0.0
        %1042 = vmatpush.xpose.msra.mxu0 0.0
        %1043 = vmatpush.xpose.msra.mxu0 0.0
        %1044 = vmatpush.xpose.msra.mxu0 0.0
        %1045 = vmatpush.xpose.msra.mxu0 0.0
        %1046 = vmatpush.xpose.msra.mxu0 0.0
        %1047 = vmatpush.xpose.msra.mxu0 0.0
        %1048 = vmatpush.xpose.msra.mxu0 0.0
        %1049 = vmatpush.xpose.msra.mxu0 0.0
        %1050 = vmatpush.xpose.msra.mxu0 %v1034
        %1051 = vmatpush.xpose.msra.mxu0 %v1032
        %1052 = vmatmul.f32.gmra.mxu0 %v1028
        %v1053 = vpop.f32.mrf.mxu0
        %v1054 = vadd.f32 %v945, %v1053
        %1055 = vmatmul.f32.gmra.mxu0 %v1030
        %v1056 = vpop.f32.mrf.mxu0
        %v1057 = vadd.f32 %v946, %v1056
        %1058 = vdwg.mxu0
        %1061 = vrot.lane.b32.xlu0 %v600, 124
        %v1062 = vpop.permute.xlu0 %1061
        %1063 = vrot.lane.b32.xlu0 %v712, 124
        %v1064 = vpop.permute.xlu0 %1063
        %v1065 = vsel %vm953, %v600, 0
        %v1067 = vsel %vm953, %v712, 0
        %v1069 = vsel %vm953, %v1062, 0
        %v1071 = vsel %vm953, %v1064, 0
        %1073 = vmatpush.xpose.msra.mxu0 0.0
        %1074 = vmatpush.xpose.msra.mxu0 0.0
        %1075 = vmatpush.xpose.msra.mxu0 0.0
        %1076 = vmatpush.xpose.msra.mxu0 0.0
        %1077 = vmatpush.xpose.msra.mxu0 0.0
        %1078 = vmatpush.xpose.msra.mxu0 0.0
        %1079 = vmatpush.xpose.msra.mxu0 0.0
        %1080 = vmatpush.xpose.msra.mxu0 0.0
        %1081 = vmatpush.xpose.msra.mxu0 0.0
        %1082 = vmatpush.xpose.msra.mxu0 0.0
        %1083 = vmatpush.xpose.msra.mxu0 0.0
        %1084 = vmatpush.xpose.msra.mxu0 0.0
        %1085 = vmatpush.xpose.msra.mxu0 0.0
        %1086 = vmatpush.xpose.msra.mxu0 0.0
        %1087 = vmatpush.xpose.msra.mxu0 %v1071
        %1088 = vmatpush.xpose.msra.mxu0 %v1069
        %1089 = vmatmul.f32.gmra.mxu0 %v1065
        %v1090 = vpop.f32.mrf.mxu0
        %v1091 = vadd.f32 %v945, %v1090
        %1092 = vmatmul.f32.gmra.mxu0 %v1067
        %v1093 = vpop.f32.mrf.mxu0
        %v1094 = vadd.f32 %v946, %v1093
        %1095 = vdwg.mxu0
        %1098 = vrot.lane.b32.xlu0 %v602, 124
        %v1099 = vpop.permute.xlu0 %1098
        %1100 = vrot.lane.b32.xlu0 %v714, 124
        %v1101 = vpop.permute.xlu0 %1100
        %v1102 = vsel %vm953, %v602, 0
        %v1104 = vsel %vm953, %v714, 0
        %v1106 = vsel %vm953, %v1099, 0
        %v1108 = vsel %vm953, %v1101, 0
        %1110 = vmatpush.xpose.msra.mxu0 0.0
        %1111 = vmatpush.xpose.msra.mxu0 0.0
        %1112 = vmatpush.xpose.msra.mxu0 0.0
        %1113 = vmatpush.xpose.msra.mxu0 0.0
        %1114 = vmatpush.xpose.msra.mxu0 0.0
        %1115 = vmatpush.xpose.msra.mxu0 0.0
        %1116 = vmatpush.xpose.msra.mxu0 0.0
        %1117 = vmatpush.xpose.msra.mxu0 0.0
        %1118 = vmatpush.xpose.msra.mxu0 0.0
        %1119 = vmatpush.xpose.msra.mxu0 0.0
        %1120 = vmatpush.xpose.msra.mxu0 0.0
        %1121 = vmatpush.xpose.msra.mxu0 0.0
        %1122 = vmatpush.xpose.msra.mxu0 0.0
        %1123 = vmatpush.xpose.msra.mxu0 0.0
        %1124 = vmatpush.xpose.msra.mxu0 %v1108
        %1125 = vmatpush.xpose.msra.mxu0 %v1106
        %1126 = vmatmul.f32.gmra.mxu0 %v1102
        %v1127 = vpop.f32.mrf.mxu0
        %v1128 = vadd.f32 %v945, %v1127
        %1129 = vmatmul.f32.gmra.mxu0 %v1104
        %v1130 = vpop.f32.mrf.mxu0
        %v1131 = vadd.f32 %v946, %v1130
        %1132 = vdwg.mxu0
        %1135 = vrot.lane.b32.xlu0 %v604, 124
        %v1136 = vpop.permute.xlu0 %1135
        %1137 = vrot.lane.b32.xlu0 %v716, 124
        %v1138 = vpop.permute.xlu0 %1137
        %v1139 = vsel %vm953, %v604, 0
        %v1141 = vsel %vm953, %v716, 0
        %v1143 = vsel %vm953, %v1136, 0
        %v1145 = vsel %vm953, %v1138, 0
        %1147 = vmatpush.xpose.msra.mxu0 0.0
        %1148 = vmatpush.xpose.msra.mxu0 0.0
        %1149 = vmatpush.xpose.msra.mxu0 0.0
        %1150 = vmatpush.xpose.msra.mxu0 0.0
        %1151 = vmatpush.xpose.msra.mxu0 0.0
        %1152 = vmatpush.xpose.msra.mxu0 0.0
        %1153 = vmatpush.xpose.msra.mxu0 0.0
        %1154 = vmatpush.xpose.msra.mxu0 0.0
        %1155 = vmatpush.xpose.msra.mxu0 0.0
        %1156 = vmatpush.xpose.msra.mxu0 0.0
        %1157 = vmatpush.xpose.msra.mxu0 0.0
        %1158 = vmatpush.xpose.msra.mxu0 0.0
        %1159 = vmatpush.xpose.msra.mxu0 0.0
        %1160 = vmatpush.xpose.msra.mxu0 0.0
        %1161 = vmatpush.xpose.msra.mxu0 %v1145
        %1162 = vmatpush.xpose.msra.mxu0 %v1143
        %1163 = vmatmul.f32.gmra.mxu0 %v1139
        %v1164 = vpop.f32.mrf.mxu0
        %v1165 = vadd.f32 %v945, %v1164
        %1166 = vmatmul.f32.gmra.mxu0 %v1141
        %v1167 = vpop.f32.mrf.mxu0
        %v1168 = vadd.f32 %v946, %v1167
        %1169 = vdwg.mxu0
        %1172 = vrot.lane.b32.xlu0 %v606, 124
        %v1173 = vpop.permute.xlu0 %1172
        %1174 = vrot.lane.b32.xlu0 %v718, 124
        %v1175 = vpop.permute.xlu0 %1174
        %v1176 = vsel %vm953, %v606, 0
        %v1178 = vsel %vm953, %v718, 0
        %v1180 = vsel %vm953, %v1173, 0
        %v1182 = vsel %vm953, %v1175, 0
        %1184 = vmatpush.xpose.msra.mxu0 0.0
        %1185 = vmatpush.xpose.msra.mxu0 0.0
        %1186 = vmatpush.xpose.msra.mxu0 0.0
        %1187 = vmatpush.xpose.msra.mxu0 0.0
        %1188 = vmatpush.xpose.msra.mxu0 0.0
        %1189 = vmatpush.xpose.msra.mxu0 0.0
        %1190 = vmatpush.xpose.msra.mxu0 0.0
        %1191 = vmatpush.xpose.msra.mxu0 0.0
        %1192 = vmatpush.xpose.msra.mxu0 0.0
        %1193 = vmatpush.xpose.msra.mxu0 0.0
        %1194 = vmatpush.xpose.msra.mxu0 0.0
        %1195 = vmatpush.xpose.msra.mxu0 0.0
        %1196 = vmatpush.xpose.msra.mxu0 0.0
        %1197 = vmatpush.xpose.msra.mxu0 0.0
        %1198 = vmatpush.xpose.msra.mxu0 %v1182
        %1199 = vmatpush.xpose.msra.mxu0 %v1180
        %1200 = vmatmul.f32.gmra.mxu0 %v1176
        %v1201 = vpop.f32.mrf.mxu0
        %v1202 = vadd.f32 %v945, %v1201
        %1203 = vmatmul.f32.gmra.mxu0 %v1178
        %v1204 = vpop.f32.mrf.mxu0
        %v1205 = vadd.f32 %v946, %v1204
        %1206 = vdwg.mxu0
        %1209 = vrot.lane.b32.xlu0 %v608, 124
        %v1210 = vpop.permute.xlu0 %1209
        %1211 = vrot.lane.b32.xlu0 %v720, 124
        %v1212 = vpop.permute.xlu0 %1211
        %v1213 = vsel %vm953, %v608, 0
        %v1215 = vsel %vm953, %v720, 0
        %v1217 = vsel %vm953, %v1210, 0
        %v1219 = vsel %vm953, %v1212, 0
        %1221 = vmatpush.xpose.msra.mxu0 0.0
        %1222 = vmatpush.xpose.msra.mxu0 0.0
        %1223 = vmatpush.xpose.msra.mxu0 0.0
        %1224 = vmatpush.xpose.msra.mxu0 0.0
        %1225 = vmatpush.xpose.msra.mxu0 0.0
        %1226 = vmatpush.xpose.msra.mxu0 0.0
        %1227 = vmatpush.xpose.msra.mxu0 0.0
        %1228 = vmatpush.xpose.msra.mxu0 0.0
        %1229 = vmatpush.xpose.msra.mxu0 0.0
        %1230 = vmatpush.xpose.msra.mxu0 0.0
        %1231 = vmatpush.xpose.msra.mxu0 0.0
        %1232 = vmatpush.xpose.msra.mxu0 0.0
        %1233 = vmatpush.xpose.msra.mxu0 0.0
        %1234 = vmatpush.xpose.msra.mxu0 0.0
        %1235 = vmatpush.xpose.msra.mxu0 %v1219
        %1236 = vmatpush.xpose.msra.mxu0 %v1217
        %1237 = vmatmul.f32.gmra.mxu0 %v1213
        %v1238 = vpop.f32.mrf.mxu0
        %v1239 = vadd.f32 %v945, %v1238
        %1240 = vmatmul.f32.gmra.mxu0 %v1215
        %v1241 = vpop.f32.mrf.mxu0
        %v1242 = vadd.f32 %v946, %v1241
        %1243 = vdwg.mxu0
        %1246 = vrot.lane.b32.xlu0 %v818, 124
        %v1247 = vpop.permute.xlu0 %1246
        %1248 = vrot.lane.b32.xlu0 %v930, 124
        %v1249 = vpop.permute.xlu0 %1248
        %v1250 = vsel %vm953, %v818, 0
        %v1252 = vsel %vm953, %v930, 0
        %v1254 = vsel %vm953, %v1247, 0
        %v1256 = vsel %vm953, %v1249, 0
        %1258 = vmatpush.xpose.msra.mxu0 0.0
        %1259 = vmatpush.xpose.msra.mxu0 0.0
        %1260 = vmatpush.xpose.msra.mxu0 0.0
        %1261 = vmatpush.xpose.msra.mxu0 0.0
        %1262 = vmatpush.xpose.msra.mxu0 0.0
        %1263 = vmatpush.xpose.msra.mxu0 0.0
        %1264 = vmatpush.xpose.msra.mxu0 0.0
        %1265 = vmatpush.xpose.msra.mxu0 0.0
        %1266 = vmatpush.xpose.msra.mxu0 0.0
        %1267 = vmatpush.xpose.msra.mxu0 0.0
        %1268 = vmatpush.xpose.msra.mxu0 0.0
        %1269 = vmatpush.xpose.msra.mxu0 0.0
        %1270 = vmatpush.xpose.msra.mxu0 0.0
        %1271 = vmatpush.xpose.msra.mxu0 0.0
        %1272 = vmatpush.xpose.msra.mxu0 %v1256
        %1273 = vmatpush.xpose.msra.mxu0 %v1254
        %1274 = vmatmul.f32.gmra.mxu0 %v1250
        %v1275 = vpop.f32.mrf.mxu0
        %v1276 = vadd.f32 %v945, %v1275
        %1277 = vmatmul.f32.gmra.mxu0 %v1252
        %v1278 = vpop.f32.mrf.mxu0
        %v1279 = vadd.f32 %v946, %v1278
        %1280 = vdwg.mxu0
        %1283 = vrot.lane.b32.xlu0 %v820, 124
        %v1284 = vpop.permute.xlu0 %1283
        %1285 = vrot.lane.b32.xlu0 %v932, 124
        %v1286 = vpop.permute.xlu0 %1285
        %v1287 = vsel %vm953, %v820, 0
        %v1289 = vsel %vm953, %v932, 0
        %v1291 = vsel %vm953, %v1284, 0
        %v1293 = vsel %vm953, %v1286, 0
        %1295 = vmatpush.xpose.msra.mxu0 0.0
        %1296 = vmatpush.xpose.msra.mxu0 0.0
        %1297 = vmatpush.xpose.msra.mxu0 0.0
        %1298 = vmatpush.xpose.msra.mxu0 0.0
        %1299 = vmatpush.xpose.msra.mxu0 0.0
        %1300 = vmatpush.xpose.msra.mxu0 0.0
        %1301 = vmatpush.xpose.msra.mxu0 0.0
        %1302 = vmatpush.xpose.msra.mxu0 0.0
        %1303 = vmatpush.xpose.msra.mxu0 0.0
        %1304 = vmatpush.xpose.msra.mxu0 0.0
        %1305 = vmatpush.xpose.msra.mxu0 0.0
        %1306 = vmatpush.xpose.msra.mxu0 0.0
        %1307 = vmatpush.xpose.msra.mxu0 0.0
        %1308 = vmatpush.xpose.msra.mxu0 0.0
        %1309 = vmatpush.xpose.msra.mxu0 %v1293
        %1310 = vmatpush.xpose.msra.mxu0 %v1291
        %1311 = vmatmul.f32.gmra.mxu0 %v1287
        %v1312 = vpop.f32.mrf.mxu0
        %v1313 = vadd.f32 %v945, %v1312
        %1314 = vmatmul.f32.gmra.mxu0 %v1289
        %v1315 = vpop.f32.mrf.mxu0
        %v1316 = vadd.f32 %v946, %v1315
        %1317 = vdwg.mxu0
        %1320 = vrot.lane.b32.xlu0 %v822, 124
        %v1321 = vpop.permute.xlu0 %1320
        %1322 = vrot.lane.b32.xlu0 %v934, 124
        %v1323 = vpop.permute.xlu0 %1322
        %v1324 = vsel %vm953, %v822, 0
        %v1326 = vsel %vm953, %v934, 0
        %v1328 = vsel %vm953, %v1321, 0
        %v1330 = vsel %vm953, %v1323, 0
        %1332 = vmatpush.xpose.msra.mxu0 0.0
        %1333 = vmatpush.xpose.msra.mxu0 0.0
        %1334 = vmatpush.xpose.msra.mxu0 0.0
        %1335 = vmatpush.xpose.msra.mxu0 0.0
        %1336 = vmatpush.xpose.msra.mxu0 0.0
        %1337 = vmatpush.xpose.msra.mxu0 0.0
        %1338 = vmatpush.xpose.msra.mxu0 0.0
        %1339 = vmatpush.xpose.msra.mxu0 0.0
        %1340 = vmatpush.xpose.msra.mxu0 0.0
        %1341 = vmatpush.xpose.msra.mxu0 0.0
        %1342 = vmatpush.xpose.msra.mxu0 0.0
        %1343 = vmatpush.xpose.msra.mxu0 0.0
        %1344 = vmatpush.xpose.msra.mxu0 0.0
        %1345 = vmatpush.xpose.msra.mxu0 0.0
        %1346 = vmatpush.xpose.msra.mxu0 %v1330
        %1347 = vmatpush.xpose.msra.mxu0 %v1328
        %1348 = vmatmul.f32.gmra.mxu0 %v1324
        %v1349 = vpop.f32.mrf.mxu0
        %v1350 = vadd.f32 %v945, %v1349
        %1351 = vmatmul.f32.gmra.mxu0 %v1326
        %v1352 = vpop.f32.mrf.mxu0
        %v1353 = vadd.f32 %v946, %v1352
        %1354 = vdwg.mxu0
        %1357 = vrot.lane.b32.xlu0 %v824, 124
        %v1358 = vpop.permute.xlu0 %1357
        %1359 = vrot.lane.b32.xlu0 %v936, 124
        %v1360 = vpop.permute.xlu0 %1359
        %v1361 = vsel %vm953, %v824, 0
        %v1363 = vsel %vm953, %v936, 0
        %v1365 = vsel %vm953, %v1358, 0
        %v1367 = vsel %vm953, %v1360, 0
        %1369 = vmatpush.xpose.msra.mxu0 0.0
        %1370 = vmatpush.xpose.msra.mxu0 0.0
        %1371 = vmatpush.xpose.msra.mxu0 0.0
        %1372 = vmatpush.xpose.msra.mxu0 0.0
        %1373 = vmatpush.xpose.msra.mxu0 0.0
        %1374 = vmatpush.xpose.msra.mxu0 0.0
        %1375 = vmatpush.xpose.msra.mxu0 0.0
        %1376 = vmatpush.xpose.msra.mxu0 0.0
        %1377 = vmatpush.xpose.msra.mxu0 0.0
        %1378 = vmatpush.xpose.msra.mxu0 0.0
        %1379 = vmatpush.xpose.msra.mxu0 0.0
        %1380 = vmatpush.xpose.msra.mxu0 0.0
        %1381 = vmatpush.xpose.msra.mxu0 0.0
        %1382 = vmatpush.xpose.msra.mxu0 0.0
        %1383 = vmatpush.xpose.msra.mxu0 %v1367
        %1384 = vmatpush.xpose.msra.mxu0 %v1365
        %1385 = vmatmul.f32.gmra.mxu0 %v1361
        %v1386 = vpop.f32.mrf.mxu0
        %v1387 = vadd.f32 %v945, %v1386
        %1388 = vmatmul.f32.gmra.mxu0 %v1363
        %v1389 = vpop.f32.mrf.mxu0
        %v1390 = vadd.f32 %v946, %v1389
        %1391 = vdwg.mxu0
        %1394 = vrot.lane.b32.xlu0 %v826, 124
        %v1395 = vpop.permute.xlu0 %1394
        %1396 = vrot.lane.b32.xlu0 %v938, 124
        %v1397 = vpop.permute.xlu0 %1396
        %v1398 = vsel %vm953, %v826, 0
        %v1400 = vsel %vm953, %v938, 0
        %v1402 = vsel %vm953, %v1395, 0
        %v1404 = vsel %vm953, %v1397, 0
        %1406 = vmatpush.xpose.msra.mxu0 0.0
        %1407 = vmatpush.xpose.msra.mxu0 0.0
        %1408 = vmatpush.xpose.msra.mxu0 0.0
        %1409 = vmatpush.xpose.msra.mxu0 0.0
        %1410 = vmatpush.xpose.msra.mxu0 0.0
        %1411 = vmatpush.xpose.msra.mxu0 0.0
        %1412 = vmatpush.xpose.msra.mxu0 0.0
        %1413 = vmatpush.xpose.msra.mxu0 0.0
        %1414 = vmatpush.xpose.msra.mxu0 0.0
        %1415 = vmatpush.xpose.msra.mxu0 0.0
        %1416 = vmatpush.xpose.msra.mxu0 0.0
        %1417 = vmatpush.xpose.msra.mxu0 0.0
        %1418 = vmatpush.xpose.msra.mxu0 0.0
        %1419 = vmatpush.xpose.msra.mxu0 0.0
        %1420 = vmatpush.xpose.msra.mxu0 %v1404
        %1421 = vmatpush.xpose.msra.mxu0 %v1402
        %1422 = vmatmul.f32.gmra.mxu0 %v1398
        %v1423 = vpop.f32.mrf.mxu0
        %v1424 = vadd.f32 %v945, %v1423
        %1425 = vmatmul.f32.gmra.mxu0 %v1400
        %v1426 = vpop.f32.mrf.mxu0
        %v1427 = vadd.f32 %v946, %v1426
        %1428 = vdwg.mxu0
        %1431 = vrot.lane.b32.xlu0 %v828, 124
        %v1432 = vpop.permute.xlu0 %1431
        %1433 = vrot.lane.b32.xlu0 %v940, 124
        %v1434 = vpop.permute.xlu0 %1433
        %v1435 = vsel %vm953, %v828, 0
        %v1437 = vsel %vm953, %v940, 0
        %v1439 = vsel %vm953, %v1432, 0
        %v1441 = vsel %vm953, %v1434, 0
        %1443 = vmatpush.xpose.msra.mxu0 0.0
        %1444 = vmatpush.xpose.msra.mxu0 0.0
        %1445 = vmatpush.xpose.msra.mxu0 0.0
        %1446 = vmatpush.xpose.msra.mxu0 0.0
        %1447 = vmatpush.xpose.msra.mxu0 0.0
        %1448 = vmatpush.xpose.msra.mxu0 0.0
        %1449 = vmatpush.xpose.msra.mxu0 0.0
        %1450 = vmatpush.xpose.msra.mxu0 0.0
        %1451 = vmatpush.xpose.msra.mxu0 0.0
        %1452 = vmatpush.xpose.msra.mxu0 0.0
        %1453 = vmatpush.xpose.msra.mxu0 0.0
        %1454 = vmatpush.xpose.msra.mxu0 0.0
        %1455 = vmatpush.xpose.msra.mxu0 0.0
        %1456 = vmatpush.xpose.msra.mxu0 0.0
        %1457 = vmatpush.xpose.msra.mxu0 %v1441
        %1458 = vmatpush.xpose.msra.mxu0 %v1439
        %1459 = vmatmul.f32.gmra.mxu0 %v1435
        %v1460 = vpop.f32.mrf.mxu0
        %v1461 = vadd.f32 %v945, %v1460
        %1462 = vmatmul.f32.gmra.mxu0 %v1437
        %v1463 = vpop.f32.mrf.mxu0
        %v1464 = vadd.f32 %v946, %v1463
        %1465 = vdwg.mxu0
        %1468 = vrot.lane.b32.xlu0 %v830, 124
        %v1469 = vpop.permute.xlu0 %1468
        %1470 = vrot.lane.b32.xlu0 %v942, 124
        %v1471 = vpop.permute.xlu0 %1470
        %v1472 = vsel %vm953, %v830, 0
        %v1474 = vsel %vm953, %v942, 0
        %v1476 = vsel %vm953, %v1469, 0
        %v1478 = vsel %vm953, %v1471, 0
        %1480 = vmatpush.xpose.msra.mxu0 0.0
        %1481 = vmatpush.xpose.msra.mxu0 0.0
        %1482 = vmatpush.xpose.msra.mxu0 0.0
        %1483 = vmatpush.xpose.msra.mxu0 0.0
        %1484 = vmatpush.xpose.msra.mxu0 0.0
        %1485 = vmatpush.xpose.msra.mxu0 0.0
        %1486 = vmatpush.xpose.msra.mxu0 0.0
        %1487 = vmatpush.xpose.msra.mxu0 0.0
        %1488 = vmatpush.xpose.msra.mxu0 0.0
        %1489 = vmatpush.xpose.msra.mxu0 0.0
        %1490 = vmatpush.xpose.msra.mxu0 0.0
        %1491 = vmatpush.xpose.msra.mxu0 0.0
        %1492 = vmatpush.xpose.msra.mxu0 0.0
        %1493 = vmatpush.xpose.msra.mxu0 0.0
        %1494 = vmatpush.xpose.msra.mxu0 %v1478
        %1495 = vmatpush.xpose.msra.mxu0 %v1476
        %1496 = vmatmul.f32.gmra.mxu0 %v1472
        %v1497 = vpop.f32.mrf.mxu0
        %v1498 = vadd.f32 %v945, %v1497
        %1499 = vmatmul.f32.gmra.mxu0 %v1474
        %v1500 = vpop.f32.mrf.mxu0
        %v1501 = vadd.f32 %v946, %v1500
        %1502 = vdwg.mxu0
        %1505 = vrot.lane.b32.xlu0 %v832, 124
        %v1506 = vpop.permute.xlu0 %1505
        %1507 = vrot.lane.b32.xlu0 %v944, 124
        %v1508 = vpop.permute.xlu0 %1507
        %v1509 = vsel %vm953, %v832, 0
        %v1511 = vsel %vm953, %v944, 0
        %v1513 = vsel %vm953, %v1506, 0
        %v1515 = vsel %vm953, %v1508, 0
        %1517 = vmatpush.xpose.msra.mxu0 0.0
        %1518 = vmatpush.xpose.msra.mxu0 0.0
        %1519 = vmatpush.xpose.msra.mxu0 0.0
        %1520 = vmatpush.xpose.msra.mxu0 0.0
        %1521 = vmatpush.xpose.msra.mxu0 0.0
        %1522 = vmatpush.xpose.msra.mxu0 0.0
        %1523 = vmatpush.xpose.msra.mxu0 0.0
        %1524 = vmatpush.xpose.msra.mxu0 0.0
        %1525 = vmatpush.xpose.msra.mxu0 0.0
        %1526 = vmatpush.xpose.msra.mxu0 0.0
        %1527 = vmatpush.xpose.msra.mxu0 0.0
        %1528 = vmatpush.xpose.msra.mxu0 0.0
        %1529 = vmatpush.xpose.msra.mxu0 0.0
        %1530 = vmatpush.xpose.msra.mxu0 0.0
        %1531 = vmatpush.xpose.msra.mxu0 %v1515
        %1532 = vmatpush.xpose.msra.mxu0 %v1513
        %1533 = vmatmul.f32.gmra.mxu0 %v1509
        %v1534 = vpop.f32.mrf.mxu0
        %v1535 = vadd.f32 %v945, %v1534
        %1536 = vmatmul.f32.gmra.mxu0 %v1511
        %v1537 = vpop.f32.mrf.mxu0
        %v1538 = vadd.f32 %v946, %v1537
        %1539 = vdwg.mxu0
        %1542 = vrot.lane.b32.xlu0 %v401, 124
        %v1543 = vpop.permute.xlu0 %1542
        %1544 = vrot.lane.b32.xlu0 %v404, 124
        %v1545 = vpop.permute.xlu0 %1544
        %v1546 = vsel %vm953, %v401, 0
        %v1548 = vsel %vm953, %v404, 0
        %v1550 = vsel %vm953, %v1543, 0
        %v1552 = vsel %vm953, %v1545, 0
        %1554 = vmatpush.xpose.msra.mxu0 0.0
        %1555 = vmatpush.xpose.msra.mxu0 0.0
        %1556 = vmatpush.xpose.msra.mxu0 0.0
        %1557 = vmatpush.xpose.msra.mxu0 0.0
        %1558 = vmatpush.xpose.msra.mxu0 0.0
        %1559 = vmatpush.xpose.msra.mxu0 0.0
        %1560 = vmatpush.xpose.msra.mxu0 0.0
        %1561 = vmatpush.xpose.msra.mxu0 0.0
        %1562 = vmatpush.xpose.msra.mxu0 0.0
        %1563 = vmatpush.xpose.msra.mxu0 0.0
        %1564 = vmatpush.xpose.msra.mxu0 0.0
        %1565 = vmatpush.xpose.msra.mxu0 0.0
        %1566 = vmatpush.xpose.msra.mxu0 0.0
        %1567 = vmatpush.xpose.msra.mxu0 0.0
        %1568 = vmatpush.xpose.msra.mxu0 %v1552
        %1569 = vmatpush.xpose.msra.mxu0 %v1550
        %1570 = vmatmul.f32.gmra.mxu0 %v1546
        %v1571 = vpop.f32.mrf.mxu0
        %v1572 = vadd.f32 0.0, %v1571
        %1573 = vmatmul.f32.gmra.mxu0 %v1548
        %v1574 = vpop.f32.mrf.mxu0
        %v1575 = vadd.f32 0.0, %v1574
        %1576 = vdwg.mxu0
        %1579 = vrot.lane.b32.xlu0 %v407, 124
        %v1580 = vpop.permute.xlu0 %1579
        %1581 = vrot.lane.b32.xlu0 %v410, 124
        %v1582 = vpop.permute.xlu0 %1581
        %v1583 = vsel %vm953, %v407, 0
        %v1585 = vsel %vm953, %v410, 0
        %v1587 = vsel %vm953, %v1580, 0
        %v1589 = vsel %vm953, %v1582, 0
        %1591 = vmatpush.xpose.msra.mxu0 0.0
        %1592 = vmatpush.xpose.msra.mxu0 0.0
        %1593 = vmatpush.xpose.msra.mxu0 0.0
        %1594 = vmatpush.xpose.msra.mxu0 0.0
        %1595 = vmatpush.xpose.msra.mxu0 0.0
        %1596 = vmatpush.xpose.msra.mxu0 0.0
        %1597 = vmatpush.xpose.msra.mxu0 0.0
        %1598 = vmatpush.xpose.msra.mxu0 0.0
        %1599 = vmatpush.xpose.msra.mxu0 0.0
        %1600 = vmatpush.xpose.msra.mxu0 0.0
        %1601 = vmatpush.xpose.msra.mxu0 0.0
        %1602 = vmatpush.xpose.msra.mxu0 0.0
        %1603 = vmatpush.xpose.msra.mxu0 0.0
        %1604 = vmatpush.xpose.msra.mxu0 0.0
        %1605 = vmatpush.xpose.msra.mxu0 %v1589
        %1606 = vmatpush.xpose.msra.mxu0 %v1587
        %1607 = vmatmul.f32.gmra.mxu0 %v1583
        %v1608 = vpop.f32.mrf.mxu0
        %v1609 = vadd.f32 0.0, %v1608
        %1610 = vmatmul.f32.gmra.mxu0 %v1585
        %v1611 = vpop.f32.mrf.mxu0
        %v1612 = vadd.f32 0.0, %v1611
        %1613 = vdwg.mxu0
        %1616 = vrot.lane.b32.xlu0 %v413, 124
        %v1617 = vpop.permute.xlu0 %1616
        %1618 = vrot.lane.b32.xlu0 %v416, 124
        %v1619 = vpop.permute.xlu0 %1618
        %v1620 = vsel %vm953, %v413, 0
        %v1622 = vsel %vm953, %v416, 0
        %v1624 = vsel %vm953, %v1617, 0
        %v1626 = vsel %vm953, %v1619, 0
        %1628 = vmatpush.xpose.msra.mxu0 0.0
        %1629 = vmatpush.xpose.msra.mxu0 0.0
        %1630 = vmatpush.xpose.msra.mxu0 0.0
        %1631 = vmatpush.xpose.msra.mxu0 0.0
        %1632 = vmatpush.xpose.msra.mxu0 0.0
        %1633 = vmatpush.xpose.msra.mxu0 0.0
        %1634 = vmatpush.xpose.msra.mxu0 0.0
        %1635 = vmatpush.xpose.msra.mxu0 0.0
        %1636 = vmatpush.xpose.msra.mxu0 0.0
        %1637 = vmatpush.xpose.msra.mxu0 0.0
        %1638 = vmatpush.xpose.msra.mxu0 0.0
        %1639 = vmatpush.xpose.msra.mxu0 0.0
        %1640 = vmatpush.xpose.msra.mxu0 0.0
        %1641 = vmatpush.xpose.msra.mxu0 0.0
        %1642 = vmatpush.xpose.msra.mxu0 %v1626
        %1643 = vmatpush.xpose.msra.mxu0 %v1624
        %1644 = vmatmul.f32.gmra.mxu0 %v1620
        %v1645 = vpop.f32.mrf.mxu0
        %v1646 = vadd.f32 0.0, %v1645
        %1647 = vmatmul.f32.gmra.mxu0 %v1622
        %v1648 = vpop.f32.mrf.mxu0
        %v1649 = vadd.f32 0.0, %v1648
        %1650 = vdwg.mxu0
        %1653 = vrot.lane.b32.xlu0 %v419, 124
        %v1654 = vpop.permute.xlu0 %1653
        %1655 = vrot.lane.b32.xlu0 %v422, 124
        %v1656 = vpop.permute.xlu0 %1655
        %v1657 = vsel %vm953, %v419, 0
        %v1659 = vsel %vm953, %v422, 0
        %v1661 = vsel %vm953, %v1654, 0
        %v1663 = vsel %vm953, %v1656, 0
        %1665 = vmatpush.xpose.msra.mxu0 0.0
        %1666 = vmatpush.xpose.msra.mxu0 0.0
        %1667 = vmatpush.xpose.msra.mxu0 0.0
        %1668 = vmatpush.xpose.msra.mxu0 0.0
        %1669 = vmatpush.xpose.msra.mxu0 0.0
        %1670 = vmatpush.xpose.msra.mxu0 0.0
        %1671 = vmatpush.xpose.msra.mxu0 0.0
        %1672 = vmatpush.xpose.msra.mxu0 0.0
        %1673 = vmatpush.xpose.msra.mxu0 0.0
        %1674 = vmatpush.xpose.msra.mxu0 0.0
        %1675 = vmatpush.xpose.msra.mxu0 0.0
        %1676 = vmatpush.xpose.msra.mxu0 0.0
        %1677 = vmatpush.xpose.msra.mxu0 0.0
        %1678 = vmatpush.xpose.msra.mxu0 0.0
        %1679 = vmatpush.xpose.msra.mxu0 %v1663
        %1680 = vmatpush.xpose.msra.mxu0 %v1661
        %1681 = vmatmul.f32.gmra.mxu0 %v1657
        %v1682 = vpop.f32.mrf.mxu0
        %v1683 = vadd.f32 0.0, %v1682
        %1684 = vmatmul.f32.gmra.mxu0 %v1659
        %v1685 = vpop.f32.mrf.mxu0
        %v1686 = vadd.f32 0.0, %v1685
        %1687 = vdwg.mxu0
        %1690 = vrot.lane.b32.xlu0 %v425, 124
        %v1691 = vpop.permute.xlu0 %1690
        %1692 = vrot.lane.b32.xlu0 %v428, 124
        %v1693 = vpop.permute.xlu0 %1692
        %v1694 = vsel %vm953, %v425, 0
        %v1696 = vsel %vm953, %v428, 0
        %v1698 = vsel %vm953, %v1691, 0
        %v1700 = vsel %vm953, %v1693, 0
        %1702 = vmatpush.xpose.msra.mxu0 0.0
        %1703 = vmatpush.xpose.msra.mxu0 0.0
        %1704 = vmatpush.xpose.msra.mxu0 0.0
        %1705 = vmatpush.xpose.msra.mxu0 0.0
        %1706 = vmatpush.xpose.msra.mxu0 0.0
        %1707 = vmatpush.xpose.msra.mxu0 0.0
        %1708 = vmatpush.xpose.msra.mxu0 0.0
        %1709 = vmatpush.xpose.msra.mxu0 0.0
        %1710 = vmatpush.xpose.msra.mxu0 0.0
        %1711 = vmatpush.xpose.msra.mxu0 0.0
        %1712 = vmatpush.xpose.msra.mxu0 0.0
        %1713 = vmatpush.xpose.msra.mxu0 0.0
        %1714 = vmatpush.xpose.msra.mxu0 0.0
        %1715 = vmatpush.xpose.msra.mxu0 0.0
        %1716 = vmatpush.xpose.msra.mxu0 %v1700
        %1717 = vmatpush.xpose.msra.mxu0 %v1698
        %1718 = vmatmul.f32.gmra.mxu0 %v1694
        %v1719 = vpop.f32.mrf.mxu0
        %v1720 = vadd.f32 0.0, %v1719
        %1721 = vmatmul.f32.gmra.mxu0 %v1696
        %v1722 = vpop.f32.mrf.mxu0
        %v1723 = vadd.f32 0.0, %v1722
        %1724 = vdwg.mxu0
        %1727 = vrot.lane.b32.xlu0 %v431, 124
        %v1728 = vpop.permute.xlu0 %1727
        %1729 = vrot.lane.b32.xlu0 %v434, 124
        %v1730 = vpop.permute.xlu0 %1729
        %v1731 = vsel %vm953, %v431, 0
        %v1733 = vsel %vm953, %v434, 0
        %v1735 = vsel %vm953, %v1728, 0
        %v1737 = vsel %vm953, %v1730, 0
        %1739 = vmatpush.xpose.msra.mxu0 0.0
        %1740 = vmatpush.xpose.msra.mxu0 0.0
        %1741 = vmatpush.xpose.msra.mxu0 0.0
        %1742 = vmatpush.xpose.msra.mxu0 0.0
        %1743 = vmatpush.xpose.msra.mxu0 0.0
        %1744 = vmatpush.xpose.msra.mxu0 0.0
        %1745 = vmatpush.xpose.msra.mxu0 0.0
        %1746 = vmatpush.xpose.msra.mxu0 0.0
        %1747 = vmatpush.xpose.msra.mxu0 0.0
        %1748 = vmatpush.xpose.msra.mxu0 0.0
        %1749 = vmatpush.xpose.msra.mxu0 0.0
        %1750 = vmatpush.xpose.msra.mxu0 0.0
        %1751 = vmatpush.xpose.msra.mxu0 0.0
        %1752 = vmatpush.xpose.msra.mxu0 0.0
        %1753 = vmatpush.xpose.msra.mxu0 %v1737
        %1754 = vmatpush.xpose.msra.mxu0 %v1735
        %1755 = vmatmul.f32.gmra.mxu0 %v1731
        %v1756 = vpop.f32.mrf.mxu0
        %v1757 = vadd.f32 0.0, %v1756
        %1758 = vmatmul.f32.gmra.mxu0 %v1733
        %v1759 = vpop.f32.mrf.mxu0
        %v1760 = vadd.f32 0.0, %v1759
        %1761 = vdwg.mxu0
        %1764 = vrot.lane.b32.xlu0 %v437, 124
        %v1765 = vpop.permute.xlu0 %1764
        %1766 = vrot.lane.b32.xlu0 %v440, 124
        %v1767 = vpop.permute.xlu0 %1766
        %v1768 = vsel %vm953, %v437, 0
        %v1770 = vsel %vm953, %v440, 0
        %v1772 = vsel %vm953, %v1765, 0
        %v1774 = vsel %vm953, %v1767, 0
        %1776 = vmatpush.xpose.msra.mxu0 0.0
        %1777 = vmatpush.xpose.msra.mxu0 0.0
        %1778 = vmatpush.xpose.msra.mxu0 0.0
        %1779 = vmatpush.xpose.msra.mxu0 0.0
        %1780 = vmatpush.xpose.msra.mxu0 0.0
        %1781 = vmatpush.xpose.msra.mxu0 0.0
        %1782 = vmatpush.xpose.msra.mxu0 0.0
        %1783 = vmatpush.xpose.msra.mxu0 0.0
        %1784 = vmatpush.xpose.msra.mxu0 0.0
        %1785 = vmatpush.xpose.msra.mxu0 0.0
        %1786 = vmatpush.xpose.msra.mxu0 0.0
        %1787 = vmatpush.xpose.msra.mxu0 0.0
        %1788 = vmatpush.xpose.msra.mxu0 0.0
        %1789 = vmatpush.xpose.msra.mxu0 0.0
        %1790 = vmatpush.xpose.msra.mxu0 %v1774
        %1791 = vmatpush.xpose.msra.mxu0 %v1772
        %1792 = vmatmul.f32.gmra.mxu0 %v1768
        %v1793 = vpop.f32.mrf.mxu0
        %v1794 = vadd.f32 0.0, %v1793
        %1795 = vmatmul.f32.gmra.mxu0 %v1770
        %v1796 = vpop.f32.mrf.mxu0
        %v1797 = vadd.f32 0.0, %v1796
        %1798 = vdwg.mxu0
        %1801 = vrot.lane.b32.xlu0 %v443, 124
        %v1802 = vpop.permute.xlu0 %1801
        %1803 = vrot.lane.b32.xlu0 %v446, 124
        %v1804 = vpop.permute.xlu0 %1803
        %v1805 = vsel %vm953, %v443, 0
        %v1807 = vsel %vm953, %v446, 0
        %v1809 = vsel %vm953, %v1802, 0
        %v1811 = vsel %vm953, %v1804, 0
        %1813 = vmatpush.xpose.msra.mxu0 0.0
        %1814 = vmatpush.xpose.msra.mxu0 0.0
        %1815 = vmatpush.xpose.msra.mxu0 0.0
        %1816 = vmatpush.xpose.msra.mxu0 0.0
        %1817 = vmatpush.xpose.msra.mxu0 0.0
        %1818 = vmatpush.xpose.msra.mxu0 0.0
        %1819 = vmatpush.xpose.msra.mxu0 0.0
        %1820 = vmatpush.xpose.msra.mxu0 0.0
        %1821 = vmatpush.xpose.msra.mxu0 0.0
        %1822 = vmatpush.xpose.msra.mxu0 0.0
        %1823 = vmatpush.xpose.msra.mxu0 0.0
        %1824 = vmatpush.xpose.msra.mxu0 0.0
        %1825 = vmatpush.xpose.msra.mxu0 0.0
        %1826 = vmatpush.xpose.msra.mxu0 0.0
        %1827 = vmatpush.xpose.msra.mxu0 %v1811
        %1828 = vmatpush.xpose.msra.mxu0 %v1809
        %1829 = vmatmul.f32.gmra.mxu0 %v1805
        %v1830 = vpop.f32.mrf.mxu0
        %v1831 = vadd.f32 0.0, %v1830
        %1832 = vmatmul.f32.gmra.mxu0 %v1807
        %v1833 = vpop.f32.mrf.mxu0
        %v1834 = vadd.f32 0.0, %v1833
        %1835 = vdwg.mxu0
        %1838 = vrot.lane.b32.xlu0 %v449, 124
        %v1839 = vpop.permute.xlu0 %1838
        %1840 = vrot.lane.b32.xlu0 %v452, 124
        %v1841 = vpop.permute.xlu0 %1840
        %v1842 = vsel %vm953, %v449, 0
        %v1844 = vsel %vm953, %v452, 0
        %v1846 = vsel %vm953, %v1839, 0
        %v1848 = vsel %vm953, %v1841, 0
        %1850 = vmatpush.xpose.msra.mxu0 0.0
        %1851 = vmatpush.xpose.msra.mxu0 0.0
        %1852 = vmatpush.xpose.msra.mxu0 0.0
        %1853 = vmatpush.xpose.msra.mxu0 0.0
        %1854 = vmatpush.xpose.msra.mxu0 0.0
        %1855 = vmatpush.xpose.msra.mxu0 0.0
        %1856 = vmatpush.xpose.msra.mxu0 0.0
        %1857 = vmatpush.xpose.msra.mxu0 0.0
        %1858 = vmatpush.xpose.msra.mxu0 0.0
        %1859 = vmatpush.xpose.msra.mxu0 0.0
        %1860 = vmatpush.xpose.msra.mxu0 0.0
        %1861 = vmatpush.xpose.msra.mxu0 0.0
        %1862 = vmatpush.xpose.msra.mxu0 0.0
        %1863 = vmatpush.xpose.msra.mxu0 0.0
        %1864 = vmatpush.xpose.msra.mxu0 %v1848
        %1865 = vmatpush.xpose.msra.mxu0 %v1846
        %1866 = vmatmul.f32.gmra.mxu0 %v1842
        %v1867 = vpop.f32.mrf.mxu0
        %v1868 = vadd.f32 0.0, %v1867
        %1869 = vmatmul.f32.gmra.mxu0 %v1844
        %v1870 = vpop.f32.mrf.mxu0
        %v1871 = vadd.f32 0.0, %v1870
        %1872 = vdwg.mxu0
        %1875 = vrot.lane.b32.xlu0 %v455, 124
        %v1876 = vpop.permute.xlu0 %1875
        %1877 = vrot.lane.b32.xlu0 %v458, 124
        %v1878 = vpop.permute.xlu0 %1877
        %v1879 = vsel %vm953, %v455, 0
        %v1881 = vsel %vm953, %v458, 0
        %v1883 = vsel %vm953, %v1876, 0
        %v1885 = vsel %vm953, %v1878, 0
        %1887 = vmatpush.xpose.msra.mxu0 0.0
        %1888 = vmatpush.xpose.msra.mxu0 0.0
        %1889 = vmatpush.xpose.msra.mxu0 0.0
        %1890 = vmatpush.xpose.msra.mxu0 0.0
        %1891 = vmatpush.xpose.msra.mxu0 0.0
        %1892 = vmatpush.xpose.msra.mxu0 0.0
        %1893 = vmatpush.xpose.msra.mxu0 0.0
        %1894 = vmatpush.xpose.msra.mxu0 0.0
        %1895 = vmatpush.xpose.msra.mxu0 0.0
        %1896 = vmatpush.xpose.msra.mxu0 0.0
        %1897 = vmatpush.xpose.msra.mxu0 0.0
        %1898 = vmatpush.xpose.msra.mxu0 0.0
        %1899 = vmatpush.xpose.msra.mxu0 0.0
        %1900 = vmatpush.xpose.msra.mxu0 0.0
        %1901 = vmatpush.xpose.msra.mxu0 %v1885
        %1902 = vmatpush.xpose.msra.mxu0 %v1883
        %1903 = vmatmul.f32.gmra.mxu0 %v1879
        %v1904 = vpop.f32.mrf.mxu0
        %v1905 = vadd.f32 0.0, %v1904
        %1906 = vmatmul.f32.gmra.mxu0 %v1881
        %v1907 = vpop.f32.mrf.mxu0
        %v1908 = vadd.f32 0.0, %v1907
        %1909 = vdwg.mxu0
        %1912 = vrot.lane.b32.xlu0 %v461, 124
        %v1913 = vpop.permute.xlu0 %1912
        %1914 = vrot.lane.b32.xlu0 %v464, 124
        %v1915 = vpop.permute.xlu0 %1914
        %v1916 = vsel %vm953, %v461, 0
        %v1918 = vsel %vm953, %v464, 0
        %v1920 = vsel %vm953, %v1913, 0
        %v1922 = vsel %vm953, %v1915, 0
        %1924 = vmatpush.xpose.msra.mxu0 0.0
        %1925 = vmatpush.xpose.msra.mxu0 0.0
        %1926 = vmatpush.xpose.msra.mxu0 0.0
        %1927 = vmatpush.xpose.msra.mxu0 0.0
        %1928 = vmatpush.xpose.msra.mxu0 0.0
        %1929 = vmatpush.xpose.msra.mxu0 0.0
        %1930 = vmatpush.xpose.msra.mxu0 0.0
        %1931 = vmatpush.xpose.msra.mxu0 0.0
        %1932 = vmatpush.xpose.msra.mxu0 0.0
        %1933 = vmatpush.xpose.msra.mxu0 0.0
        %1934 = vmatpush.xpose.msra.mxu0 0.0
        %1935 = vmatpush.xpose.msra.mxu0 0.0
        %1936 = vmatpush.xpose.msra.mxu0 0.0
        %1937 = vmatpush.xpose.msra.mxu0 0.0
        %1938 = vmatpush.xpose.msra.mxu0 %v1922
        %1939 = vmatpush.xpose.msra.mxu0 %v1920
        %1940 = vmatmul.f32.gmra.mxu0 %v1916
        %v1941 = vpop.f32.mrf.mxu0
        %v1942 = vadd.f32 0.0, %v1941
        %1943 = vmatmul.f32.gmra.mxu0 %v1918
        %v1944 = vpop.f32.mrf.mxu0
        %v1945 = vadd.f32 0.0, %v1944
        %1946 = vdwg.mxu0
        %1949 = vrot.lane.b32.xlu0 %v467, 124
        %v1950 = vpop.permute.xlu0 %1949
        %1951 = vrot.lane.b32.xlu0 %v470, 124
        %v1952 = vpop.permute.xlu0 %1951
        %v1953 = vsel %vm953, %v467, 0
        %v1955 = vsel %vm953, %v470, 0
        %v1957 = vsel %vm953, %v1950, 0
        %v1959 = vsel %vm953, %v1952, 0
        %1961 = vmatpush.xpose.msra.mxu0 0.0
        %1962 = vmatpush.xpose.msra.mxu0 0.0
        %1963 = vmatpush.xpose.msra.mxu0 0.0
        %1964 = vmatpush.xpose.msra.mxu0 0.0
        %1965 = vmatpush.xpose.msra.mxu0 0.0
        %1966 = vmatpush.xpose.msra.mxu0 0.0
        %1967 = vmatpush.xpose.msra.mxu0 0.0
        %1968 = vmatpush.xpose.msra.mxu0 0.0
        %1969 = vmatpush.xpose.msra.mxu0 0.0
        %1970 = vmatpush.xpose.msra.mxu0 0.0
        %1971 = vmatpush.xpose.msra.mxu0 0.0
        %1972 = vmatpush.xpose.msra.mxu0 0.0
        %1973 = vmatpush.xpose.msra.mxu0 0.0
        %1974 = vmatpush.xpose.msra.mxu0 0.0
        %1975 = vmatpush.xpose.msra.mxu0 %v1959
        %1976 = vmatpush.xpose.msra.mxu0 %v1957
        %1977 = vmatmul.f32.gmra.mxu0 %v1953
        %v1978 = vpop.f32.mrf.mxu0
        %v1979 = vadd.f32 0.0, %v1978
        %1980 = vmatmul.f32.gmra.mxu0 %v1955
        %v1981 = vpop.f32.mrf.mxu0
        %v1982 = vadd.f32 0.0, %v1981
        %1983 = vdwg.mxu0
        %1986 = vrot.lane.b32.xlu0 %v473, 124
        %v1987 = vpop.permute.xlu0 %1986
        %1988 = vrot.lane.b32.xlu0 %v476, 124
        %v1989 = vpop.permute.xlu0 %1988
        %v1990 = vsel %vm953, %v473, 0
        %v1992 = vsel %vm953, %v476, 0
        %v1994 = vsel %vm953, %v1987, 0
        %v1996 = vsel %vm953, %v1989, 0
        %1998 = vmatpush.xpose.msra.mxu0 0.0
        %1999 = vmatpush.xpose.msra.mxu0 0.0
        %2000 = vmatpush.xpose.msra.mxu0 0.0
        %2001 = vmatpush.xpose.msra.mxu0 0.0
        %2002 = vmatpush.xpose.msra.mxu0 0.0
        %2003 = vmatpush.xpose.msra.mxu0 0.0
        %2004 = vmatpush.xpose.msra.mxu0 0.0
        %2005 = vmatpush.xpose.msra.mxu0 0.0
        %2006 = vmatpush.xpose.msra.mxu0 0.0
        %2007 = vmatpush.xpose.msra.mxu0 0.0
        %2008 = vmatpush.xpose.msra.mxu0 0.0
        %2009 = vmatpush.xpose.msra.mxu0 0.0
        %2010 = vmatpush.xpose.msra.mxu0 0.0
        %2011 = vmatpush.xpose.msra.mxu0 0.0
        %2012 = vmatpush.xpose.msra.mxu0 %v1996
        %2013 = vmatpush.xpose.msra.mxu0 %v1994
        %2014 = vmatmul.f32.gmra.mxu0 %v1990
        %v2015 = vpop.f32.mrf.mxu0
        %v2016 = vadd.f32 0.0, %v2015
        %2017 = vmatmul.f32.gmra.mxu0 %v1992
        %v2018 = vpop.f32.mrf.mxu0
        %v2019 = vadd.f32 0.0, %v2018
        %2020 = vdwg.mxu0
        %2023 = vrot.lane.b32.xlu0 %v479, 124
        %v2024 = vpop.permute.xlu0 %2023
        %2025 = vrot.lane.b32.xlu0 %v482, 124
        %v2026 = vpop.permute.xlu0 %2025
        %v2027 = vsel %vm953, %v479, 0
        %v2029 = vsel %vm953, %v482, 0
        %v2031 = vsel %vm953, %v2024, 0
        %v2033 = vsel %vm953, %v2026, 0
        %2035 = vmatpush.xpose.msra.mxu0 0.0
        %2036 = vmatpush.xpose.msra.mxu0 0.0
        %2037 = vmatpush.xpose.msra.mxu0 0.0
        %2038 = vmatpush.xpose.msra.mxu0 0.0
        %2039 = vmatpush.xpose.msra.mxu0 0.0
        %2040 = vmatpush.xpose.msra.mxu0 0.0
        %2041 = vmatpush.xpose.msra.mxu0 0.0
        %2042 = vmatpush.xpose.msra.mxu0 0.0
        %2043 = vmatpush.xpose.msra.mxu0 0.0
        %2044 = vmatpush.xpose.msra.mxu0 0.0
        %2045 = vmatpush.xpose.msra.mxu0 0.0
        %2046 = vmatpush.xpose.msra.mxu0 0.0
        %2047 = vmatpush.xpose.msra.mxu0 0.0
        %2048 = vmatpush.xpose.msra.mxu0 0.0
        %2049 = vmatpush.xpose.msra.mxu0 %v2033
        %2050 = vmatpush.xpose.msra.mxu0 %v2031
        %2051 = vmatmul.f32.gmra.mxu0 %v2027
        %v2052 = vpop.f32.mrf.mxu0
        %v2053 = vadd.f32 0.0, %v2052
        %2054 = vmatmul.f32.gmra.mxu0 %v2029
        %v2055 = vpop.f32.mrf.mxu0
        %v2056 = vadd.f32 0.0, %v2055
        %2057 = vdwg.mxu0
        %2060 = vrot.lane.b32.xlu0 %v485, 124
        %v2061 = vpop.permute.xlu0 %2060
        %2062 = vrot.lane.b32.xlu0 %v488, 124
        %v2063 = vpop.permute.xlu0 %2062
        %v2064 = vsel %vm953, %v485, 0
        %v2066 = vsel %vm953, %v488, 0
        %v2068 = vsel %vm953, %v2061, 0
        %v2070 = vsel %vm953, %v2063, 0
        %2072 = vmatpush.xpose.msra.mxu0 0.0
        %2073 = vmatpush.xpose.msra.mxu0 0.0
        %2074 = vmatpush.xpose.msra.mxu0 0.0
        %2075 = vmatpush.xpose.msra.mxu0 0.0
        %2076 = vmatpush.xpose.msra.mxu0 0.0
        %2077 = vmatpush.xpose.msra.mxu0 0.0
        %2078 = vmatpush.xpose.msra.mxu0 0.0
        %2079 = vmatpush.xpose.msra.mxu0 0.0
        %2080 = vmatpush.xpose.msra.mxu0 0.0
        %2081 = vmatpush.xpose.msra.mxu0 0.0
        %2082 = vmatpush.xpose.msra.mxu0 0.0
        %2083 = vmatpush.xpose.msra.mxu0 0.0
        %2084 = vmatpush.xpose.msra.mxu0 0.0
        %2085 = vmatpush.xpose.msra.mxu0 0.0
        %2086 = vmatpush.xpose.msra.mxu0 %v2070
        %2087 = vmatpush.xpose.msra.mxu0 %v2068
        %2088 = vmatmul.f32.gmra.mxu0 %v2064
        %v2089 = vpop.f32.mrf.mxu0
        %v2090 = vadd.f32 0.0, %v2089
        %2091 = vmatmul.f32.gmra.mxu0 %v2066
        %v2092 = vpop.f32.mrf.mxu0
        %v2093 = vadd.f32 0.0, %v2092
        %2094 = vdwg.mxu0
        %2097 = vrot.lane.b32.xlu0 %v491, 124
        %v2098 = vpop.permute.xlu0 %2097
        %2099 = vrot.lane.b32.xlu0 %v494, 124
        %v2100 = vpop.permute.xlu0 %2099
        %v2101 = vsel %vm953, %v491, 0
        %v2103 = vsel %vm953, %v494, 0
        %v2105 = vsel %vm953, %v2098, 0
        %v2107 = vsel %vm953, %v2100, 0
        %2109 = vmatpush.xpose.msra.mxu0 0.0
        %2110 = vmatpush.xpose.msra.mxu0 0.0
        %2111 = vmatpush.xpose.msra.mxu0 0.0
        %2112 = vmatpush.xpose.msra.mxu0 0.0
        %2113 = vmatpush.xpose.msra.mxu0 0.0
        %2114 = vmatpush.xpose.msra.mxu0 0.0
        %2115 = vmatpush.xpose.msra.mxu0 0.0
        %2116 = vmatpush.xpose.msra.mxu0 0.0
        %2117 = vmatpush.xpose.msra.mxu0 0.0
        %2118 = vmatpush.xpose.msra.mxu0 0.0
        %2119 = vmatpush.xpose.msra.mxu0 0.0
        %2120 = vmatpush.xpose.msra.mxu0 0.0
        %2121 = vmatpush.xpose.msra.mxu0 0.0
        %2122 = vmatpush.xpose.msra.mxu0 0.0
        %2123 = vmatpush.xpose.msra.mxu0 %v2107
        %2124 = vmatpush.xpose.msra.mxu0 %v2105
        %2125 = vmatmul.f32.gmra.mxu0 %v2101
        %v2126 = vpop.f32.mrf.mxu0
        %v2127 = vadd.f32 0.0, %v2126
        %2128 = vmatmul.f32.gmra.mxu0 %v2103
        %v2129 = vpop.f32.mrf.mxu0
        %v2130 = vadd.f32 0.0, %v2129
        %2131 = vdwg.mxu0
        %vm2132 = vcmask 130048
        %v2133 = vsel %vm2132, %v980, -inf
        %2134 = vmax.xlane.f32.xlu0 %v2133
        %v2135 = vpop.xlane.xlu0 %2134
        %v2136 = vsel %vm2132, %v983, -inf
        %2137 = vmax.xlane.f32.xlu0 %v2136
        %v2138 = vpop.xlane.xlu0 %2137
        %v2139 = vsel %vm2132, %v1017, -inf
        %2140 = vmax.xlane.f32.xlu0 %v2139
        %v2141 = vpop.xlane.xlu0 %2140
        %v2142 = vsel %vm2132, %v1020, -inf
        %2143 = vmax.xlane.f32.xlu0 %v2142
        %v2144 = vpop.xlane.xlu0 %2143
        %v2145 = vsel %vm2132, %v1054, -inf
        %2146 = vmax.xlane.f32.xlu0 %v2145
        %v2147 = vpop.xlane.xlu0 %2146
        %v2148 = vsel %vm2132, %v1057, -inf
        %2149 = vmax.xlane.f32.xlu0 %v2148
        %v2150 = vpop.xlane.xlu0 %2149
        %v2151 = vsel %vm2132, %v1091, -inf
        %2152 = vmax.xlane.f32.xlu0 %v2151
        %v2153 = vpop.xlane.xlu0 %2152
        %v2154 = vsel %vm2132, %v1094, -inf
        %2155 = vmax.xlane.f32.xlu0 %v2154
        %v2156 = vpop.xlane.xlu0 %2155
        %v2157 = vsel %vm2132, %v1128, -inf
        %2158 = vmax.xlane.f32.xlu0 %v2157
        %v2159 = vpop.xlane.xlu0 %2158
        %v2160 = vsel %vm2132, %v1131, -inf
        %2161 = vmax.xlane.f32.xlu0 %v2160
        %v2162 = vpop.xlane.xlu0 %2161
        %v2163 = vsel %vm2132, %v1165, -inf
        %2164 = vmax.xlane.f32.xlu0 %v2163
        %v2165 = vpop.xlane.xlu0 %2164
        %v2166 = vsel %vm2132, %v1168, -inf
        %2167 = vmax.xlane.f32.xlu0 %v2166
        %v2168 = vpop.xlane.xlu0 %2167
        %v2169 = vsel %vm2132, %v1202, -inf
        %2170 = vmax.xlane.f32.xlu0 %v2169
        %v2171 = vpop.xlane.xlu0 %2170
        %v2172 = vsel %vm2132, %v1205, -inf
        %2173 = vmax.xlane.f32.xlu0 %v2172
        %v2174 = vpop.xlane.xlu0 %2173
        %v2175 = vsel %vm2132, %v1239, -inf
        %2176 = vmax.xlane.f32.xlu0 %v2175
        %v2177 = vpop.xlane.xlu0 %2176
        %v2178 = vsel %vm2132, %v1242, -inf
        %2179 = vmax.xlane.f32.xlu0 %v2178
        %v2180 = vpop.xlane.xlu0 %2179
        %v2181 = vsel %vm2132, %v1276, -inf
        %2182 = vmax.xlane.f32.xlu0 %v2181
        %v2183 = vpop.xlane.xlu0 %2182
        %v2184 = vsel %vm2132, %v1279, -inf
        %2185 = vmax.xlane.f32.xlu0 %v2184
        %v2186 = vpop.xlane.xlu0 %2185
        %v2187 = vsel %vm2132, %v1313, -inf
        %2188 = vmax.xlane.f32.xlu0 %v2187
        %v2189 = vpop.xlane.xlu0 %2188
        %v2190 = vsel %vm2132, %v1316, -inf
        %2191 = vmax.xlane.f32.xlu0 %v2190
        %v2192 = vpop.xlane.xlu0 %2191
        %v2193 = vsel %vm2132, %v1350, -inf
        %2194 = vmax.xlane.f32.xlu0 %v2193
        %v2195 = vpop.xlane.xlu0 %2194
        %v2196 = vsel %vm2132, %v1353, -inf
        %2197 = vmax.xlane.f32.xlu0 %v2196
        %v2198 = vpop.xlane.xlu0 %2197
        %v2199 = vsel %vm2132, %v1387, -inf
        %2200 = vmax.xlane.f32.xlu0 %v2199
        %v2201 = vpop.xlane.xlu0 %2200
        %v2202 = vsel %vm2132, %v1390, -inf
        %2203 = vmax.xlane.f32.xlu0 %v2202
        %v2204 = vpop.xlane.xlu0 %2203
        %v2205 = vsel %vm2132, %v1424, -inf
        %2206 = vmax.xlane.f32.xlu0 %v2205
        %v2207 = vpop.xlane.xlu0 %2206
        %v2208 = vsel %vm2132, %v1427, -inf
        %2209 = vmax.xlane.f32.xlu0 %v2208
        %v2210 = vpop.xlane.xlu0 %2209
        %v2211 = vsel %vm2132, %v1461, -inf
        %2212 = vmax.xlane.f32.xlu0 %v2211
        %v2213 = vpop.xlane.xlu0 %2212
        %v2214 = vsel %vm2132, %v1464, -inf
        %2215 = vmax.xlane.f32.xlu0 %v2214
        %v2216 = vpop.xlane.xlu0 %2215
        %v2217 = vsel %vm2132, %v1498, -inf
        %2218 = vmax.xlane.f32.xlu0 %v2217
        %v2219 = vpop.xlane.xlu0 %2218
        %v2220 = vsel %vm2132, %v1501, -inf
        %2221 = vmax.xlane.f32.xlu0 %v2220
        %v2222 = vpop.xlane.xlu0 %2221
        %v2223 = vsel %vm2132, %v1535, -inf
        %2224 = vmax.xlane.f32.xlu0 %v2223
        %v2225 = vpop.xlane.xlu0 %2224
        %v2226 = vsel %vm2132, %v1538, -inf
        %2227 = vmax.xlane.f32.xlu0 %v2226
        %v2228 = vpop.xlane.xlu0 %2227
        %v2261 = vlaneseq
        %v2262 = vand.u32 %v2261, 127
        %v2263 = vperm.slane %v2135, %v2262
        %v2264 = vadd.s32 %v2262, 4294967288
        %v2265 = vperm.slane %v2138, %v2264
        %vm2266 = vcmask 130112
        %v2267 = vsel %vm2266, %v2265, %v2263
        %v2268 = vperm.slane %v2141, %v2262
        %v2269 = vperm.slane %v2144, %v2264
        %v2270 = vsel %vm2266, %v2269, %v2268
        %v2271 = vperm.slane %v2147, %v2262
        %v2272 = vperm.slane %v2150, %v2264
        %v2273 = vsel %vm2266, %v2272, %v2271
        %v2274 = vperm.slane %v2153, %v2262
        %v2275 = vperm.slane %v2156, %v2264
        %v2276 = vsel %vm2266, %v2275, %v2274
        %v2277 = vperm.slane %v2159, %v2262
        %v2278 = vperm.slane %v2162, %v2264
        %v2279 = vsel %vm2266, %v2278, %v2277
        %v2280 = vperm.slane %v2165, %v2262
        %v2281 = vperm.slane %v2168, %v2264
        %v2282 = vsel %vm2266, %v2281, %v2280
        %v2283 = vperm.slane %v2171, %v2262
        %v2284 = vperm.slane %v2174, %v2264
        %v2285 = vsel %vm2266, %v2284, %v2283
        %v2286 = vperm.slane %v2177, %v2262
        %v2287 = vperm.slane %v2180, %v2264
        %v2288 = vsel %vm2266, %v2287, %v2286
        %v2289 = vperm.slane %v2183, %v2262
        %v2290 = vperm.slane %v2186, %v2264
        %v2291 = vsel %vm2266, %v2290, %v2289
        %v2292 = vperm.slane %v2189, %v2262
        %v2293 = vperm.slane %v2192, %v2264
        %v2294 = vsel %vm2266, %v2293, %v2292
        %v2295 = vperm.slane %v2195, %v2262
        %v2296 = vperm.slane %v2198, %v2264
        %v2297 = vsel %vm2266, %v2296, %v2295
        %v2298 = vperm.slane %v2201, %v2262
        %v2299 = vperm.slane %v2204, %v2264
        %v2300 = vsel %vm2266, %v2299, %v2298
        %v2301 = vperm.slane %v2207, %v2262
        %v2302 = vperm.slane %v2210, %v2264
        %v2303 = vsel %vm2266, %v2302, %v2301
        %v2304 = vperm.slane %v2213, %v2262
        %v2305 = vperm.slane %v2216, %v2264
        %v2306 = vsel %vm2266, %v2305, %v2304
        %v2307 = vperm.slane %v2219, %v2262
        %v2308 = vperm.slane %v2222, %v2264
        %v2309 = vsel %vm2266, %v2308, %v2307
        %v2310 = vperm.slane %v2225, %v2262
        %v2311 = vperm.slane %v2228, %v2264
        %v2312 = vsel %vm2266, %v2311, %v2310
        %vm2313 = vcmask 1041409
        %v2314 = vsel %vm2313, %v2270, %v2267
        %vm2315 = vcmask 1042434
        %v2316 = vsel %vm2315, %v2273, %v2314
        %vm2317 = vcmask 1043459
        %v2318 = vsel %vm2317, %v2276, %v2316
        %vm2319 = vcmask 1044484
        %v2320 = vsel %vm2319, %v2279, %v2318
        %vm2321 = vcmask 1045509
        %v2322 = vsel %vm2321, %v2282, %v2320
        %vm2323 = vcmask 1046534
        %v2324 = vsel %vm2323, %v2285, %v2322
        %vm2325 = vcmask 1047559
        %v2326 = vsel %vm2325, %v2288, %v2324
        %v2327 = vsel %vm2313, %v2294, %v2291
        %v2328 = vsel %vm2315, %v2297, %v2327
        %v2329 = vsel %vm2317, %v2300, %v2328
        %v2330 = vsel %vm2319, %v2303, %v2329
        %v2331 = vsel %vm2321, %v2306, %v2330
        %v2332 = vsel %vm2323, %v2309, %v2331
        %v2333 = vsel %vm2325, %v2312, %v2332
        %2336 = vxpose.xlu0.b32.start [1/16] %v2326, 128
        %2337 = vxpose.xlu0.b32.cont [2/16] %v2333, 128
        %2338 = vxpose.xlu0.b32.cont [3/16] 0.0, 128
        %2339 = vxpose.xlu0.b32.cont [4/16] 0.0, 128
        %2340 = vxpose.xlu0.b32.cont [5/16] 0.0, 128
        %2341 = vxpose.xlu0.b32.cont [6/16] 0.0, 128
        %2342 = vxpose.xlu0.b32.cont [7/16] 0.0, 128
        %2343 = vxpose.xlu0.b32.cont [8/16] 0.0, 128
        %2344 = vxpose.xlu0.b32.cont [9/16] 0.0, 128
        %2345 = vxpose.xlu0.b32.cont [10/16] 0.0, 128
        %2346 = vxpose.xlu0.b32.cont [11/16] 0.0, 128
        %2347 = vxpose.xlu0.b32.cont [12/16] 0.0, 128
        %2348 = vxpose.xlu0.b32.cont [13/16] 0.0, 128
        %2349 = vxpose.xlu0.b32.cont [14/16] 0.0, 128
        %2350 = vxpose.xlu0.b32.cont [15/16] 0.0, 128
        %2351 = vxpose.xlu0.b32.end [16/16] 0.0, 128
        %v2352 = vpop.trf.xlu0
        %v2353 = vpop.trf.xlu0
        %v2354 = vpop.trf.xlu0
        %v2355 = vpop.trf.xlu0
        %v2356 = vpop.trf.xlu0
        %v2357 = vpop.trf.xlu0
        %v2358 = vpop.trf.xlu0
        %v2359 = vpop.trf.xlu0
        %v2360 = vpop.trf.xlu0
        %v2361 = vpop.trf.xlu0
        %v2362 = vpop.trf.xlu0
        %v2363 = vpop.trf.xlu0
        %v2364 = vpop.trf.xlu0
        %v2365 = vpop.trf.xlu0
        %v2366 = vpop.trf.xlu0
        %v2367 = vpop.trf.xlu0
        %v2368 = vsel %vm2132, %v1572, -inf
        %2369 = vmax.xlane.f32.xlu0 %v2368
        %v2370 = vpop.xlane.xlu0 %2369
        %v2371 = vsel %vm2132, %v1575, -inf
        %2372 = vmax.xlane.f32.xlu0 %v2371
        %v2373 = vpop.xlane.xlu0 %2372
        %v2374 = vsel %vm2132, %v1609, -inf
        %2375 = vmax.xlane.f32.xlu0 %v2374
        %v2376 = vpop.xlane.xlu0 %2375
        %v2377 = vsel %vm2132, %v1612, -inf
        %2378 = vmax.xlane.f32.xlu0 %v2377
        %v2379 = vpop.xlane.xlu0 %2378
        %v2380 = vsel %vm2132, %v1646, -inf
        %2381 = vmax.xlane.f32.xlu0 %v2380
        %v2382 = vpop.xlane.xlu0 %2381
        %v2383 = vsel %vm2132, %v1649, -inf
        %2384 = vmax.xlane.f32.xlu0 %v2383
        %v2385 = vpop.xlane.xlu0 %2384
        %v2386 = vsel %vm2132, %v1683, -inf
        %2387 = vmax.xlane.f32.xlu0 %v2386
        %v2388 = vpop.xlane.xlu0 %2387
        %v2389 = vsel %vm2132, %v1686, -inf
        %2390 = vmax.xlane.f32.xlu0 %v2389
        %v2391 = vpop.xlane.xlu0 %2390
        %v2392 = vsel %vm2132, %v1720, -inf
        %2393 = vmax.xlane.f32.xlu0 %v2392
        %v2394 = vpop.xlane.xlu0 %2393
        %v2395 = vsel %vm2132, %v1723, -inf
        %2396 = vmax.xlane.f32.xlu0 %v2395
        %v2397 = vpop.xlane.xlu0 %2396
        %v2398 = vsel %vm2132, %v1757, -inf
        %2399 = vmax.xlane.f32.xlu0 %v2398
        %v2400 = vpop.xlane.xlu0 %2399
        %v2401 = vsel %vm2132, %v1760, -inf
        %2402 = vmax.xlane.f32.xlu0 %v2401
        %v2403 = vpop.xlane.xlu0 %2402
        %v2404 = vsel %vm2132, %v1794, -inf
        %2405 = vmax.xlane.f32.xlu0 %v2404
        %v2406 = vpop.xlane.xlu0 %2405
        %v2407 = vsel %vm2132, %v1797, -inf
        %2408 = vmax.xlane.f32.xlu0 %v2407
        %v2409 = vpop.xlane.xlu0 %2408
        %v2410 = vsel %vm2132, %v1831, -inf
        %2411 = vmax.xlane.f32.xlu0 %v2410
        %v2412 = vpop.xlane.xlu0 %2411
        %v2413 = vsel %vm2132, %v1834, -inf
        %2414 = vmax.xlane.f32.xlu0 %v2413
        %v2415 = vpop.xlane.xlu0 %2414
        %v2416 = vsel %vm2132, %v1868, -inf
        %2417 = vmax.xlane.f32.xlu0 %v2416
        %v2418 = vpop.xlane.xlu0 %2417
        %v2419 = vsel %vm2132, %v1871, -inf
        %2420 = vmax.xlane.f32.xlu0 %v2419
        %v2421 = vpop.xlane.xlu0 %2420
        %v2422 = vsel %vm2132, %v1905, -inf
        %2423 = vmax.xlane.f32.xlu0 %v2422
        %v2424 = vpop.xlane.xlu0 %2423
        %v2425 = vsel %vm2132, %v1908, -inf
        %2426 = vmax.xlane.f32.xlu0 %v2425
        %v2427 = vpop.xlane.xlu0 %2426
        %v2428 = vsel %vm2132, %v1942, -inf
        %2429 = vmax.xlane.f32.xlu0 %v2428
        %v2430 = vpop.xlane.xlu0 %2429
        %v2431 = vsel %vm2132, %v1945, -inf
        %2432 = vmax.xlane.f32.xlu0 %v2431
        %v2433 = vpop.xlane.xlu0 %2432
        %v2434 = vsel %vm2132, %v1979, -inf
        %2435 = vmax.xlane.f32.xlu0 %v2434
        %v2436 = vpop.xlane.xlu0 %2435
        %v2437 = vsel %vm2132, %v1982, -inf
        %2438 = vmax.xlane.f32.xlu0 %v2437
        %v2439 = vpop.xlane.xlu0 %2438
        %v2440 = vsel %vm2132, %v2016, -inf
        %2441 = vmax.xlane.f32.xlu0 %v2440
        %v2442 = vpop.xlane.xlu0 %2441
        %v2443 = vsel %vm2132, %v2019, -inf
        %2444 = vmax.xlane.f32.xlu0 %v2443
        %v2445 = vpop.xlane.xlu0 %2444
        %v2446 = vsel %vm2132, %v2053, -inf
        %2447 = vmax.xlane.f32.xlu0 %v2446
        %v2448 = vpop.xlane.xlu0 %2447
        %v2449 = vsel %vm2132, %v2056, -inf
        %2450 = vmax.xlane.f32.xlu0 %v2449
        %v2451 = vpop.xlane.xlu0 %2450
        %v2452 = vsel %vm2132, %v2090, -inf
        %2453 = vmax.xlane.f32.xlu0 %v2452
        %v2454 = vpop.xlane.xlu0 %2453
        %v2455 = vsel %vm2132, %v2093, -inf
        %2456 = vmax.xlane.f32.xlu0 %v2455
        %v2457 = vpop.xlane.xlu0 %2456
        %v2458 = vsel %vm2132, %v2127, -inf
        %2459 = vmax.xlane.f32.xlu0 %v2458
        %v2460 = vpop.xlane.xlu0 %2459
        %v2461 = vsel %vm2132, %v2130, -inf
        %2462 = vmax.xlane.f32.xlu0 %v2461
        %v2463 = vpop.xlane.xlu0 %2462
        %v2496 = vperm.slane %v2370, %v2262
        %v2497 = vperm.slane %v2373, %v2264
        %v2498 = vsel %vm2266, %v2497, %v2496
        %v2499 = vperm.slane %v2376, %v2262
        %v2500 = vperm.slane %v2379, %v2264
        %v2501 = vsel %vm2266, %v2500, %v2499
        %v2502 = vperm.slane %v2382, %v2262
        %v2503 = vperm.slane %v2385, %v2264
        %v2504 = vsel %vm2266, %v2503, %v2502
        %v2505 = vperm.slane %v2388, %v2262
        %v2506 = vperm.slane %v2391, %v2264
        %v2507 = vsel %vm2266, %v2506, %v2505
        %v2508 = vperm.slane %v2394, %v2262
        %v2509 = vperm.slane %v2397, %v2264
        %v2510 = vsel %vm2266, %v2509, %v2508
        %v2511 = vperm.slane %v2400, %v2262
        %v2512 = vperm.slane %v2403, %v2264
        %v2513 = vsel %vm2266, %v2512, %v2511
        %v2514 = vperm.slane %v2406, %v2262
        %v2515 = vperm.slane %v2409, %v2264
        %v2516 = vsel %vm2266, %v2515, %v2514
        %v2517 = vperm.slane %v2412, %v2262
        %v2518 = vperm.slane %v2415, %v2264
        %v2519 = vsel %vm2266, %v2518, %v2517
        %v2520 = vperm.slane %v2418, %v2262
        %v2521 = vperm.slane %v2421, %v2264
        %v2522 = vsel %vm2266, %v2521, %v2520
        %v2523 = vperm.slane %v2424, %v2262
        %v2524 = vperm.slane %v2427, %v2264
        %v2525 = vsel %vm2266, %v2524, %v2523
        %v2526 = vperm.slane %v2430, %v2262
        %v2527 = vperm.slane %v2433, %v2264
        %v2528 = vsel %vm2266, %v2527, %v2526
        %v2529 = vperm.slane %v2436, %v2262
        %v2530 = vperm.slane %v2439, %v2264
        %v2531 = vsel %vm2266, %v2530, %v2529
        %v2532 = vperm.slane %v2442, %v2262
        %v2533 = vperm.slane %v2445, %v2264
        %v2534 = vsel %vm2266, %v2533, %v2532
        %v2535 = vperm.slane %v2448, %v2262
        %v2536 = vperm.slane %v2451, %v2264
        %v2537 = vsel %vm2266, %v2536, %v2535
        %v2538 = vperm.slane %v2454, %v2262
        %v2539 = vperm.slane %v2457, %v2264
        %v2540 = vsel %vm2266, %v2539, %v2538
        %v2541 = vperm.slane %v2460, %v2262
        %v2542 = vperm.slane %v2463, %v2264
        %v2543 = vsel %vm2266, %v2542, %v2541
        %v2544 = vsel %vm2313, %v2501, %v2498
        %v2545 = vsel %vm2315, %v2504, %v2544
        %v2546 = vsel %vm2317, %v2507, %v2545
        %v2547 = vsel %vm2319, %v2510, %v2546
        %v2548 = vsel %vm2321, %v2513, %v2547
        %v2549 = vsel %vm2323, %v2516, %v2548
        %v2550 = vsel %vm2325, %v2519, %v2549
        %v2551 = vsel %vm2313, %v2525, %v2522
        %v2552 = vsel %vm2315, %v2528, %v2551
        %v2553 = vsel %vm2317, %v2531, %v2552
        %v2554 = vsel %vm2319, %v2534, %v2553
        %v2555 = vsel %vm2321, %v2537, %v2554
        %v2556 = vsel %vm2323, %v2540, %v2555
        %v2557 = vsel %vm2325, %v2543, %v2556
        %v2560 = vmax.f32 %v2352, %v2550
        %v2561 = vmax.f32 %v2353, %v2557
        %2562 = vxpose.xlu0.b32.start [1/16] %v2560, 128
        %2563 = vxpose.xlu0.b32.cont [2/16] %v2561, 128
        %2564 = vxpose.xlu0.b32.cont [3/16] 0.0, 128
        %2565 = vxpose.xlu0.b32.cont [4/16] 0.0, 128
        %2566 = vxpose.xlu0.b32.cont [5/16] 0.0, 128
        %2567 = vxpose.xlu0.b32.cont [6/16] 0.0, 128
        %2568 = vxpose.xlu0.b32.cont [7/16] 0.0, 128
        %2569 = vxpose.xlu0.b32.cont [8/16] 0.0, 128
        %2570 = vxpose.xlu0.b32.cont [9/16] 0.0, 128
        %2571 = vxpose.xlu0.b32.cont [10/16] 0.0, 128
        %2572 = vxpose.xlu0.b32.cont [11/16] 0.0, 128
        %2573 = vxpose.xlu0.b32.cont [12/16] 0.0, 128
        %2574 = vxpose.xlu0.b32.cont [13/16] 0.0, 128
        %2575 = vxpose.xlu0.b32.cont [14/16] 0.0, 128
        %2576 = vxpose.xlu0.b32.cont [15/16] 0.0, 128
        %2577 = vxpose.xlu0.b32.end [16/16] 0.0, 128
        %v2578 = vpop.trf.xlu0
        %v2579 = vpop.trf.xlu0
        %v2580 = vpop.trf.xlu0
        %v2581 = vpop.trf.xlu0
        %v2582 = vpop.trf.xlu0
        %v2583 = vpop.trf.xlu0
        %v2584 = vpop.trf.xlu0
        %v2585 = vpop.trf.xlu0
        %v2586 = vpop.trf.xlu0
        %v2587 = vpop.trf.xlu0
        %v2588 = vpop.trf.xlu0
        %v2589 = vpop.trf.xlu0
        %v2590 = vpop.trf.xlu0
        %v2591 = vpop.trf.xlu0
        %v2592 = vpop.trf.xlu0
        %v2593 = vpop.trf.xlu0
        %v2594 = vperm.slane %v2578, 0
        %v2595 = vlaneseq
        %v2596 = vshrl.u32 %v2595, 7
        %2598 = vset.pattern.permute.xlu0 %v2596
        %2599 = vperm.xlu0 %2598, %v2594
        %v2600 = vpop.permute.xlu0 %2599
        %v2601 = vlaneseq
        %v2602 = vshrl.u32 %v2601, 7
        %v2603 = vadd.s32 %v2602, 8
        %2604 = vset.pattern.permute.xlu0 %v2603
        %2605 = vperm.xlu0 %2604, %v2594
        %v2606 = vpop.permute.xlu0 %2605
        %v2607 = vperm.slane %v2578, 1
        %v2608 = vlaneseq
        %v2609 = vshrl.u32 %v2608, 7
        %2611 = vset.pattern.permute.xlu0 %v2609
        %2612 = vperm.xlu0 %2611, %v2607
        %v2613 = vpop.permute.xlu0 %2612
        %v2614 = vlaneseq
        %v2615 = vshrl.u32 %v2614, 7
        %v2616 = vadd.s32 %v2615, 8
        %2617 = vset.pattern.permute.xlu0 %v2616
        %2618 = vperm.xlu0 %2617, %v2607
        %v2619 = vpop.permute.xlu0 %2618
        %v2620 = vperm.slane %v2578, 2
        %v2621 = vlaneseq
        %v2622 = vshrl.u32 %v2621, 7
        %2624 = vset.pattern.permute.xlu0 %v2622
        %2625 = vperm.xlu0 %2624, %v2620
        %v2626 = vpop.permute.xlu0 %2625
        %v2627 = vlaneseq
        %v2628 = vshrl.u32 %v2627, 7
        %v2629 = vadd.s32 %v2628, 8
        %2630 = vset.pattern.permute.xlu0 %v2629
        %2631 = vperm.xlu0 %2630, %v2620
        %v2632 = vpop.permute.xlu0 %2631
        %v2633 = vperm.slane %v2578, 3
        %v2634 = vlaneseq
        %v2635 = vshrl.u32 %v2634, 7
        %2637 = vset.pattern.permute.xlu0 %v2635
        %2638 = vperm.xlu0 %2637, %v2633
        %v2639 = vpop.permute.xlu0 %2638
        %v2640 = vlaneseq
        %v2641 = vshrl.u32 %v2640, 7
        %v2642 = vadd.s32 %v2641, 8
        %2643 = vset.pattern.permute.xlu0 %v2642
        %2644 = vperm.xlu0 %2643, %v2633
        %v2645 = vpop.permute.xlu0 %2644
        %v2646 = vperm.slane %v2578, 4
        %v2647 = vlaneseq
        %v2648 = vshrl.u32 %v2647, 7
        %2650 = vset.pattern.permute.xlu0 %v2648
        %2651 = vperm.xlu0 %2650, %v2646
        %v2652 = vpop.permute.xlu0 %2651
        %v2653 = vlaneseq
        %v2654 = vshrl.u32 %v2653, 7
        %v2655 = vadd.s32 %v2654, 8
        %2656 = vset.pattern.permute.xlu0 %v2655
        %2657 = vperm.xlu0 %2656, %v2646
        %v2658 = vpop.permute.xlu0 %2657
        %v2659 = vperm.slane %v2578, 5
        %v2660 = vlaneseq
        %v2661 = vshrl.u32 %v2660, 7
        %2663 = vset.pattern.permute.xlu0 %v2661
        %2664 = vperm.xlu0 %2663, %v2659
        %v2665 = vpop.permute.xlu0 %2664
        %v2666 = vlaneseq
        %v2667 = vshrl.u32 %v2666, 7
        %v2668 = vadd.s32 %v2667, 8
        %2669 = vset.pattern.permute.xlu0 %v2668
        %2670 = vperm.xlu0 %2669, %v2659
        %v2671 = vpop.permute.xlu0 %2670
        %v2672 = vperm.slane %v2578, 6
        %v2673 = vlaneseq
        %v2674 = vshrl.u32 %v2673, 7
        %2676 = vset.pattern.permute.xlu0 %v2674
        %2677 = vperm.xlu0 %2676, %v2672
        %v2678 = vpop.permute.xlu0 %2677
        %v2679 = vlaneseq
        %v2680 = vshrl.u32 %v2679, 7
        %v2681 = vadd.s32 %v2680, 8
        %2682 = vset.pattern.permute.xlu0 %v2681
        %2683 = vperm.xlu0 %2682, %v2672
        %v2684 = vpop.permute.xlu0 %2683
        %v2685 = vperm.slane %v2578, 7
        %v2686 = vlaneseq
        %v2687 = vshrl.u32 %v2686, 7
        %2689 = vset.pattern.permute.xlu0 %v2687
        %2690 = vperm.xlu0 %2689, %v2685
        %v2691 = vpop.permute.xlu0 %2690
        %v2692 = vlaneseq
        %v2693 = vshrl.u32 %v2692, 7
        %v2694 = vadd.s32 %v2693, 8
        %2695 = vset.pattern.permute.xlu0 %v2694
        %2696 = vperm.xlu0 %2695, %v2685
        %v2697 = vpop.permute.xlu0 %2696
        %v2698 = vperm.slane %v2579, 0
        %v2699 = vlaneseq
        %v2700 = vshrl.u32 %v2699, 7
        %2702 = vset.pattern.permute.xlu0 %v2700
        %2703 = vperm.xlu0 %2702, %v2698
        %v2704 = vpop.permute.xlu0 %2703
        %v2705 = vlaneseq
        %v2706 = vshrl.u32 %v2705, 7
        %v2707 = vadd.s32 %v2706, 8
        %2708 = vset.pattern.permute.xlu0 %v2707
        %2709 = vperm.xlu0 %2708, %v2698
        %v2710 = vpop.permute.xlu0 %2709
        %v2711 = vperm.slane %v2579, 1
        %v2712 = vlaneseq
        %v2713 = vshrl.u32 %v2712, 7
        %2715 = vset.pattern.permute.xlu0 %v2713
        %2716 = vperm.xlu0 %2715, %v2711
        %v2717 = vpop.permute.xlu0 %2716
        %v2718 = vlaneseq
        %v2719 = vshrl.u32 %v2718, 7
        %v2720 = vadd.s32 %v2719, 8
        %2721 = vset.pattern.permute.xlu0 %v2720
        %2722 = vperm.xlu0 %2721, %v2711
        %v2723 = vpop.permute.xlu0 %2722
        %v2724 = vperm.slane %v2579, 2
        %v2725 = vlaneseq
        %v2726 = vshrl.u32 %v2725, 7
        %2728 = vset.pattern.permute.xlu0 %v2726
        %2729 = vperm.xlu0 %2728, %v2724
        %v2730 = vpop.permute.xlu0 %2729
        %v2731 = vlaneseq
        %v2732 = vshrl.u32 %v2731, 7
        %v2733 = vadd.s32 %v2732, 8
        %2734 = vset.pattern.permute.xlu0 %v2733
        %2735 = vperm.xlu0 %2734, %v2724
        %v2736 = vpop.permute.xlu0 %2735
        %v2737 = vperm.slane %v2579, 3
        %v2738 = vlaneseq
        %v2739 = vshrl.u32 %v2738, 7
        %2741 = vset.pattern.permute.xlu0 %v2739
        %2742 = vperm.xlu0 %2741, %v2737
        %v2743 = vpop.permute.xlu0 %2742
        %v2744 = vlaneseq
        %v2745 = vshrl.u32 %v2744, 7
        %v2746 = vadd.s32 %v2745, 8
        %2747 = vset.pattern.permute.xlu0 %v2746
        %2748 = vperm.xlu0 %2747, %v2737
        %v2749 = vpop.permute.xlu0 %2748
        %v2750 = vperm.slane %v2579, 4
        %v2751 = vlaneseq
        %v2752 = vshrl.u32 %v2751, 7
        %2754 = vset.pattern.permute.xlu0 %v2752
        %2755 = vperm.xlu0 %2754, %v2750
        %v2756 = vpop.permute.xlu0 %2755
        %v2757 = vlaneseq
        %v2758 = vshrl.u32 %v2757, 7
        %v2759 = vadd.s32 %v2758, 8
        %2760 = vset.pattern.permute.xlu0 %v2759
        %2761 = vperm.xlu0 %2760, %v2750
        %v2762 = vpop.permute.xlu0 %2761
        %v2763 = vperm.slane %v2579, 5
        %v2764 = vlaneseq
        %v2765 = vshrl.u32 %v2764, 7
        %2767 = vset.pattern.permute.xlu0 %v2765
        %2768 = vperm.xlu0 %2767, %v2763
        %v2769 = vpop.permute.xlu0 %2768
        %v2770 = vlaneseq
        %v2771 = vshrl.u32 %v2770, 7
        %v2772 = vadd.s32 %v2771, 8
        %2773 = vset.pattern.permute.xlu0 %v2772
        %2774 = vperm.xlu0 %2773, %v2763
        %v2775 = vpop.permute.xlu0 %2774
        %v2776 = vperm.slane %v2579, 6
        %v2777 = vlaneseq
        %v2778 = vshrl.u32 %v2777, 7
        %2780 = vset.pattern.permute.xlu0 %v2778
        %2781 = vperm.xlu0 %2780, %v2776
        %v2782 = vpop.permute.xlu0 %2781
        %v2783 = vlaneseq
        %v2784 = vshrl.u32 %v2783, 7
        %v2785 = vadd.s32 %v2784, 8
        %2786 = vset.pattern.permute.xlu0 %v2785
        %2787 = vperm.xlu0 %2786, %v2776
        %v2788 = vpop.permute.xlu0 %2787
        %v2789 = vperm.slane %v2579, 7
        %v2790 = vlaneseq
        %v2791 = vshrl.u32 %v2790, 7
        %2793 = vset.pattern.permute.xlu0 %v2791
        %2794 = vperm.xlu0 %2793, %v2789
        %v2795 = vpop.permute.xlu0 %2794
        %v2796 = vlaneseq
        %v2797 = vshrl.u32 %v2796, 7
        %v2798 = vadd.s32 %v2797, 8
        %2799 = vset.pattern.permute.xlu0 %v2798
        %2800 = vperm.xlu0 %2799, %v2789
        %v2801 = vpop.permute.xlu0 %2800
        %v2802 = vsub.f32 %v980, %v2600
        %v2803 = vsub.f32 %v983, %v2606
        %v2804 = vsub.f32 %v1017, %v2613
        %v2805 = vsub.f32 %v1020, %v2619
        %v2806 = vsub.f32 %v1054, %v2626
        %v2807 = vsub.f32 %v1057, %v2632
        %v2808 = vsub.f32 %v1091, %v2639
        %v2809 = vsub.f32 %v1094, %v2645
        %v2810 = vsub.f32 %v1128, %v2652
        %v2811 = vsub.f32 %v1131, %v2658
        %v2812 = vsub.f32 %v1165, %v2665
        %v2813 = vsub.f32 %v1168, %v2671
        %v2814 = vsub.f32 %v1202, %v2678
        %v2815 = vsub.f32 %v1205, %v2684
        %v2816 = vsub.f32 %v1239, %v2691
        %v2817 = vsub.f32 %v1242, %v2697
        %v2818 = vsub.f32 %v1276, %v2704
        %v2819 = vsub.f32 %v1279, %v2710
        %v2820 = vsub.f32 %v1313, %v2717
        %v2821 = vsub.f32 %v1316, %v2723
        %v2822 = vsub.f32 %v1350, %v2730
        %v2823 = vsub.f32 %v1353, %v2736
        %v2824 = vsub.f32 %v1387, %v2743
        %v2825 = vsub.f32 %v1390, %v2749
        %v2826 = vsub.f32 %v1424, %v2756
        %v2827 = vsub.f32 %v1427, %v2762
        %v2828 = vsub.f32 %v1461, %v2769
        %v2829 = vsub.f32 %v1464, %v2775
        %v2830 = vsub.f32 %v1498, %v2782
        %v2831 = vsub.f32 %v1501, %v2788
        %v2832 = vsub.f32 %v1535, %v2795
        %v2833 = vsub.f32 %v1538, %v2801
        %v2834 = vmul.f32 %v2802, 1.442695
        %v2835 = vpow.pop %v2834
        %v2836 = vmul.f32 %v2803, 1.442695
        %v2837 = vpow.pop %v2836
        %v2838 = vmul.f32 %v2804, 1.442695
        %v2839 = vpow.pop %v2838
        %v2840 = vmul.f32 %v2805, 1.442695
        %v2841 = vpow.pop %v2840
        %v2842 = vmul.f32 %v2806, 1.442695
        %v2843 = vpow.pop %v2842
        %v2844 = vmul.f32 %v2807, 1.442695
        %v2845 = vpow.pop %v2844
        %v2846 = vmul.f32 %v2808, 1.442695
        %v2847 = vpow.pop %v2846
        %v2848 = vmul.f32 %v2809, 1.442695
        %v2849 = vpow.pop %v2848
        %v2850 = vmul.f32 %v2810, 1.442695
        %v2851 = vpow.pop %v2850
        %v2852 = vmul.f32 %v2811, 1.442695
        %v2853 = vpow.pop %v2852
        %v2854 = vmul.f32 %v2812, 1.442695
        %v2855 = vpow.pop %v2854
        %v2856 = vmul.f32 %v2813, 1.442695
        %v2857 = vpow.pop %v2856
        %v2858 = vmul.f32 %v2814, 1.442695
        %v2859 = vpow.pop %v2858
        %v2860 = vmul.f32 %v2815, 1.442695
        %v2861 = vpow.pop %v2860
        %v2862 = vmul.f32 %v2816, 1.442695
        %v2863 = vpow.pop %v2862
        %v2864 = vmul.f32 %v2817, 1.442695
        %v2865 = vpow.pop %v2864
        %v2866 = vmul.f32 %v2818, 1.442695
        %v2867 = vpow.pop %v2866
        %v2868 = vmul.f32 %v2819, 1.442695
        %v2869 = vpow.pop %v2868
        %v2870 = vmul.f32 %v2820, 1.442695
        %v2871 = vpow.pop %v2870
        %v2872 = vmul.f32 %v2821, 1.442695
        %v2873 = vpow.pop %v2872
        %v2874 = vmul.f32 %v2822, 1.442695
        %v2875 = vpow.pop %v2874
        %v2876 = vmul.f32 %v2823, 1.442695
        %v2877 = vpow.pop %v2876
        %v2878 = vmul.f32 %v2824, 1.442695
        %v2879 = vpow.pop %v2878
        %v2880 = vmul.f32 %v2825, 1.442695
        %v2881 = vpow.pop %v2880
        %v2882 = vmul.f32 %v2826, 1.442695
        %v2883 = vpow.pop %v2882
        %v2884 = vmul.f32 %v2827, 1.442695
        %v2885 = vpow.pop %v2884
        %v2886 = vmul.f32 %v2828, 1.442695
        %v2887 = vpow.pop %v2886
        %v2888 = vmul.f32 %v2829, 1.442695
        %v2889 = vpow.pop %v2888
        %v2890 = vmul.f32 %v2830, 1.442695
        %v2891 = vpow.pop %v2890
        %v2892 = vmul.f32 %v2831, 1.442695
        %v2893 = vpow.pop %v2892
        %v2894 = vmul.f32 %v2832, 1.442695
        %v2895 = vpow.pop %v2894
        %v2896 = vmul.f32 %v2833, 1.442695
        %v2897 = vpow.pop %v2896
        %v2898 = vperm.slane %v2560, 0
        %v2899 = vlaneseq
        %v2900 = vshrl.u32 %v2899, 7
        %2902 = vset.pattern.permute.xlu0 %v2900
        %2903 = vperm.xlu0 %2902, %v2898
        %v2904 = vpop.permute.xlu0 %2903
        %v2905 = vlaneseq
        %v2906 = vshrl.u32 %v2905, 7
        %v2907 = vadd.s32 %v2906, 8
        %2908 = vset.pattern.permute.xlu0 %v2907
        %2909 = vperm.xlu0 %2908, %v2898
        %v2910 = vpop.permute.xlu0 %2909
        %v2911 = vperm.slane %v2560, 1
        %v2912 = vlaneseq
        %v2913 = vshrl.u32 %v2912, 7
        %2915 = vset.pattern.permute.xlu0 %v2913
        %2916 = vperm.xlu0 %2915, %v2911
        %v2917 = vpop.permute.xlu0 %2916
        %v2918 = vlaneseq
        %v2919 = vshrl.u32 %v2918, 7
        %v2920 = vadd.s32 %v2919, 8
        %2921 = vset.pattern.permute.xlu0 %v2920
        %2922 = vperm.xlu0 %2921, %v2911
        %v2923 = vpop.permute.xlu0 %2922
        %v2924 = vperm.slane %v2560, 2
        %v2925 = vlaneseq
        %v2926 = vshrl.u32 %v2925, 7
        %2928 = vset.pattern.permute.xlu0 %v2926
        %2929 = vperm.xlu0 %2928, %v2924
        %v2930 = vpop.permute.xlu0 %2929
        %v2931 = vlaneseq
        %v2932 = vshrl.u32 %v2931, 7
        %v2933 = vadd.s32 %v2932, 8
        %2934 = vset.pattern.permute.xlu0 %v2933
        %2935 = vperm.xlu0 %2934, %v2924
        %v2936 = vpop.permute.xlu0 %2935
        %v2937 = vperm.slane %v2560, 3
        %v2938 = vlaneseq
        %v2939 = vshrl.u32 %v2938, 7
        %2941 = vset.pattern.permute.xlu0 %v2939
        %2942 = vperm.xlu0 %2941, %v2937
        %v2943 = vpop.permute.xlu0 %2942
        %v2944 = vlaneseq
        %v2945 = vshrl.u32 %v2944, 7
        %v2946 = vadd.s32 %v2945, 8
        %2947 = vset.pattern.permute.xlu0 %v2946
        %2948 = vperm.xlu0 %2947, %v2937
        %v2949 = vpop.permute.xlu0 %2948
        %v2950 = vperm.slane %v2560, 4
        %v2951 = vlaneseq
        %v2952 = vshrl.u32 %v2951, 7
        %2954 = vset.pattern.permute.xlu0 %v2952
        %2955 = vperm.xlu0 %2954, %v2950
        %v2956 = vpop.permute.xlu0 %2955
        %v2957 = vlaneseq
        %v2958 = vshrl.u32 %v2957, 7
        %v2959 = vadd.s32 %v2958, 8
        %2960 = vset.pattern.permute.xlu0 %v2959
        %2961 = vperm.xlu0 %2960, %v2950
        %v2962 = vpop.permute.xlu0 %2961
        %v2963 = vperm.slane %v2560, 5
        %v2964 = vlaneseq
        %v2965 = vshrl.u32 %v2964, 7
        %2967 = vset.pattern.permute.xlu0 %v2965
        %2968 = vperm.xlu0 %2967, %v2963
        %v2969 = vpop.permute.xlu0 %2968
        %v2970 = vlaneseq
        %v2971 = vshrl.u32 %v2970, 7
        %v2972 = vadd.s32 %v2971, 8
        %2973 = vset.pattern.permute.xlu0 %v2972
        %2974 = vperm.xlu0 %2973, %v2963
        %v2975 = vpop.permute.xlu0 %2974
        %v2976 = vperm.slane %v2560, 6
        %v2977 = vlaneseq
        %v2978 = vshrl.u32 %v2977, 7
        %2980 = vset.pattern.permute.xlu0 %v2978
        %2981 = vperm.xlu0 %2980, %v2976
        %v2982 = vpop.permute.xlu0 %2981
        %v2983 = vlaneseq
        %v2984 = vshrl.u32 %v2983, 7
        %v2985 = vadd.s32 %v2984, 8
        %2986 = vset.pattern.permute.xlu0 %v2985
        %2987 = vperm.xlu0 %2986, %v2976
        %v2988 = vpop.permute.xlu0 %2987
        %v2989 = vperm.slane %v2560, 7
        %v2990 = vlaneseq
        %v2991 = vshrl.u32 %v2990, 7
        %2993 = vset.pattern.permute.xlu0 %v2991
        %2994 = vperm.xlu0 %2993, %v2989
        %v2995 = vpop.permute.xlu0 %2994
        %v2996 = vlaneseq
        %v2997 = vshrl.u32 %v2996, 7
        %v2998 = vadd.s32 %v2997, 8
        %2999 = vset.pattern.permute.xlu0 %v2998
        %3000 = vperm.xlu0 %2999, %v2989
        %v3001 = vpop.permute.xlu0 %3000
        %v3002 = vperm.slane %v2561, 0
        %v3003 = vlaneseq
        %v3004 = vshrl.u32 %v3003, 7
        %3006 = vset.pattern.permute.xlu0 %v3004
        %3007 = vperm.xlu0 %3006, %v3002
        %v3008 = vpop.permute.xlu0 %3007
        %v3009 = vlaneseq
        %v3010 = vshrl.u32 %v3009, 7
        %v3011 = vadd.s32 %v3010, 8
        %3012 = vset.pattern.permute.xlu0 %v3011
        %3013 = vperm.xlu0 %3012, %v3002
        %v3014 = vpop.permute.xlu0 %3013
        %v3015 = vperm.slane %v2561, 1
        %v3016 = vlaneseq
        %v3017 = vshrl.u32 %v3016, 7
        %3019 = vset.pattern.permute.xlu0 %v3017
        %3020 = vperm.xlu0 %3019, %v3015
        %v3021 = vpop.permute.xlu0 %3020
        %v3022 = vlaneseq
        %v3023 = vshrl.u32 %v3022, 7
        %v3024 = vadd.s32 %v3023, 8
        %3025 = vset.pattern.permute.xlu0 %v3024
        %3026 = vperm.xlu0 %3025, %v3015
        %v3027 = vpop.permute.xlu0 %3026
        %v3028 = vperm.slane %v2561, 2
        %v3029 = vlaneseq
        %v3030 = vshrl.u32 %v3029, 7
        %3032 = vset.pattern.permute.xlu0 %v3030
        %3033 = vperm.xlu0 %3032, %v3028
        %v3034 = vpop.permute.xlu0 %3033
        %v3035 = vlaneseq
        %v3036 = vshrl.u32 %v3035, 7
        %v3037 = vadd.s32 %v3036, 8
        %3038 = vset.pattern.permute.xlu0 %v3037
        %3039 = vperm.xlu0 %3038, %v3028
        %v3040 = vpop.permute.xlu0 %3039
        %v3041 = vperm.slane %v2561, 3
        %v3042 = vlaneseq
        %v3043 = vshrl.u32 %v3042, 7
        %3045 = vset.pattern.permute.xlu0 %v3043
        %3046 = vperm.xlu0 %3045, %v3041
        %v3047 = vpop.permute.xlu0 %3046
        %v3048 = vlaneseq
        %v3049 = vshrl.u32 %v3048, 7
        %v3050 = vadd.s32 %v3049, 8
        %3051 = vset.pattern.permute.xlu0 %v3050
        %3052 = vperm.xlu0 %3051, %v3041
        %v3053 = vpop.permute.xlu0 %3052
        %v3054 = vperm.slane %v2561, 4
        %v3055 = vlaneseq
        %v3056 = vshrl.u32 %v3055, 7
        %3058 = vset.pattern.permute.xlu0 %v3056
        %3059 = vperm.xlu0 %3058, %v3054
        %v3060 = vpop.permute.xlu0 %3059
        %v3061 = vlaneseq
        %v3062 = vshrl.u32 %v3061, 7
        %v3063 = vadd.s32 %v3062, 8
        %3064 = vset.pattern.permute.xlu0 %v3063
        %3065 = vperm.xlu0 %3064, %v3054
        %v3066 = vpop.permute.xlu0 %3065
        %v3067 = vperm.slane %v2561, 5
        %v3068 = vlaneseq
        %v3069 = vshrl.u32 %v3068, 7
        %3071 = vset.pattern.permute.xlu0 %v3069
        %3072 = vperm.xlu0 %3071, %v3067
        %v3073 = vpop.permute.xlu0 %3072
        %v3074 = vlaneseq
        %v3075 = vshrl.u32 %v3074, 7
        %v3076 = vadd.s32 %v3075, 8
        %3077 = vset.pattern.permute.xlu0 %v3076
        %3078 = vperm.xlu0 %3077, %v3067
        %v3079 = vpop.permute.xlu0 %3078
        %v3080 = vperm.slane %v2561, 6
        %v3081 = vlaneseq
        %v3082 = vshrl.u32 %v3081, 7
        %3084 = vset.pattern.permute.xlu0 %v3082
        %3085 = vperm.xlu0 %3084, %v3080
        %v3086 = vpop.permute.xlu0 %3085
        %v3087 = vlaneseq
        %v3088 = vshrl.u32 %v3087, 7
        %v3089 = vadd.s32 %v3088, 8
        %3090 = vset.pattern.permute.xlu0 %v3089
        %3091 = vperm.xlu0 %3090, %v3080
        %v3092 = vpop.permute.xlu0 %3091
        %v3093 = vperm.slane %v2561, 7
        %v3094 = vlaneseq
        %v3095 = vshrl.u32 %v3094, 7
        %3097 = vset.pattern.permute.xlu0 %v3095
        %3098 = vperm.xlu0 %3097, %v3093
        %v3099 = vpop.permute.xlu0 %3098
        %v3100 = vlaneseq
        %v3101 = vshrl.u32 %v3100, 7
        %v3102 = vadd.s32 %v3101, 8
        %3103 = vset.pattern.permute.xlu0 %v3102
        %3104 = vperm.xlu0 %3103, %v3093
        %v3105 = vpop.permute.xlu0 %3104
        %v3106 = vsub.f32 %v1572, %v2904
        %v3107 = vsub.f32 %v1575, %v2910
        %v3108 = vsub.f32 %v1609, %v2917
        %v3109 = vsub.f32 %v1612, %v2923
        %v3110 = vsub.f32 %v1646, %v2930
        %v3111 = vsub.f32 %v1649, %v2936
        %v3112 = vsub.f32 %v1683, %v2943
        %v3113 = vsub.f32 %v1686, %v2949
        %v3114 = vsub.f32 %v1720, %v2956
        %v3115 = vsub.f32 %v1723, %v2962
        %v3116 = vsub.f32 %v1757, %v2969
        %v3117 = vsub.f32 %v1760, %v2975
        %v3118 = vsub.f32 %v1794, %v2982
        %v3119 = vsub.f32 %v1797, %v2988
        %v3120 = vsub.f32 %v1831, %v2995
        %v3121 = vsub.f32 %v1834, %v3001
        %v3122 = vsub.f32 %v1868, %v3008
        %v3123 = vsub.f32 %v1871, %v3014
        %v3124 = vsub.f32 %v1905, %v3021
        %v3125 = vsub.f32 %v1908, %v3027
        %v3126 = vsub.f32 %v1942, %v3034
        %v3127 = vsub.f32 %v1945, %v3040
        %v3128 = vsub.f32 %v1979, %v3047
        %v3129 = vsub.f32 %v1982, %v3053
        %v3130 = vsub.f32 %v2016, %v3060
        %v3131 = vsub.f32 %v2019, %v3066
        %v3132 = vsub.f32 %v2053, %v3073
        %v3133 = vsub.f32 %v2056, %v3079
        %v3134 = vsub.f32 %v2090, %v3086
        %v3135 = vsub.f32 %v2093, %v3092
        %v3136 = vsub.f32 %v2127, %v3099
        %v3137 = vsub.f32 %v2130, %v3105
        %v3138 = vmul.f32 %v3106, 1.442695
        %v3139 = vpow.pop %v3138
        %v3140 = vmul.f32 %v3107, 1.442695
        %v3141 = vpow.pop %v3140
        %v3142 = vmul.f32 %v3108, 1.442695
        %v3143 = vpow.pop %v3142
        %v3144 = vmul.f32 %v3109, 1.442695
        %v3145 = vpow.pop %v3144
        %v3146 = vmul.f32 %v3110, 1.442695
        %v3147 = vpow.pop %v3146
        %v3148 = vmul.f32 %v3111, 1.442695
        %v3149 = vpow.pop %v3148
        %v3150 = vmul.f32 %v3112, 1.442695
        %v3151 = vpow.pop %v3150
        %v3152 = vmul.f32 %v3113, 1.442695
        %v3153 = vpow.pop %v3152
        %v3154 = vmul.f32 %v3114, 1.442695
        %v3155 = vpow.pop %v3154
        %v3156 = vmul.f32 %v3115, 1.442695
        %v3157 = vpow.pop %v3156
        %v3158 = vmul.f32 %v3116, 1.442695
        %v3159 = vpow.pop %v3158
        %v3160 = vmul.f32 %v3117, 1.442695
        %v3161 = vpow.pop %v3160
        %v3162 = vmul.f32 %v3118, 1.442695
        %v3163 = vpow.pop %v3162
        %v3164 = vmul.f32 %v3119, 1.442695
        %v3165 = vpow.pop %v3164
        %v3166 = vmul.f32 %v3120, 1.442695
        %v3167 = vpow.pop %v3166
        %v3168 = vmul.f32 %v3121, 1.442695
        %v3169 = vpow.pop %v3168
        %v3170 = vmul.f32 %v3122, 1.442695
        %v3171 = vpow.pop %v3170
        %v3172 = vmul.f32 %v3123, 1.442695
        %v3173 = vpow.pop %v3172
        %v3174 = vmul.f32 %v3124, 1.442695
        %v3175 = vpow.pop %v3174
        %v3176 = vmul.f32 %v3125, 1.442695
        %v3177 = vpow.pop %v3176
        %v3178 = vmul.f32 %v3126, 1.442695
        %v3179 = vpow.pop %v3178
        %v3180 = vmul.f32 %v3127, 1.442695
        %v3181 = vpow.pop %v3180
        %v3182 = vmul.f32 %v3128, 1.442695
        %v3183 = vpow.pop %v3182
        %v3184 = vmul.f32 %v3129, 1.442695
        %v3185 = vpow.pop %v3184
        %v3186 = vmul.f32 %v3130, 1.442695
        %v3187 = vpow.pop %v3186
        %v3188 = vmul.f32 %v3131, 1.442695
        %v3189 = vpow.pop %v3188
        %v3190 = vmul.f32 %v3132, 1.442695
        %v3191 = vpow.pop %v3190
        %v3192 = vmul.f32 %v3133, 1.442695
        %v3193 = vpow.pop %v3192
        %v3194 = vmul.f32 %v3134, 1.442695
        %v3195 = vpow.pop %v3194
        %v3196 = vmul.f32 %v3135, 1.442695
        %v3197 = vpow.pop %v3196
        %v3198 = vmul.f32 %v3136, 1.442695
        %v3199 = vpow.pop %v3198
        %v3200 = vmul.f32 %v3137, 1.442695
        %v3201 = vpow.pop %v3200
        %v3202 = vsel %vm2132, %v3139, 0.0
        %3203 = vadd.xlane.f32.xlu0 %v3202
        %v3204 = vpop.xlane.xlu0 %3203
        %v3205 = vsel %vm2132, %v3141, 0.0
        %3206 = vadd.xlane.f32.xlu0 %v3205
        %v3207 = vpop.xlane.xlu0 %3206
        %v3208 = vsel %vm2132, %v3143, 0.0
        %3209 = vadd.xlane.f32.xlu0 %v3208
        %v3210 = vpop.xlane.xlu0 %3209
        %v3211 = vsel %vm2132, %v3145, 0.0
        %3212 = vadd.xlane.f32.xlu0 %v3211
        %v3213 = vpop.xlane.xlu0 %3212
        %v3214 = vsel %vm2132, %v3147, 0.0
        %3215 = vadd.xlane.f32.xlu0 %v3214
        %v3216 = vpop.xlane.xlu0 %3215
        %v3217 = vsel %vm2132, %v3149, 0.0
        %3218 = vadd.xlane.f32.xlu0 %v3217
        %v3219 = vpop.xlane.xlu0 %3218
        %v3220 = vsel %vm2132, %v3151, 0.0
        %3221 = vadd.xlane.f32.xlu0 %v3220
        %v3222 = vpop.xlane.xlu0 %3221
        %v3223 = vsel %vm2132, %v3153, 0.0
        %3224 = vadd.xlane.f32.xlu0 %v3223
        %v3225 = vpop.xlane.xlu0 %3224
        %v3226 = vsel %vm2132, %v3155, 0.0
        %3227 = vadd.xlane.f32.xlu0 %v3226
        %v3228 = vpop.xlane.xlu0 %3227
        %v3229 = vsel %vm2132, %v3157, 0.0
        %3230 = vadd.xlane.f32.xlu0 %v3229
        %v3231 = vpop.xlane.xlu0 %3230
        %v3232 = vsel %vm2132, %v3159, 0.0
        %3233 = vadd.xlane.f32.xlu0 %v3232
        %v3234 = vpop.xlane.xlu0 %3233
        %v3235 = vsel %vm2132, %v3161, 0.0
        %3236 = vadd.xlane.f32.xlu0 %v3235
        %v3237 = vpop.xlane.xlu0 %3236
        %v3238 = vsel %vm2132, %v3163, 0.0
        %3239 = vadd.xlane.f32.xlu0 %v3238
        %v3240 = vpop.xlane.xlu0 %3239
        %v3241 = vsel %vm2132, %v3165, 0.0
        %3242 = vadd.xlane.f32.xlu0 %v3241
        %v3243 = vpop.xlane.xlu0 %3242
        %v3244 = vsel %vm2132, %v3167, 0.0
        %3245 = vadd.xlane.f32.xlu0 %v3244
        %v3246 = vpop.xlane.xlu0 %3245
        %v3247 = vsel %vm2132, %v3169, 0.0
        %3248 = vadd.xlane.f32.xlu0 %v3247
        %v3249 = vpop.xlane.xlu0 %3248
        %v3250 = vsel %vm2132, %v3171, 0.0
        %3251 = vadd.xlane.f32.xlu0 %v3250
        %v3252 = vpop.xlane.xlu0 %3251
        %v3253 = vsel %vm2132, %v3173, 0.0
        %3254 = vadd.xlane.f32.xlu0 %v3253
        %v3255 = vpop.xlane.xlu0 %3254
        %v3256 = vsel %vm2132, %v3175, 0.0
        %3257 = vadd.xlane.f32.xlu0 %v3256
        %v3258 = vpop.xlane.xlu0 %3257
        %v3259 = vsel %vm2132, %v3177, 0.0
        %3260 = vadd.xlane.f32.xlu0 %v3259
        %v3261 = vpop.xlane.xlu0 %3260
        %v3262 = vsel %vm2132, %v3179, 0.0
        %3263 = vadd.xlane.f32.xlu0 %v3262
        %v3264 = vpop.xlane.xlu0 %3263
        %v3265 = vsel %vm2132, %v3181, 0.0
        %3266 = vadd.xlane.f32.xlu0 %v3265
        %v3267 = vpop.xlane.xlu0 %3266
        %v3268 = vsel %vm2132, %v3183, 0.0
        %3269 = vadd.xlane.f32.xlu0 %v3268
        %v3270 = vpop.xlane.xlu0 %3269
        %v3271 = vsel %vm2132, %v3185, 0.0
        %3272 = vadd.xlane.f32.xlu0 %v3271
        %v3273 = vpop.xlane.xlu0 %3272
        %v3274 = vsel %vm2132, %v3187, 0.0
        %3275 = vadd.xlane.f32.xlu0 %v3274
        %v3276 = vpop.xlane.xlu0 %3275
        %v3277 = vsel %vm2132, %v3189, 0.0
        %3278 = vadd.xlane.f32.xlu0 %v3277
        %v3279 = vpop.xlane.xlu0 %3278
        %v3280 = vsel %vm2132, %v3191, 0.0
        %3281 = vadd.xlane.f32.xlu0 %v3280
        %v3282 = vpop.xlane.xlu0 %3281
        %v3283 = vsel %vm2132, %v3193, 0.0
        %3284 = vadd.xlane.f32.xlu0 %v3283
        %v3285 = vpop.xlane.xlu0 %3284
        %v3286 = vsel %vm2132, %v3195, 0.0
        %3287 = vadd.xlane.f32.xlu0 %v3286
        %v3288 = vpop.xlane.xlu0 %3287
        %v3289 = vsel %vm2132, %v3197, 0.0
        %3290 = vadd.xlane.f32.xlu0 %v3289
        %v3291 = vpop.xlane.xlu0 %3290
        %v3292 = vsel %vm2132, %v3199, 0.0
        %3293 = vadd.xlane.f32.xlu0 %v3292
        %v3294 = vpop.xlane.xlu0 %3293
        %v3295 = vsel %vm2132, %v3201, 0.0
        %3296 = vadd.xlane.f32.xlu0 %v3295
        %v3297 = vpop.xlane.xlu0 %3296
        %v3298 = vsel %vm2132, %v2835, 0.0
        %3299 = vadd.xlane.f32.xlu0 %v3298
        %v3300 = vpop.xlane.xlu0 %3299
        %v3301 = vsel %vm2132, %v2837, 0.0
        %3302 = vadd.xlane.f32.xlu0 %v3301
        %v3303 = vpop.xlane.xlu0 %3302
        %v3304 = vsel %vm2132, %v2839, 0.0
        %3305 = vadd.xlane.f32.xlu0 %v3304
        %v3306 = vpop.xlane.xlu0 %3305
        %v3307 = vsel %vm2132, %v2841, 0.0
        %3308 = vadd.xlane.f32.xlu0 %v3307
        %v3309 = vpop.xlane.xlu0 %3308
        %v3310 = vsel %vm2132, %v2843, 0.0
        %3311 = vadd.xlane.f32.xlu0 %v3310
        %v3312 = vpop.xlane.xlu0 %3311
        %v3313 = vsel %vm2132, %v2845, 0.0
        %3314 = vadd.xlane.f32.xlu0 %v3313
        %v3315 = vpop.xlane.xlu0 %3314
        %v3316 = vsel %vm2132, %v2847, 0.0
        %3317 = vadd.xlane.f32.xlu0 %v3316
        %v3318 = vpop.xlane.xlu0 %3317
        %v3319 = vsel %vm2132, %v2849, 0.0
        %3320 = vadd.xlane.f32.xlu0 %v3319
        %v3321 = vpop.xlane.xlu0 %3320
        %v3322 = vsel %vm2132, %v2851, 0.0
        %3323 = vadd.xlane.f32.xlu0 %v3322
        %v3324 = vpop.xlane.xlu0 %3323
        %v3325 = vsel %vm2132, %v2853, 0.0
        %3326 = vadd.xlane.f32.xlu0 %v3325
        %v3327 = vpop.xlane.xlu0 %3326
        %v3328 = vsel %vm2132, %v2855, 0.0
        %3329 = vadd.xlane.f32.xlu0 %v3328
        %v3330 = vpop.xlane.xlu0 %3329
        %v3331 = vsel %vm2132, %v2857, 0.0
        %3332 = vadd.xlane.f32.xlu0 %v3331
        %v3333 = vpop.xlane.xlu0 %3332
        %v3334 = vsel %vm2132, %v2859, 0.0
        %3335 = vadd.xlane.f32.xlu0 %v3334
        %v3336 = vpop.xlane.xlu0 %3335
        %v3337 = vsel %vm2132, %v2861, 0.0
        %3338 = vadd.xlane.f32.xlu0 %v3337
        %v3339 = vpop.xlane.xlu0 %3338
        %v3340 = vsel %vm2132, %v2863, 0.0
        %3341 = vadd.xlane.f32.xlu0 %v3340
        %v3342 = vpop.xlane.xlu0 %3341
        %v3343 = vsel %vm2132, %v2865, 0.0
        %3344 = vadd.xlane.f32.xlu0 %v3343
        %v3345 = vpop.xlane.xlu0 %3344
        %v3346 = vsel %vm2132, %v2867, 0.0
        %3347 = vadd.xlane.f32.xlu0 %v3346
        %v3348 = vpop.xlane.xlu0 %3347
        %v3349 = vsel %vm2132, %v2869, 0.0
        %3350 = vadd.xlane.f32.xlu0 %v3349
        %v3351 = vpop.xlane.xlu0 %3350
        %v3352 = vsel %vm2132, %v2871, 0.0
        %3353 = vadd.xlane.f32.xlu0 %v3352
        %v3354 = vpop.xlane.xlu0 %3353
        %v3355 = vsel %vm2132, %v2873, 0.0
        %3356 = vadd.xlane.f32.xlu0 %v3355
        %v3357 = vpop.xlane.xlu0 %3356
        %v3358 = vsel %vm2132, %v2875, 0.0
        %3359 = vadd.xlane.f32.xlu0 %v3358
        %v3360 = vpop.xlane.xlu0 %3359
        %v3361 = vsel %vm2132, %v2877, 0.0
        %3362 = vadd.xlane.f32.xlu0 %v3361
        %v3363 = vpop.xlane.xlu0 %3362
        %v3364 = vsel %vm2132, %v2879, 0.0
        %3365 = vadd.xlane.f32.xlu0 %v3364
        %v3366 = vpop.xlane.xlu0 %3365
        %v3367 = vsel %vm2132, %v2881, 0.0
        %3368 = vadd.xlane.f32.xlu0 %v3367
        %v3369 = vpop.xlane.xlu0 %3368
        %v3370 = vsel %vm2132, %v2883, 0.0
        %3371 = vadd.xlane.f32.xlu0 %v3370
        %v3372 = vpop.xlane.xlu0 %3371
        %v3373 = vsel %vm2132, %v2885, 0.0
        %3374 = vadd.xlane.f32.xlu0 %v3373
        %v3375 = vpop.xlane.xlu0 %3374
        %v3376 = vsel %vm2132, %v2887, 0.0
        %3377 = vadd.xlane.f32.xlu0 %v3376
        %v3378 = vpop.xlane.xlu0 %3377
        %v3379 = vsel %vm2132, %v2889, 0.0
        %3380 = vadd.xlane.f32.xlu0 %v3379
        %v3381 = vpop.xlane.xlu0 %3380
        %v3382 = vsel %vm2132, %v2891, 0.0
        %3383 = vadd.xlane.f32.xlu0 %v3382
        %v3384 = vpop.xlane.xlu0 %3383
        %v3385 = vsel %vm2132, %v2893, 0.0
        %3386 = vadd.xlane.f32.xlu0 %v3385
        %v3387 = vpop.xlane.xlu0 %3386
        %v3388 = vsel %vm2132, %v2895, 0.0
        %3389 = vadd.xlane.f32.xlu0 %v3388
        %v3390 = vpop.xlane.xlu0 %3389
        %v3391 = vsel %vm2132, %v2897, 0.0
        %3392 = vadd.xlane.f32.xlu0 %v3391
        %v3393 = vpop.xlane.xlu0 %3392
        %v3426 = vperm.slane %v3300, %v2262
        %v3427 = vperm.slane %v3303, %v2264
        %v3428 = vsel %vm2266, %v3427, %v3426
        %v3429 = vperm.slane %v3306, %v2262
        %v3430 = vperm.slane %v3309, %v2264
        %v3431 = vsel %vm2266, %v3430, %v3429
        %v3432 = vperm.slane %v3312, %v2262
        %v3433 = vperm.slane %v3315, %v2264
        %v3434 = vsel %vm2266, %v3433, %v3432
        %v3435 = vperm.slane %v3318, %v2262
        %v3436 = vperm.slane %v3321, %v2264
        %v3437 = vsel %vm2266, %v3436, %v3435
        %v3438 = vperm.slane %v3324, %v2262
        %v3439 = vperm.slane %v3327, %v2264
        %v3440 = vsel %vm2266, %v3439, %v3438
        %v3441 = vperm.slane %v3330, %v2262
        %v3442 = vperm.slane %v3333, %v2264
        %v3443 = vsel %vm2266, %v3442, %v3441
        %v3444 = vperm.slane %v3336, %v2262
        %v3445 = vperm.slane %v3339, %v2264
        %v3446 = vsel %vm2266, %v3445, %v3444
        %v3447 = vperm.slane %v3342, %v2262
        %v3448 = vperm.slane %v3345, %v2264
        %v3449 = vsel %vm2266, %v3448, %v3447
        %v3450 = vperm.slane %v3348, %v2262
        %v3451 = vperm.slane %v3351, %v2264
        %v3452 = vsel %vm2266, %v3451, %v3450
        %v3453 = vperm.slane %v3354, %v2262
        %v3454 = vperm.slane %v3357, %v2264
        %v3455 = vsel %vm2266, %v3454, %v3453
        %v3456 = vperm.slane %v3360, %v2262
        %v3457 = vperm.slane %v3363, %v2264
        %v3458 = vsel %vm2266, %v3457, %v3456
        %v3459 = vperm.slane %v3366, %v2262
        %v3460 = vperm.slane %v3369, %v2264
        %v3461 = vsel %vm2266, %v3460, %v3459
        %v3462 = vperm.slane %v3372, %v2262
        %v3463 = vperm.slane %v3375, %v2264
        %v3464 = vsel %vm2266, %v3463, %v3462
        %v3465 = vperm.slane %v3378, %v2262
        %v3466 = vperm.slane %v3381, %v2264
        %v3467 = vsel %vm2266, %v3466, %v3465
        %v3468 = vperm.slane %v3384, %v2262
        %v3469 = vperm.slane %v3387, %v2264
        %v3470 = vsel %vm2266, %v3469, %v3468
        %v3471 = vperm.slane %v3390, %v2262
        %v3472 = vperm.slane %v3393, %v2264
        %v3473 = vsel %vm2266, %v3472, %v3471
        %v3474 = vsel %vm2313, %v3431, %v3428
        %v3475 = vsel %vm2315, %v3434, %v3474
        %v3476 = vsel %vm2317, %v3437, %v3475
        %v3477 = vsel %vm2319, %v3440, %v3476
        %v3478 = vsel %vm2321, %v3443, %v3477
        %v3479 = vsel %vm2323, %v3446, %v3478
        %v3480 = vsel %vm2325, %v3449, %v3479
        %v3481 = vsel %vm2313, %v3455, %v3452
        %v3482 = vsel %vm2315, %v3458, %v3481
        %v3483 = vsel %vm2317, %v3461, %v3482
        %v3484 = vsel %vm2319, %v3464, %v3483
        %v3485 = vsel %vm2321, %v3467, %v3484
        %v3486 = vsel %vm2323, %v3470, %v3485
        %v3487 = vsel %vm2325, %v3473, %v3486
        %3490 = vxpose.xlu0.b32.start [1/16] %v3480, 128
        %3491 = vxpose.xlu0.b32.cont [2/16] %v3487, 128
        %3492 = vxpose.xlu0.b32.cont [3/16] 0.0, 128
        %3493 = vxpose.xlu0.b32.cont [4/16] 0.0, 128
        %3494 = vxpose.xlu0.b32.cont [5/16] 0.0, 128
        %3495 = vxpose.xlu0.b32.cont [6/16] 0.0, 128
        %3496 = vxpose.xlu0.b32.cont [7/16] 0.0, 128
        %3497 = vxpose.xlu0.b32.cont [8/16] 0.0, 128
        %3498 = vxpose.xlu0.b32.cont [9/16] 0.0, 128
        %3499 = vxpose.xlu0.b32.cont [10/16] 0.0, 128
        %3500 = vxpose.xlu0.b32.cont [11/16] 0.0, 128
        %3501 = vxpose.xlu0.b32.cont [12/16] 0.0, 128
        %3502 = vxpose.xlu0.b32.cont [13/16] 0.0, 128
        %3503 = vxpose.xlu0.b32.cont [14/16] 0.0, 128
        %3504 = vxpose.xlu0.b32.cont [15/16] 0.0, 128
        %3505 = vxpose.xlu0.b32.end [16/16] 0.0, 128
        %v3506 = vpop.trf.xlu0
        %v3507 = vpop.trf.xlu0
        %v3508 = vpop.trf.xlu0
        %v3509 = vpop.trf.xlu0
        %v3510 = vpop.trf.xlu0
        %v3511 = vpop.trf.xlu0
        %v3512 = vpop.trf.xlu0
        %v3513 = vpop.trf.xlu0
        %v3514 = vpop.trf.xlu0
        %v3515 = vpop.trf.xlu0
        %v3516 = vpop.trf.xlu0
        %v3517 = vpop.trf.xlu0
        %v3518 = vpop.trf.xlu0
        %v3519 = vpop.trf.xlu0
        %v3520 = vpop.trf.xlu0
        %v3521 = vpop.trf.xlu0
        %v3524 = vperm.slane %v3506, 0
        %v3525 = vlaneseq
        %v3526 = vshrl.u32 %v3525, 7
        %3528 = vset.pattern.permute.xlu0 %v3526
        %3529 = vperm.xlu0 %3528, %v3524
        %v3530 = vpop.permute.xlu0 %3529
        %v3531 = vlaneseq
        %v3532 = vshrl.u32 %v3531, 7
        %v3533 = vadd.s32 %v3532, 8
        %3534 = vset.pattern.permute.xlu0 %v3533
        %3535 = vperm.xlu0 %3534, %v3524
        %v3536 = vpop.permute.xlu0 %3535
        %v3537 = vperm.slane %v3506, 1
        %v3538 = vlaneseq
        %v3539 = vshrl.u32 %v3538, 7
        %3541 = vset.pattern.permute.xlu0 %v3539
        %3542 = vperm.xlu0 %3541, %v3537
        %v3543 = vpop.permute.xlu0 %3542
        %v3544 = vlaneseq
        %v3545 = vshrl.u32 %v3544, 7
        %v3546 = vadd.s32 %v3545, 8
        %3547 = vset.pattern.permute.xlu0 %v3546
        %3548 = vperm.xlu0 %3547, %v3537
        %v3549 = vpop.permute.xlu0 %3548
        %v3550 = vperm.slane %v3506, 2
        %v3551 = vlaneseq
        %v3552 = vshrl.u32 %v3551, 7
        %3554 = vset.pattern.permute.xlu0 %v3552
        %3555 = vperm.xlu0 %3554, %v3550
        %v3556 = vpop.permute.xlu0 %3555
        %v3557 = vlaneseq
        %v3558 = vshrl.u32 %v3557, 7
        %v3559 = vadd.s32 %v3558, 8
        %3560 = vset.pattern.permute.xlu0 %v3559
        %3561 = vperm.xlu0 %3560, %v3550
        %v3562 = vpop.permute.xlu0 %3561
        %v3563 = vperm.slane %v3506, 3
        %v3564 = vlaneseq
        %v3565 = vshrl.u32 %v3564, 7
        %3567 = vset.pattern.permute.xlu0 %v3565
        %3568 = vperm.xlu0 %3567, %v3563
        %v3569 = vpop.permute.xlu0 %3568
        %v3570 = vlaneseq
        %v3571 = vshrl.u32 %v3570, 7
        %v3572 = vadd.s32 %v3571, 8
        %3573 = vset.pattern.permute.xlu0 %v3572
        %3574 = vperm.xlu0 %3573, %v3563
        %v3575 = vpop.permute.xlu0 %3574
        %v3576 = vperm.slane %v3506, 4
        %v3577 = vlaneseq
        %v3578 = vshrl.u32 %v3577, 7
        %3580 = vset.pattern.permute.xlu0 %v3578
        %3581 = vperm.xlu0 %3580, %v3576
        %v3582 = vpop.permute.xlu0 %3581
        %v3583 = vlaneseq
        %v3584 = vshrl.u32 %v3583, 7
        %v3585 = vadd.s32 %v3584, 8
        %3586 = vset.pattern.permute.xlu0 %v3585
        %3587 = vperm.xlu0 %3586, %v3576
        %v3588 = vpop.permute.xlu0 %3587
        %v3589 = vperm.slane %v3506, 5
        %v3590 = vlaneseq
        %v3591 = vshrl.u32 %v3590, 7
        %3593 = vset.pattern.permute.xlu0 %v3591
        %3594 = vperm.xlu0 %3593, %v3589
        %v3595 = vpop.permute.xlu0 %3594
        %v3596 = vlaneseq
        %v3597 = vshrl.u32 %v3596, 7
        %v3598 = vadd.s32 %v3597, 8
        %3599 = vset.pattern.permute.xlu0 %v3598
        %3600 = vperm.xlu0 %3599, %v3589
        %v3601 = vpop.permute.xlu0 %3600
        %v3602 = vperm.slane %v3506, 6
        %v3603 = vlaneseq
        %v3604 = vshrl.u32 %v3603, 7
        %3606 = vset.pattern.permute.xlu0 %v3604
        %3607 = vperm.xlu0 %3606, %v3602
        %v3608 = vpop.permute.xlu0 %3607
        %v3609 = vlaneseq
        %v3610 = vshrl.u32 %v3609, 7
        %v3611 = vadd.s32 %v3610, 8
        %3612 = vset.pattern.permute.xlu0 %v3611
        %3613 = vperm.xlu0 %3612, %v3602
        %v3614 = vpop.permute.xlu0 %3613
        %v3615 = vperm.slane %v3506, 7
        %v3616 = vlaneseq
        %v3617 = vshrl.u32 %v3616, 7
        %3619 = vset.pattern.permute.xlu0 %v3617
        %3620 = vperm.xlu0 %3619, %v3615
        %v3621 = vpop.permute.xlu0 %3620
        %v3622 = vlaneseq
        %v3623 = vshrl.u32 %v3622, 7
        %v3624 = vadd.s32 %v3623, 8
        %3625 = vset.pattern.permute.xlu0 %v3624
        %3626 = vperm.xlu0 %3625, %v3615
        %v3627 = vpop.permute.xlu0 %3626
        %v3628 = vperm.slane %v3507, 0
        %v3629 = vlaneseq
        %v3630 = vshrl.u32 %v3629, 7
        %3632 = vset.pattern.permute.xlu0 %v3630
        %3633 = vperm.xlu0 %3632, %v3628
        %v3634 = vpop.permute.xlu0 %3633
        %v3635 = vlaneseq
        %v3636 = vshrl.u32 %v3635, 7
        %v3637 = vadd.s32 %v3636, 8
        %3638 = vset.pattern.permute.xlu0 %v3637
        %3639 = vperm.xlu0 %3638, %v3628
        %v3640 = vpop.permute.xlu0 %3639
        %v3641 = vperm.slane %v3507, 1
        %v3642 = vlaneseq
        %v3643 = vshrl.u32 %v3642, 7
        %3645 = vset.pattern.permute.xlu0 %v3643
        %3646 = vperm.xlu0 %3645, %v3641
        %v3647 = vpop.permute.xlu0 %3646
        %v3648 = vlaneseq
        %v3649 = vshrl.u32 %v3648, 7
        %v3650 = vadd.s32 %v3649, 8
        %3651 = vset.pattern.permute.xlu0 %v3650
        %3652 = vperm.xlu0 %3651, %v3641
        %v3653 = vpop.permute.xlu0 %3652
        %v3654 = vperm.slane %v3507, 2
        %v3655 = vlaneseq
        %v3656 = vshrl.u32 %v3655, 7
        %3658 = vset.pattern.permute.xlu0 %v3656
        %3659 = vperm.xlu0 %3658, %v3654
        %v3660 = vpop.permute.xlu0 %3659
        %v3661 = vlaneseq
        %v3662 = vshrl.u32 %v3661, 7
        %v3663 = vadd.s32 %v3662, 8
        %3664 = vset.pattern.permute.xlu0 %v3663
        %3665 = vperm.xlu0 %3664, %v3654
        %v3666 = vpop.permute.xlu0 %3665
        %v3667 = vperm.slane %v3507, 3
        %v3668 = vlaneseq
        %v3669 = vshrl.u32 %v3668, 7
        %3671 = vset.pattern.permute.xlu0 %v3669
        %3672 = vperm.xlu0 %3671, %v3667
        %v3673 = vpop.permute.xlu0 %3672
        %v3674 = vlaneseq
        %v3675 = vshrl.u32 %v3674, 7
        %v3676 = vadd.s32 %v3675, 8
        %3677 = vset.pattern.permute.xlu0 %v3676
        %3678 = vperm.xlu0 %3677, %v3667
        %v3679 = vpop.permute.xlu0 %3678
        %v3680 = vperm.slane %v3507, 4
        %v3681 = vlaneseq
        %v3682 = vshrl.u32 %v3681, 7
        %3684 = vset.pattern.permute.xlu0 %v3682
        %3685 = vperm.xlu0 %3684, %v3680
        %v3686 = vpop.permute.xlu0 %3685
        %v3687 = vlaneseq
        %v3688 = vshrl.u32 %v3687, 7
        %v3689 = vadd.s32 %v3688, 8
        %3690 = vset.pattern.permute.xlu0 %v3689
        %3691 = vperm.xlu0 %3690, %v3680
        %v3692 = vpop.permute.xlu0 %3691
        %v3693 = vperm.slane %v3507, 5
        %v3694 = vlaneseq
        %v3695 = vshrl.u32 %v3694, 7
        %3697 = vset.pattern.permute.xlu0 %v3695
        %3698 = vperm.xlu0 %3697, %v3693
        %v3699 = vpop.permute.xlu0 %3698
        %v3700 = vlaneseq
        %v3701 = vshrl.u32 %v3700, 7
        %v3702 = vadd.s32 %v3701, 8
        %3703 = vset.pattern.permute.xlu0 %v3702
        %3704 = vperm.xlu0 %3703, %v3693
        %v3705 = vpop.permute.xlu0 %3704
        %v3706 = vperm.slane %v3507, 6
        %v3707 = vlaneseq
        %v3708 = vshrl.u32 %v3707, 7
        %3710 = vset.pattern.permute.xlu0 %v3708
        %3711 = vperm.xlu0 %3710, %v3706
        %v3712 = vpop.permute.xlu0 %3711
        %v3713 = vlaneseq
        %v3714 = vshrl.u32 %v3713, 7
        %v3715 = vadd.s32 %v3714, 8
        %3716 = vset.pattern.permute.xlu0 %v3715
        %3717 = vperm.xlu0 %3716, %v3706
        %v3718 = vpop.permute.xlu0 %3717
        %v3719 = vperm.slane %v3507, 7
        %v3720 = vlaneseq
        %v3721 = vshrl.u32 %v3720, 7
        %3723 = vset.pattern.permute.xlu0 %v3721
        %3724 = vperm.xlu0 %3723, %v3719
        %v3725 = vpop.permute.xlu0 %3724
        %v3726 = vlaneseq
        %v3727 = vshrl.u32 %v3726, 7
        %v3728 = vadd.s32 %v3727, 8
        %3729 = vset.pattern.permute.xlu0 %v3728
        %3730 = vperm.xlu0 %3729, %v3719
        %v3731 = vpop.permute.xlu0 %3730
        %v3764 = vadd.f32 %v3204, %v3530
        %v3765 = vadd.f32 %v3207, %v3536
        %v3766 = vadd.f32 %v3210, %v3543
        %v3767 = vadd.f32 %v3213, %v3549
        %v3768 = vadd.f32 %v3216, %v3556
        %v3769 = vadd.f32 %v3219, %v3562
        %v3770 = vadd.f32 %v3222, %v3569
        %v3771 = vadd.f32 %v3225, %v3575
        %v3772 = vadd.f32 %v3228, %v3582
        %v3773 = vadd.f32 %v3231, %v3588
        %v3774 = vadd.f32 %v3234, %v3595
        %v3775 = vadd.f32 %v3237, %v3601
        %v3776 = vadd.f32 %v3240, %v3608
        %v3777 = vadd.f32 %v3243, %v3614
        %v3778 = vadd.f32 %v3246, %v3621
        %v3779 = vadd.f32 %v3249, %v3627
        %v3780 = vadd.f32 %v3252, %v3634
        %v3781 = vadd.f32 %v3255, %v3640
        %v3782 = vadd.f32 %v3258, %v3647
        %v3783 = vadd.f32 %v3261, %v3653
        %v3784 = vadd.f32 %v3264, %v3660
        %v3785 = vadd.f32 %v3267, %v3666
        %v3786 = vadd.f32 %v3270, %v3673
        %v3787 = vadd.f32 %v3273, %v3679
        %v3788 = vadd.f32 %v3276, %v3686
        %v3789 = vadd.f32 %v3279, %v3692
        %v3790 = vadd.f32 %v3282, %v3699
        %v3791 = vadd.f32 %v3285, %v3705
        %v3792 = vadd.f32 %v3288, %v3712
        %v3793 = vadd.f32 %v3291, %v3718
        %v3794 = vadd.f32 %v3294, %v3725
        %v3795 = vadd.f32 %v3297, %v3731
        %v3796 = vrcp.pop %v3764
        %v3797 = vmul.f32 %v3764, %v3796
        %v3798 = vsub.f32 1.0, %v3797
        %v3799 = vmul.f32 %v3796, %v3798
        %v3800 = vadd.f32 %v3796, %v3799
        %vm3801 = vweird.f32 %v3764
        %vm3802 = vweird.f32 %v3796
        %vm3803 = vmor %vm3801, %vm3802
        %v3804 = vsel %vm3803, %v3796, %v3800
        %v3805 = vand.u32 2147483647, %v3764
        %vm3806 = vcmp.eq.f32.partialorder %v3805, 8.507059e+37
        %v3807 = vand.u32 %v3764, 2147483648
        %v3808 = vor.u32 1.1754944e-38, %v3807
        %v3809 = vsel %vm3806, %v3808, %v3804
        %v3810 = vrcp.pop %v3765
        %v3811 = vmul.f32 %v3765, %v3810
        %v3812 = vsub.f32 1.0, %v3811
        %v3813 = vmul.f32 %v3810, %v3812
        %v3814 = vadd.f32 %v3810, %v3813
        %vm3815 = vweird.f32 %v3765
        %vm3816 = vweird.f32 %v3810
        %vm3817 = vmor %vm3815, %vm3816
        %v3818 = vsel %vm3817, %v3810, %v3814
        %v3819 = vand.u32 2147483647, %v3765
        %vm3820 = vcmp.eq.f32.partialorder %v3819, 8.507059e+37
        %v3821 = vand.u32 %v3765, 2147483648
        %v3822 = vor.u32 1.1754944e-38, %v3821
        %v3823 = vsel %vm3820, %v3822, %v3818
        %v3824 = vrcp.pop %v3766
        %v3825 = vmul.f32 %v3766, %v3824
        %v3826 = vsub.f32 1.0, %v3825
        %v3827 = vmul.f32 %v3824, %v3826
        %v3828 = vadd.f32 %v3824, %v3827
        %vm3829 = vweird.f32 %v3766
        %vm3830 = vweird.f32 %v3824
        %vm3831 = vmor %vm3829, %vm3830
        %v3832 = vsel %vm3831, %v3824, %v3828
        %v3833 = vand.u32 2147483647, %v3766
        %vm3834 = vcmp.eq.f32.partialorder %v3833, 8.507059e+37
        %v3835 = vand.u32 %v3766, 2147483648
        %v3836 = vor.u32 1.1754944e-38, %v3835
        %v3837 = vsel %vm3834, %v3836, %v3832
        %v3838 = vrcp.pop %v3767
        %v3839 = vmul.f32 %v3767, %v3838
        %v3840 = vsub.f32 1.0, %v3839
        %v3841 = vmul.f32 %v3838, %v3840
        %v3842 = vadd.f32 %v3838, %v3841
        %vm3843 = vweird.f32 %v3767
        %vm3844 = vweird.f32 %v3838
        %vm3845 = vmor %vm3843, %vm3844
        %v3846 = vsel %vm3845, %v3838, %v3842
        %v3847 = vand.u32 2147483647, %v3767
        %vm3848 = vcmp.eq.f32.partialorder %v3847, 8.507059e+37
        %v3849 = vand.u32 %v3767, 2147483648
        %v3850 = vor.u32 1.1754944e-38, %v3849
        %v3851 = vsel %vm3848, %v3850, %v3846
        %v3852 = vrcp.pop %v3768
        %v3853 = vmul.f32 %v3768, %v3852
        %v3854 = vsub.f32 1.0, %v3853
        %v3855 = vmul.f32 %v3852, %v3854
        %v3856 = vadd.f32 %v3852, %v3855
        %vm3857 = vweird.f32 %v3768
        %vm3858 = vweird.f32 %v3852
        %vm3859 = vmor %vm3857, %vm3858
        %v3860 = vsel %vm3859, %v3852, %v3856
        %v3861 = vand.u32 2147483647, %v3768
        %vm3862 = vcmp.eq.f32.partialorder %v3861, 8.507059e+37
        %v3863 = vand.u32 %v3768, 2147483648
        %v3864 = vor.u32 1.1754944e-38, %v3863
        %v3865 = vsel %vm3862, %v3864, %v3860
        %v3866 = vrcp.pop %v3769
        %v3867 = vmul.f32 %v3769, %v3866
        %v3868 = vsub.f32 1.0, %v3867
        %v3869 = vmul.f32 %v3866, %v3868
        %v3870 = vadd.f32 %v3866, %v3869
        %vm3871 = vweird.f32 %v3769
        %vm3872 = vweird.f32 %v3866
        %vm3873 = vmor %vm3871, %vm3872
        %v3874 = vsel %vm3873, %v3866, %v3870
        %v3875 = vand.u32 2147483647, %v3769
        %vm3876 = vcmp.eq.f32.partialorder %v3875, 8.507059e+37
        %v3877 = vand.u32 %v3769, 2147483648
        %v3878 = vor.u32 1.1754944e-38, %v3877
        %v3879 = vsel %vm3876, %v3878, %v3874
        %v3880 = vrcp.pop %v3770
        %v3881 = vmul.f32 %v3770, %v3880
        %v3882 = vsub.f32 1.0, %v3881
        %v3883 = vmul.f32 %v3880, %v3882
        %v3884 = vadd.f32 %v3880, %v3883
        %vm3885 = vweird.f32 %v3770
        %vm3886 = vweird.f32 %v3880
        %vm3887 = vmor %vm3885, %vm3886
        %v3888 = vsel %vm3887, %v3880, %v3884
        %v3889 = vand.u32 2147483647, %v3770
        %vm3890 = vcmp.eq.f32.partialorder %v3889, 8.507059e+37
        %v3891 = vand.u32 %v3770, 2147483648
        %v3892 = vor.u32 1.1754944e-38, %v3891
        %v3893 = vsel %vm3890, %v3892, %v3888
        %v3894 = vrcp.pop %v3771
        %v3895 = vmul.f32 %v3771, %v3894
        %v3896 = vsub.f32 1.0, %v3895
        %v3897 = vmul.f32 %v3894, %v3896
        %v3898 = vadd.f32 %v3894, %v3897
        %vm3899 = vweird.f32 %v3771
        %vm3900 = vweird.f32 %v3894
        %vm3901 = vmor %vm3899, %vm3900
        %v3902 = vsel %vm3901, %v3894, %v3898
        %v3903 = vand.u32 2147483647, %v3771
        %vm3904 = vcmp.eq.f32.partialorder %v3903, 8.507059e+37
        %v3905 = vand.u32 %v3771, 2147483648
        %v3906 = vor.u32 1.1754944e-38, %v3905
        %v3907 = vsel %vm3904, %v3906, %v3902
        %v3908 = vrcp.pop %v3772
        %v3909 = vmul.f32 %v3772, %v3908
        %v3910 = vsub.f32 1.0, %v3909
        %v3911 = vmul.f32 %v3908, %v3910
        %v3912 = vadd.f32 %v3908, %v3911
        %vm3913 = vweird.f32 %v3772
        %vm3914 = vweird.f32 %v3908
        %vm3915 = vmor %vm3913, %vm3914
        %v3916 = vsel %vm3915, %v3908, %v3912
        %v3917 = vand.u32 2147483647, %v3772
        %vm3918 = vcmp.eq.f32.partialorder %v3917, 8.507059e+37
        %v3919 = vand.u32 %v3772, 2147483648
        %v3920 = vor.u32 1.1754944e-38, %v3919
        %v3921 = vsel %vm3918, %v3920, %v3916
        %v3922 = vrcp.pop %v3773
        %v3923 = vmul.f32 %v3773, %v3922
        %v3924 = vsub.f32 1.0, %v3923
        %v3925 = vmul.f32 %v3922, %v3924
        %v3926 = vadd.f32 %v3922, %v3925
        %vm3927 = vweird.f32 %v3773
        %vm3928 = vweird.f32 %v3922
        %vm3929 = vmor %vm3927, %vm3928
        %v3930 = vsel %vm3929, %v3922, %v3926
        %v3931 = vand.u32 2147483647, %v3773
        %vm3932 = vcmp.eq.f32.partialorder %v3931, 8.507059e+37
        %v3933 = vand.u32 %v3773, 2147483648
        %v3934 = vor.u32 1.1754944e-38, %v3933
        %v3935 = vsel %vm3932, %v3934, %v3930
        %v3936 = vrcp.pop %v3774
        %v3937 = vmul.f32 %v3774, %v3936
        %v3938 = vsub.f32 1.0, %v3937
        %v3939 = vmul.f32 %v3936, %v3938
        %v3940 = vadd.f32 %v3936, %v3939
        %vm3941 = vweird.f32 %v3774
        %vm3942 = vweird.f32 %v3936
        %vm3943 = vmor %vm3941, %vm3942
        %v3944 = vsel %vm3943, %v3936, %v3940
        %v3945 = vand.u32 2147483647, %v3774
        %vm3946 = vcmp.eq.f32.partialorder %v3945, 8.507059e+37
        %v3947 = vand.u32 %v3774, 2147483648
        %v3948 = vor.u32 1.1754944e-38, %v3947
        %v3949 = vsel %vm3946, %v3948, %v3944
        %v3950 = vrcp.pop %v3775
        %v3951 = vmul.f32 %v3775, %v3950
        %v3952 = vsub.f32 1.0, %v3951
        %v3953 = vmul.f32 %v3950, %v3952
        %v3954 = vadd.f32 %v3950, %v3953
        %vm3955 = vweird.f32 %v3775
        %vm3956 = vweird.f32 %v3950
        %vm3957 = vmor %vm3955, %vm3956
        %v3958 = vsel %vm3957, %v3950, %v3954
        %v3959 = vand.u32 2147483647, %v3775
        %vm3960 = vcmp.eq.f32.partialorder %v3959, 8.507059e+37
        %v3961 = vand.u32 %v3775, 2147483648
        %v3962 = vor.u32 1.1754944e-38, %v3961
        %v3963 = vsel %vm3960, %v3962, %v3958
        %v3964 = vrcp.pop %v3776
        %v3965 = vmul.f32 %v3776, %v3964
        %v3966 = vsub.f32 1.0, %v3965
        %v3967 = vmul.f32 %v3964, %v3966
        %v3968 = vadd.f32 %v3964, %v3967
        %vm3969 = vweird.f32 %v3776
        %vm3970 = vweird.f32 %v3964
        %vm3971 = vmor %vm3969, %vm3970
        %v3972 = vsel %vm3971, %v3964, %v3968
        %v3973 = vand.u32 2147483647, %v3776
        %vm3974 = vcmp.eq.f32.partialorder %v3973, 8.507059e+37
        %v3975 = vand.u32 %v3776, 2147483648
        %v3976 = vor.u32 1.1754944e-38, %v3975
        %v3977 = vsel %vm3974, %v3976, %v3972
        %v3978 = vrcp.pop %v3777
        %v3979 = vmul.f32 %v3777, %v3978
        %v3980 = vsub.f32 1.0, %v3979
        %v3981 = vmul.f32 %v3978, %v3980
        %v3982 = vadd.f32 %v3978, %v3981
        %vm3983 = vweird.f32 %v3777
        %vm3984 = vweird.f32 %v3978
        %vm3985 = vmor %vm3983, %vm3984
        %v3986 = vsel %vm3985, %v3978, %v3982
        %v3987 = vand.u32 2147483647, %v3777
        %vm3988 = vcmp.eq.f32.partialorder %v3987, 8.507059e+37
        %v3989 = vand.u32 %v3777, 2147483648
        %v3990 = vor.u32 1.1754944e-38, %v3989
        %v3991 = vsel %vm3988, %v3990, %v3986
        %v3992 = vrcp.pop %v3778
        %v3993 = vmul.f32 %v3778, %v3992
        %v3994 = vsub.f32 1.0, %v3993
        %v3995 = vmul.f32 %v3992, %v3994
        %v3996 = vadd.f32 %v3992, %v3995
        %vm3997 = vweird.f32 %v3778
        %vm3998 = vweird.f32 %v3992
        %vm3999 = vmor %vm3997, %vm3998
        %v4000 = vsel %vm3999, %v3992, %v3996
        %v4001 = vand.u32 2147483647, %v3778
        %vm4002 = vcmp.eq.f32.partialorder %v4001, 8.507059e+37
        %v4003 = vand.u32 %v3778, 2147483648
        %v4004 = vor.u32 1.1754944e-38, %v4003
        %v4005 = vsel %vm4002, %v4004, %v4000
        %v4006 = vrcp.pop %v3779
        %v4007 = vmul.f32 %v3779, %v4006
        %v4008 = vsub.f32 1.0, %v4007
        %v4009 = vmul.f32 %v4006, %v4008
        %v4010 = vadd.f32 %v4006, %v4009
        %vm4011 = vweird.f32 %v3779
        %vm4012 = vweird.f32 %v4006
        %vm4013 = vmor %vm4011, %vm4012
        %v4014 = vsel %vm4013, %v4006, %v4010
        %v4015 = vand.u32 2147483647, %v3779
        %vm4016 = vcmp.eq.f32.partialorder %v4015, 8.507059e+37
        %v4017 = vand.u32 %v3779, 2147483648
        %v4018 = vor.u32 1.1754944e-38, %v4017
        %v4019 = vsel %vm4016, %v4018, %v4014
        %v4020 = vrcp.pop %v3780
        %v4021 = vmul.f32 %v3780, %v4020
        %v4022 = vsub.f32 1.0, %v4021
        %v4023 = vmul.f32 %v4020, %v4022
        %v4024 = vadd.f32 %v4020, %v4023
        %vm4025 = vweird.f32 %v3780
        %vm4026 = vweird.f32 %v4020
        %vm4027 = vmor %vm4025, %vm4026
        %v4028 = vsel %vm4027, %v4020, %v4024
        %v4029 = vand.u32 2147483647, %v3780
        %vm4030 = vcmp.eq.f32.partialorder %v4029, 8.507059e+37
        %v4031 = vand.u32 %v3780, 2147483648
        %v4032 = vor.u32 1.1754944e-38, %v4031
        %v4033 = vsel %vm4030, %v4032, %v4028
        %v4034 = vrcp.pop %v3781
        %v4035 = vmul.f32 %v3781, %v4034
        %v4036 = vsub.f32 1.0, %v4035
        %v4037 = vmul.f32 %v4034, %v4036
        %v4038 = vadd.f32 %v4034, %v4037
        %vm4039 = vweird.f32 %v3781
        %vm4040 = vweird.f32 %v4034
        %vm4041 = vmor %vm4039, %vm4040
        %v4042 = vsel %vm4041, %v4034, %v4038
        %v4043 = vand.u32 2147483647, %v3781
        %vm4044 = vcmp.eq.f32.partialorder %v4043, 8.507059e+37
        %v4045 = vand.u32 %v3781, 2147483648
        %v4046 = vor.u32 1.1754944e-38, %v4045
        %v4047 = vsel %vm4044, %v4046, %v4042
        %v4048 = vrcp.pop %v3782
        %v4049 = vmul.f32 %v3782, %v4048
        %v4050 = vsub.f32 1.0, %v4049
        %v4051 = vmul.f32 %v4048, %v4050
        %v4052 = vadd.f32 %v4048, %v4051
        %vm4053 = vweird.f32 %v3782
        %vm4054 = vweird.f32 %v4048
        %vm4055 = vmor %vm4053, %vm4054
        %v4056 = vsel %vm4055, %v4048, %v4052
        %v4057 = vand.u32 2147483647, %v3782
        %vm4058 = vcmp.eq.f32.partialorder %v4057, 8.507059e+37
        %v4059 = vand.u32 %v3782, 2147483648
        %v4060 = vor.u32 1.1754944e-38, %v4059
        %v4061 = vsel %vm4058, %v4060, %v4056
        %v4062 = vrcp.pop %v3783
        %v4063 = vmul.f32 %v3783, %v4062
        %v4064 = vsub.f32 1.0, %v4063
        %v4065 = vmul.f32 %v4062, %v4064
        %v4066 = vadd.f32 %v4062, %v4065
        %vm4067 = vweird.f32 %v3783
        %vm4068 = vweird.f32 %v4062
        %vm4069 = vmor %vm4067, %vm4068
        %v4070 = vsel %vm4069, %v4062, %v4066
        %v4071 = vand.u32 2147483647, %v3783
        %vm4072 = vcmp.eq.f32.partialorder %v4071, 8.507059e+37
        %v4073 = vand.u32 %v3783, 2147483648
        %v4074 = vor.u32 1.1754944e-38, %v4073
        %v4075 = vsel %vm4072, %v4074, %v4070
        %v4076 = vrcp.pop %v3784
        %v4077 = vmul.f32 %v3784, %v4076
        %v4078 = vsub.f32 1.0, %v4077
        %v4079 = vmul.f32 %v4076, %v4078
        %v4080 = vadd.f32 %v4076, %v4079
        %vm4081 = vweird.f32 %v3784
        %vm4082 = vweird.f32 %v4076
        %vm4083 = vmor %vm4081, %vm4082
        %v4084 = vsel %vm4083, %v4076, %v4080
        %v4085 = vand.u32 2147483647, %v3784
        %vm4086 = vcmp.eq.f32.partialorder %v4085, 8.507059e+37
        %v4087 = vand.u32 %v3784, 2147483648
        %v4088 = vor.u32 1.1754944e-38, %v4087
        %v4089 = vsel %vm4086, %v4088, %v4084
        %v4090 = vrcp.pop %v3785
        %v4091 = vmul.f32 %v3785, %v4090
        %v4092 = vsub.f32 1.0, %v4091
        %v4093 = vmul.f32 %v4090, %v4092
        %v4094 = vadd.f32 %v4090, %v4093
        %vm4095 = vweird.f32 %v3785
        %vm4096 = vweird.f32 %v4090
        %vm4097 = vmor %vm4095, %vm4096
        %v4098 = vsel %vm4097, %v4090, %v4094
        %v4099 = vand.u32 2147483647, %v3785
        %vm4100 = vcmp.eq.f32.partialorder %v4099, 8.507059e+37
        %v4101 = vand.u32 %v3785, 2147483648
        %v4102 = vor.u32 1.1754944e-38, %v4101
        %v4103 = vsel %vm4100, %v4102, %v4098
        %v4104 = vrcp.pop %v3786
        %v4105 = vmul.f32 %v3786, %v4104
        %v4106 = vsub.f32 1.0, %v4105
        %v4107 = vmul.f32 %v4104, %v4106
        %v4108 = vadd.f32 %v4104, %v4107
        %vm4109 = vweird.f32 %v3786
        %vm4110 = vweird.f32 %v4104
        %vm4111 = vmor %vm4109, %vm4110
        %v4112 = vsel %vm4111, %v4104, %v4108
        %v4113 = vand.u32 2147483647, %v3786
        %vm4114 = vcmp.eq.f32.partialorder %v4113, 8.507059e+37
        %v4115 = vand.u32 %v3786, 2147483648
        %v4116 = vor.u32 1.1754944e-38, %v4115
        %v4117 = vsel %vm4114, %v4116, %v4112
        %v4118 = vrcp.pop %v3787
        %v4119 = vmul.f32 %v3787, %v4118
        %v4120 = vsub.f32 1.0, %v4119
        %v4121 = vmul.f32 %v4118, %v4120
        %v4122 = vadd.f32 %v4118, %v4121
        %vm4123 = vweird.f32 %v3787
        %vm4124 = vweird.f32 %v4118
        %vm4125 = vmor %vm4123, %vm4124
        %v4126 = vsel %vm4125, %v4118, %v4122
        %v4127 = vand.u32 2147483647, %v3787
        %vm4128 = vcmp.eq.f32.partialorder %v4127, 8.507059e+37
        %v4129 = vand.u32 %v3787, 2147483648
        %v4130 = vor.u32 1.1754944e-38, %v4129
        %v4131 = vsel %vm4128, %v4130, %v4126
        %v4132 = vrcp.pop %v3788
        %v4133 = vmul.f32 %v3788, %v4132
        %v4134 = vsub.f32 1.0, %v4133
        %v4135 = vmul.f32 %v4132, %v4134
        %v4136 = vadd.f32 %v4132, %v4135
        %vm4137 = vweird.f32 %v3788
        %vm4138 = vweird.f32 %v4132
        %vm4139 = vmor %vm4137, %vm4138
        %v4140 = vsel %vm4139, %v4132, %v4136
        %v4141 = vand.u32 2147483647, %v3788
        %vm4142 = vcmp.eq.f32.partialorder %v4141, 8.507059e+37
        %v4143 = vand.u32 %v3788, 2147483648
        %v4144 = vor.u32 1.1754944e-38, %v4143
        %v4145 = vsel %vm4142, %v4144, %v4140
        %v4146 = vrcp.pop %v3789
        %v4147 = vmul.f32 %v3789, %v4146
        %v4148 = vsub.f32 1.0, %v4147
        %v4149 = vmul.f32 %v4146, %v4148
        %v4150 = vadd.f32 %v4146, %v4149
        %vm4151 = vweird.f32 %v3789
        %vm4152 = vweird.f32 %v4146
        %vm4153 = vmor %vm4151, %vm4152
        %v4154 = vsel %vm4153, %v4146, %v4150
        %v4155 = vand.u32 2147483647, %v3789
        %vm4156 = vcmp.eq.f32.partialorder %v4155, 8.507059e+37
        %v4157 = vand.u32 %v3789, 2147483648
        %v4158 = vor.u32 1.1754944e-38, %v4157
        %v4159 = vsel %vm4156, %v4158, %v4154
        %v4160 = vrcp.pop %v3790
        %v4161 = vmul.f32 %v3790, %v4160
        %v4162 = vsub.f32 1.0, %v4161
        %v4163 = vmul.f32 %v4160, %v4162
        %v4164 = vadd.f32 %v4160, %v4163
        %vm4165 = vweird.f32 %v3790
        %vm4166 = vweird.f32 %v4160
        %vm4167 = vmor %vm4165, %vm4166
        %v4168 = vsel %vm4167, %v4160, %v4164
        %v4169 = vand.u32 2147483647, %v3790
        %vm4170 = vcmp.eq.f32.partialorder %v4169, 8.507059e+37
        %v4171 = vand.u32 %v3790, 2147483648
        %v4172 = vor.u32 1.1754944e-38, %v4171
        %v4173 = vsel %vm4170, %v4172, %v4168
        %v4174 = vrcp.pop %v3791
        %v4175 = vmul.f32 %v3791, %v4174
        %v4176 = vsub.f32 1.0, %v4175
        %v4177 = vmul.f32 %v4174, %v4176
        %v4178 = vadd.f32 %v4174, %v4177
        %vm4179 = vweird.f32 %v3791
        %vm4180 = vweird.f32 %v4174
        %vm4181 = vmor %vm4179, %vm4180
        %v4182 = vsel %vm4181, %v4174, %v4178
        %v4183 = vand.u32 2147483647, %v3791
        %vm4184 = vcmp.eq.f32.partialorder %v4183, 8.507059e+37
        %v4185 = vand.u32 %v3791, 2147483648
        %v4186 = vor.u32 1.1754944e-38, %v4185
        %v4187 = vsel %vm4184, %v4186, %v4182
        %v4188 = vrcp.pop %v3792
        %v4189 = vmul.f32 %v3792, %v4188
        %v4190 = vsub.f32 1.0, %v4189
        %v4191 = vmul.f32 %v4188, %v4190
        %v4192 = vadd.f32 %v4188, %v4191
        %vm4193 = vweird.f32 %v3792
        %vm4194 = vweird.f32 %v4188
        %vm4195 = vmor %vm4193, %vm4194
        %v4196 = vsel %vm4195, %v4188, %v4192
        %v4197 = vand.u32 2147483647, %v3792
        %vm4198 = vcmp.eq.f32.partialorder %v4197, 8.507059e+37
        %v4199 = vand.u32 %v3792, 2147483648
        %v4200 = vor.u32 1.1754944e-38, %v4199
        %v4201 = vsel %vm4198, %v4200, %v4196
        %v4202 = vrcp.pop %v3793
        %v4203 = vmul.f32 %v3793, %v4202
        %v4204 = vsub.f32 1.0, %v4203
        %v4205 = vmul.f32 %v4202, %v4204
        %v4206 = vadd.f32 %v4202, %v4205
        %vm4207 = vweird.f32 %v3793
        %vm4208 = vweird.f32 %v4202
        %vm4209 = vmor %vm4207, %vm4208
        %v4210 = vsel %vm4209, %v4202, %v4206
        %v4211 = vand.u32 2147483647, %v3793
        %vm4212 = vcmp.eq.f32.partialorder %v4211, 8.507059e+37
        %v4213 = vand.u32 %v3793, 2147483648
        %v4214 = vor.u32 1.1754944e-38, %v4213
        %v4215 = vsel %vm4212, %v4214, %v4210
        %v4216 = vrcp.pop %v3794
        %v4217 = vmul.f32 %v3794, %v4216
        %v4218 = vsub.f32 1.0, %v4217
        %v4219 = vmul.f32 %v4216, %v4218
        %v4220 = vadd.f32 %v4216, %v4219
        %vm4221 = vweird.f32 %v3794
        %vm4222 = vweird.f32 %v4216
        %vm4223 = vmor %vm4221, %vm4222
        %v4224 = vsel %vm4223, %v4216, %v4220
        %v4225 = vand.u32 2147483647, %v3794
        %vm4226 = vcmp.eq.f32.partialorder %v4225, 8.507059e+37
        %v4227 = vand.u32 %v3794, 2147483648
        %v4228 = vor.u32 1.1754944e-38, %v4227
        %v4229 = vsel %vm4226, %v4228, %v4224
        %v4230 = vrcp.pop %v3795
        %v4231 = vmul.f32 %v3795, %v4230
        %v4232 = vsub.f32 1.0, %v4231
        %v4233 = vmul.f32 %v4230, %v4232
        %v4234 = vadd.f32 %v4230, %v4233
        %vm4235 = vweird.f32 %v3795
        %vm4236 = vweird.f32 %v4230
        %vm4237 = vmor %vm4235, %vm4236
        %v4238 = vsel %vm4237, %v4230, %v4234
        %v4239 = vand.u32 2147483647, %v3795
        %vm4240 = vcmp.eq.f32.partialorder %v4239, 8.507059e+37
        %v4241 = vand.u32 %v3795, 2147483648
        %v4242 = vor.u32 1.1754944e-38, %v4241
        %v4243 = vsel %vm4240, %v4242, %v4238
        %4244 = vrot.lane.b32.xlu0 %v594, 120
        %v4245 = vpop.permute.xlu0 %4244
        %4246 = vrot.lane.b32.xlu0 %v706, 120
        %v4247 = vpop.permute.xlu0 %4246
        %v4251 = vsel %vm2132, %v2835, 0
        %v4254 = vsel %vm2132, %v2837, 0
        %4256 = vmatpush.msra.mxu0 0.0
        %4257 = vmatpush.msra.mxu0 0.0
        %4258 = vmatpush.msra.mxu0 0.0
        %4259 = vmatpush.msra.mxu0 0.0
        %4260 = vmatpush.msra.mxu0 0.0
        %4261 = vmatpush.msra.mxu0 0.0
        %4262 = vmatpush.msra.mxu0 0.0
        %4263 = vmatpush.msra.mxu0 0.0
        %4264 = vmatpush.msra.mxu0 0.0
        %4265 = vmatpush.msra.mxu0 0.0
        %4266 = vmatpush.msra.mxu0 0.0
        %4267 = vmatpush.msra.mxu0 0.0
        %4268 = vmatpush.msra.mxu0 0.0
        %4269 = vmatpush.msra.mxu0 0.0
        %4270 = vmatpush.msra.mxu0 %v4247
        %4271 = vmatpush.msra.mxu0 %v4245
        %4272 = vmatmul.f32.gmra.mxu0 %v4251
        %v4273 = vpop.f32.mrf.mxu0
        %v4274 = vadd.f32 0.0, %v4273
        %4275 = vmatmul.f32.gmra.mxu0 %v4254
        %v4276 = vpop.f32.mrf.mxu0
        %v4277 = vadd.f32 0.0, %v4276
        %4278 = vdwg.mxu0
        %4279 = vrot.lane.b32.xlu0 %v596, 120
        %v4280 = vpop.permute.xlu0 %4279
        %4281 = vrot.lane.b32.xlu0 %v708, 120
        %v4282 = vpop.permute.xlu0 %4281
        %v4286 = vsel %vm2132, %v2839, 0
        %v4289 = vsel %vm2132, %v2841, 0
        %4291 = vmatpush.msra.mxu0 0.0
        %4292 = vmatpush.msra.mxu0 0.0
        %4293 = vmatpush.msra.mxu0 0.0
        %4294 = vmatpush.msra.mxu0 0.0
        %4295 = vmatpush.msra.mxu0 0.0
        %4296 = vmatpush.msra.mxu0 0.0
        %4297 = vmatpush.msra.mxu0 0.0
        %4298 = vmatpush.msra.mxu0 0.0
        %4299 = vmatpush.msra.mxu0 0.0
        %4300 = vmatpush.msra.mxu0 0.0
        %4301 = vmatpush.msra.mxu0 0.0
        %4302 = vmatpush.msra.mxu0 0.0
        %4303 = vmatpush.msra.mxu0 0.0
        %4304 = vmatpush.msra.mxu0 0.0
        %4305 = vmatpush.msra.mxu0 %v4282
        %4306 = vmatpush.msra.mxu0 %v4280
        %4307 = vmatmul.f32.gmra.mxu0 %v4286
        %v4308 = vpop.f32.mrf.mxu0
        %v4309 = vadd.f32 0.0, %v4308
        %4310 = vmatmul.f32.gmra.mxu0 %v4289
        %v4311 = vpop.f32.mrf.mxu0
        %v4312 = vadd.f32 0.0, %v4311
        %4313 = vdwg.mxu0
        %4314 = vrot.lane.b32.xlu0 %v598, 120
        %v4315 = vpop.permute.xlu0 %4314
        %4316 = vrot.lane.b32.xlu0 %v710, 120
        %v4317 = vpop.permute.xlu0 %4316
        %v4321 = vsel %vm2132, %v2843, 0
        %v4324 = vsel %vm2132, %v2845, 0
        %4326 = vmatpush.msra.mxu0 0.0
        %4327 = vmatpush.msra.mxu0 0.0
        %4328 = vmatpush.msra.mxu0 0.0
        %4329 = vmatpush.msra.mxu0 0.0
        %4330 = vmatpush.msra.mxu0 0.0
        %4331 = vmatpush.msra.mxu0 0.0
        %4332 = vmatpush.msra.mxu0 0.0
        %4333 = vmatpush.msra.mxu0 0.0
        %4334 = vmatpush.msra.mxu0 0.0
        %4335 = vmatpush.msra.mxu0 0.0
        %4336 = vmatpush.msra.mxu0 0.0
        %4337 = vmatpush.msra.mxu0 0.0
        %4338 = vmatpush.msra.mxu0 0.0
        %4339 = vmatpush.msra.mxu0 0.0
        %4340 = vmatpush.msra.mxu0 %v4317
        %4341 = vmatpush.msra.mxu0 %v4315
        %4342 = vmatmul.f32.gmra.mxu0 %v4321
        %v4343 = vpop.f32.mrf.mxu0
        %v4344 = vadd.f32 0.0, %v4343
        %4345 = vmatmul.f32.gmra.mxu0 %v4324
        %v4346 = vpop.f32.mrf.mxu0
        %v4347 = vadd.f32 0.0, %v4346
        %4348 = vdwg.mxu0
        %4349 = vrot.lane.b32.xlu0 %v600, 120
        %v4350 = vpop.permute.xlu0 %4349
        %4351 = vrot.lane.b32.xlu0 %v712, 120
        %v4352 = vpop.permute.xlu0 %4351
        %v4356 = vsel %vm2132, %v2847, 0
        %v4359 = vsel %vm2132, %v2849, 0
        %4361 = vmatpush.msra.mxu0 0.0
        %4362 = vmatpush.msra.mxu0 0.0
        %4363 = vmatpush.msra.mxu0 0.0
        %4364 = vmatpush.msra.mxu0 0.0
        %4365 = vmatpush.msra.mxu0 0.0
        %4366 = vmatpush.msra.mxu0 0.0
        %4367 = vmatpush.msra.mxu0 0.0
        %4368 = vmatpush.msra.mxu0 0.0
        %4369 = vmatpush.msra.mxu0 0.0
        %4370 = vmatpush.msra.mxu0 0.0
        %4371 = vmatpush.msra.mxu0 0.0
        %4372 = vmatpush.msra.mxu0 0.0
        %4373 = vmatpush.msra.mxu0 0.0
        %4374 = vmatpush.msra.mxu0 0.0
        %4375 = vmatpush.msra.mxu0 %v4352
        %4376 = vmatpush.msra.mxu0 %v4350
        %4377 = vmatmul.f32.gmra.mxu0 %v4356
        %v4378 = vpop.f32.mrf.mxu0
        %v4379 = vadd.f32 0.0, %v4378
        %4380 = vmatmul.f32.gmra.mxu0 %v4359
        %v4381 = vpop.f32.mrf.mxu0
        %v4382 = vadd.f32 0.0, %v4381
        %4383 = vdwg.mxu0
        %4384 = vrot.lane.b32.xlu0 %v602, 120
        %v4385 = vpop.permute.xlu0 %4384
        %4386 = vrot.lane.b32.xlu0 %v714, 120
        %v4387 = vpop.permute.xlu0 %4386
        %v4391 = vsel %vm2132, %v2851, 0
        %v4394 = vsel %vm2132, %v2853, 0
        %4396 = vmatpush.msra.mxu0 0.0
        %4397 = vmatpush.msra.mxu0 0.0
        %4398 = vmatpush.msra.mxu0 0.0
        %4399 = vmatpush.msra.mxu0 0.0
        %4400 = vmatpush.msra.mxu0 0.0
        %4401 = vmatpush.msra.mxu0 0.0
        %4402 = vmatpush.msra.mxu0 0.0
        %4403 = vmatpush.msra.mxu0 0.0
        %4404 = vmatpush.msra.mxu0 0.0
        %4405 = vmatpush.msra.mxu0 0.0
        %4406 = vmatpush.msra.mxu0 0.0
        %4407 = vmatpush.msra.mxu0 0.0
        %4408 = vmatpush.msra.mxu0 0.0
        %4409 = vmatpush.msra.mxu0 0.0
        %4410 = vmatpush.msra.mxu0 %v4387
        %4411 = vmatpush.msra.mxu0 %v4385
        %4412 = vmatmul.f32.gmra.mxu0 %v4391
        %v4413 = vpop.f32.mrf.mxu0
        %v4414 = vadd.f32 0.0, %v4413
        %4415 = vmatmul.f32.gmra.mxu0 %v4394
        %v4416 = vpop.f32.mrf.mxu0
        %v4417 = vadd.f32 0.0, %v4416
        %4418 = vdwg.mxu0
        %4419 = vrot.lane.b32.xlu0 %v604, 120
        %v4420 = vpop.permute.xlu0 %4419
        %4421 = vrot.lane.b32.xlu0 %v716, 120
        %v4422 = vpop.permute.xlu0 %4421
        %v4426 = vsel %vm2132, %v2855, 0
        %v4429 = vsel %vm2132, %v2857, 0
        %4431 = vmatpush.msra.mxu0 0.0
        %4432 = vmatpush.msra.mxu0 0.0
        %4433 = vmatpush.msra.mxu0 0.0
        %4434 = vmatpush.msra.mxu0 0.0
        %4435 = vmatpush.msra.mxu0 0.0
        %4436 = vmatpush.msra.mxu0 0.0
        %4437 = vmatpush.msra.mxu0 0.0
        %4438 = vmatpush.msra.mxu0 0.0
        %4439 = vmatpush.msra.mxu0 0.0
        %4440 = vmatpush.msra.mxu0 0.0
        %4441 = vmatpush.msra.mxu0 0.0
        %4442 = vmatpush.msra.mxu0 0.0
        %4443 = vmatpush.msra.mxu0 0.0
        %4444 = vmatpush.msra.mxu0 0.0
        %4445 = vmatpush.msra.mxu0 %v4422
        %4446 = vmatpush.msra.mxu0 %v4420
        %4447 = vmatmul.f32.gmra.mxu0 %v4426
        %v4448 = vpop.f32.mrf.mxu0
        %v4449 = vadd.f32 0.0, %v4448
        %4450 = vmatmul.f32.gmra.mxu0 %v4429
        %v4451 = vpop.f32.mrf.mxu0
        %v4452 = vadd.f32 0.0, %v4451
        %4453 = vdwg.mxu0
        %4454 = vrot.lane.b32.xlu0 %v606, 120
        %v4455 = vpop.permute.xlu0 %4454
        %4456 = vrot.lane.b32.xlu0 %v718, 120
        %v4457 = vpop.permute.xlu0 %4456
        %v4461 = vsel %vm2132, %v2859, 0
        %v4464 = vsel %vm2132, %v2861, 0
        %4466 = vmatpush.msra.mxu0 0.0
        %4467 = vmatpush.msra.mxu0 0.0
        %4468 = vmatpush.msra.mxu0 0.0
        %4469 = vmatpush.msra.mxu0 0.0
        %4470 = vmatpush.msra.mxu0 0.0
        %4471 = vmatpush.msra.mxu0 0.0
        %4472 = vmatpush.msra.mxu0 0.0
        %4473 = vmatpush.msra.mxu0 0.0
        %4474 = vmatpush.msra.mxu0 0.0
        %4475 = vmatpush.msra.mxu0 0.0
        %4476 = vmatpush.msra.mxu0 0.0
        %4477 = vmatpush.msra.mxu0 0.0
        %4478 = vmatpush.msra.mxu0 0.0
        %4479 = vmatpush.msra.mxu0 0.0
        %4480 = vmatpush.msra.mxu0 %v4457
        %4481 = vmatpush.msra.mxu0 %v4455
        %4482 = vmatmul.f32.gmra.mxu0 %v4461
        %v4483 = vpop.f32.mrf.mxu0
        %v4484 = vadd.f32 0.0, %v4483
        %4485 = vmatmul.f32.gmra.mxu0 %v4464
        %v4486 = vpop.f32.mrf.mxu0
        %v4487 = vadd.f32 0.0, %v4486
        %4488 = vdwg.mxu0
        %4489 = vrot.lane.b32.xlu0 %v608, 120
        %v4490 = vpop.permute.xlu0 %4489
        %4491 = vrot.lane.b32.xlu0 %v720, 120
        %v4492 = vpop.permute.xlu0 %4491
        %v4496 = vsel %vm2132, %v2863, 0
        %v4499 = vsel %vm2132, %v2865, 0
        %4501 = vmatpush.msra.mxu0 0.0
        %4502 = vmatpush.msra.mxu0 0.0
        %4503 = vmatpush.msra.mxu0 0.0
        %4504 = vmatpush.msra.mxu0 0.0
        %4505 = vmatpush.msra.mxu0 0.0
        %4506 = vmatpush.msra.mxu0 0.0
        %4507 = vmatpush.msra.mxu0 0.0
        %4508 = vmatpush.msra.mxu0 0.0
        %4509 = vmatpush.msra.mxu0 0.0
        %4510 = vmatpush.msra.mxu0 0.0
        %4511 = vmatpush.msra.mxu0 0.0
        %4512 = vmatpush.msra.mxu0 0.0
        %4513 = vmatpush.msra.mxu0 0.0
        %4514 = vmatpush.msra.mxu0 0.0
        %4515 = vmatpush.msra.mxu0 %v4492
        %4516 = vmatpush.msra.mxu0 %v4490
        %4517 = vmatmul.f32.gmra.mxu0 %v4496
        %v4518 = vpop.f32.mrf.mxu0
        %v4519 = vadd.f32 0.0, %v4518
        %4520 = vmatmul.f32.gmra.mxu0 %v4499
        %v4521 = vpop.f32.mrf.mxu0
        %v4522 = vadd.f32 0.0, %v4521
        %4523 = vdwg.mxu0
        %4524 = vrot.lane.b32.xlu0 %v818, 120
        %v4525 = vpop.permute.xlu0 %4524
        %4526 = vrot.lane.b32.xlu0 %v930, 120
        %v4527 = vpop.permute.xlu0 %4526
        %v4531 = vsel %vm2132, %v2867, 0
        %v4534 = vsel %vm2132, %v2869, 0
        %4536 = vmatpush.msra.mxu0 0.0
        %4537 = vmatpush.msra.mxu0 0.0
        %4538 = vmatpush.msra.mxu0 0.0
        %4539 = vmatpush.msra.mxu0 0.0
        %4540 = vmatpush.msra.mxu0 0.0
        %4541 = vmatpush.msra.mxu0 0.0
        %4542 = vmatpush.msra.mxu0 0.0
        %4543 = vmatpush.msra.mxu0 0.0
        %4544 = vmatpush.msra.mxu0 0.0
        %4545 = vmatpush.msra.mxu0 0.0
        %4546 = vmatpush.msra.mxu0 0.0
        %4547 = vmatpush.msra.mxu0 0.0
        %4548 = vmatpush.msra.mxu0 0.0
        %4549 = vmatpush.msra.mxu0 0.0
        %4550 = vmatpush.msra.mxu0 %v4527
        %4551 = vmatpush.msra.mxu0 %v4525
        %4552 = vmatmul.f32.gmra.mxu0 %v4531
        %v4553 = vpop.f32.mrf.mxu0
        %v4554 = vadd.f32 0.0, %v4553
        %4555 = vmatmul.f32.gmra.mxu0 %v4534
        %v4556 = vpop.f32.mrf.mxu0
        %v4557 = vadd.f32 0.0, %v4556
        %4558 = vdwg.mxu0
        %4559 = vrot.lane.b32.xlu0 %v820, 120
        %v4560 = vpop.permute.xlu0 %4559
        %4561 = vrot.lane.b32.xlu0 %v932, 120
        %v4562 = vpop.permute.xlu0 %4561
        %v4566 = vsel %vm2132, %v2871, 0
        %v4569 = vsel %vm2132, %v2873, 0
        %4571 = vmatpush.msra.mxu0 0.0
        %4572 = vmatpush.msra.mxu0 0.0
        %4573 = vmatpush.msra.mxu0 0.0
        %4574 = vmatpush.msra.mxu0 0.0
        %4575 = vmatpush.msra.mxu0 0.0
        %4576 = vmatpush.msra.mxu0 0.0
        %4577 = vmatpush.msra.mxu0 0.0
        %4578 = vmatpush.msra.mxu0 0.0
        %4579 = vmatpush.msra.mxu0 0.0
        %4580 = vmatpush.msra.mxu0 0.0
        %4581 = vmatpush.msra.mxu0 0.0
        %4582 = vmatpush.msra.mxu0 0.0
        %4583 = vmatpush.msra.mxu0 0.0
        %4584 = vmatpush.msra.mxu0 0.0
        %4585 = vmatpush.msra.mxu0 %v4562
        %4586 = vmatpush.msra.mxu0 %v4560
        %4587 = vmatmul.f32.gmra.mxu0 %v4566
        %v4588 = vpop.f32.mrf.mxu0
        %v4589 = vadd.f32 0.0, %v4588
        %4590 = vmatmul.f32.gmra.mxu0 %v4569
        %v4591 = vpop.f32.mrf.mxu0
        %v4592 = vadd.f32 0.0, %v4591
        %4593 = vdwg.mxu0
        %4594 = vrot.lane.b32.xlu0 %v822, 120
        %v4595 = vpop.permute.xlu0 %4594
        %4596 = vrot.lane.b32.xlu0 %v934, 120
        %v4597 = vpop.permute.xlu0 %4596
        %v4601 = vsel %vm2132, %v2875, 0
        %v4604 = vsel %vm2132, %v2877, 0
        %4606 = vmatpush.msra.mxu0 0.0
        %4607 = vmatpush.msra.mxu0 0.0
        %4608 = vmatpush.msra.mxu0 0.0
        %4609 = vmatpush.msra.mxu0 0.0
        %4610 = vmatpush.msra.mxu0 0.0
        %4611 = vmatpush.msra.mxu0 0.0
        %4612 = vmatpush.msra.mxu0 0.0
        %4613 = vmatpush.msra.mxu0 0.0
        %4614 = vmatpush.msra.mxu0 0.0
        %4615 = vmatpush.msra.mxu0 0.0
        %4616 = vmatpush.msra.mxu0 0.0
        %4617 = vmatpush.msra.mxu0 0.0
        %4618 = vmatpush.msra.mxu0 0.0
        %4619 = vmatpush.msra.mxu0 0.0
        %4620 = vmatpush.msra.mxu0 %v4597
        %4621 = vmatpush.msra.mxu0 %v4595
        %4622 = vmatmul.f32.gmra.mxu0 %v4601
        %v4623 = vpop.f32.mrf.mxu0
        %v4624 = vadd.f32 0.0, %v4623
        %4625 = vmatmul.f32.gmra.mxu0 %v4604
        %v4626 = vpop.f32.mrf.mxu0
        %v4627 = vadd.f32 0.0, %v4626
        %4628 = vdwg.mxu0
        %4629 = vrot.lane.b32.xlu0 %v824, 120
        %v4630 = vpop.permute.xlu0 %4629
        %4631 = vrot.lane.b32.xlu0 %v936, 120
        %v4632 = vpop.permute.xlu0 %4631
        %v4636 = vsel %vm2132, %v2879, 0
        %v4639 = vsel %vm2132, %v2881, 0
        %4641 = vmatpush.msra.mxu0 0.0
        %4642 = vmatpush.msra.mxu0 0.0
        %4643 = vmatpush.msra.mxu0 0.0
        %4644 = vmatpush.msra.mxu0 0.0
        %4645 = vmatpush.msra.mxu0 0.0
        %4646 = vmatpush.msra.mxu0 0.0
        %4647 = vmatpush.msra.mxu0 0.0
        %4648 = vmatpush.msra.mxu0 0.0
        %4649 = vmatpush.msra.mxu0 0.0
        %4650 = vmatpush.msra.mxu0 0.0
        %4651 = vmatpush.msra.mxu0 0.0
        %4652 = vmatpush.msra.mxu0 0.0
        %4653 = vmatpush.msra.mxu0 0.0
        %4654 = vmatpush.msra.mxu0 0.0
        %4655 = vmatpush.msra.mxu0 %v4632
        %4656 = vmatpush.msra.mxu0 %v4630
        %4657 = vmatmul.f32.gmra.mxu0 %v4636
        %v4658 = vpop.f32.mrf.mxu0
        %v4659 = vadd.f32 0.0, %v4658
        %4660 = vmatmul.f32.gmra.mxu0 %v4639
        %v4661 = vpop.f32.mrf.mxu0
        %v4662 = vadd.f32 0.0, %v4661
        %4663 = vdwg.mxu0
        %4664 = vrot.lane.b32.xlu0 %v826, 120
        %v4665 = vpop.permute.xlu0 %4664
        %4666 = vrot.lane.b32.xlu0 %v938, 120
        %v4667 = vpop.permute.xlu0 %4666
        %v4671 = vsel %vm2132, %v2883, 0
        %v4674 = vsel %vm2132, %v2885, 0
        %4676 = vmatpush.msra.mxu0 0.0
        %4677 = vmatpush.msra.mxu0 0.0
        %4678 = vmatpush.msra.mxu0 0.0
        %4679 = vmatpush.msra.mxu0 0.0
        %4680 = vmatpush.msra.mxu0 0.0
        %4681 = vmatpush.msra.mxu0 0.0
        %4682 = vmatpush.msra.mxu0 0.0
        %4683 = vmatpush.msra.mxu0 0.0
        %4684 = vmatpush.msra.mxu0 0.0
        %4685 = vmatpush.msra.mxu0 0.0
        %4686 = vmatpush.msra.mxu0 0.0
        %4687 = vmatpush.msra.mxu0 0.0
        %4688 = vmatpush.msra.mxu0 0.0
        %4689 = vmatpush.msra.mxu0 0.0
        %4690 = vmatpush.msra.mxu0 %v4667
        %4691 = vmatpush.msra.mxu0 %v4665
        %4692 = vmatmul.f32.gmra.mxu0 %v4671
        %v4693 = vpop.f32.mrf.mxu0
        %v4694 = vadd.f32 0.0, %v4693
        %4695 = vmatmul.f32.gmra.mxu0 %v4674
        %v4696 = vpop.f32.mrf.mxu0
        %v4697 = vadd.f32 0.0, %v4696
        %4698 = vdwg.mxu0
        %4699 = vrot.lane.b32.xlu0 %v828, 120
        %v4700 = vpop.permute.xlu0 %4699
        %4701 = vrot.lane.b32.xlu0 %v940, 120
        %v4702 = vpop.permute.xlu0 %4701
        %v4706 = vsel %vm2132, %v2887, 0
        %v4709 = vsel %vm2132, %v2889, 0
        %4711 = vmatpush.msra.mxu0 0.0
        %4712 = vmatpush.msra.mxu0 0.0
        %4713 = vmatpush.msra.mxu0 0.0
        %4714 = vmatpush.msra.mxu0 0.0
        %4715 = vmatpush.msra.mxu0 0.0
        %4716 = vmatpush.msra.mxu0 0.0
        %4717 = vmatpush.msra.mxu0 0.0
        %4718 = vmatpush.msra.mxu0 0.0
        %4719 = vmatpush.msra.mxu0 0.0
        %4720 = vmatpush.msra.mxu0 0.0
        %4721 = vmatpush.msra.mxu0 0.0
        %4722 = vmatpush.msra.mxu0 0.0
        %4723 = vmatpush.msra.mxu0 0.0
        %4724 = vmatpush.msra.mxu0 0.0
        %4725 = vmatpush.msra.mxu0 %v4702
        %4726 = vmatpush.msra.mxu0 %v4700
        %4727 = vmatmul.f32.gmra.mxu0 %v4706
        %v4728 = vpop.f32.mrf.mxu0
        %v4729 = vadd.f32 0.0, %v4728
        %4730 = vmatmul.f32.gmra.mxu0 %v4709
        %v4731 = vpop.f32.mrf.mxu0
        %v4732 = vadd.f32 0.0, %v4731
        %4733 = vdwg.mxu0
        %4734 = vrot.lane.b32.xlu0 %v830, 120
        %v4735 = vpop.permute.xlu0 %4734
        %4736 = vrot.lane.b32.xlu0 %v942, 120
        %v4737 = vpop.permute.xlu0 %4736
        %v4741 = vsel %vm2132, %v2891, 0
        %v4744 = vsel %vm2132, %v2893, 0
        %4746 = vmatpush.msra.mxu0 0.0
        %4747 = vmatpush.msra.mxu0 0.0
        %4748 = vmatpush.msra.mxu0 0.0
        %4749 = vmatpush.msra.mxu0 0.0
        %4750 = vmatpush.msra.mxu0 0.0
        %4751 = vmatpush.msra.mxu0 0.0
        %4752 = vmatpush.msra.mxu0 0.0
        %4753 = vmatpush.msra.mxu0 0.0
        %4754 = vmatpush.msra.mxu0 0.0
        %4755 = vmatpush.msra.mxu0 0.0
        %4756 = vmatpush.msra.mxu0 0.0
        %4757 = vmatpush.msra.mxu0 0.0
        %4758 = vmatpush.msra.mxu0 0.0
        %4759 = vmatpush.msra.mxu0 0.0
        %4760 = vmatpush.msra.mxu0 %v4737
        %4761 = vmatpush.msra.mxu0 %v4735
        %4762 = vmatmul.f32.gmra.mxu0 %v4741
        %v4763 = vpop.f32.mrf.mxu0
        %v4764 = vadd.f32 0.0, %v4763
        %4765 = vmatmul.f32.gmra.mxu0 %v4744
        %v4766 = vpop.f32.mrf.mxu0
        %v4767 = vadd.f32 0.0, %v4766
        %4768 = vdwg.mxu0
        %4769 = vrot.lane.b32.xlu0 %v832, 120
        %v4770 = vpop.permute.xlu0 %4769
        %4771 = vrot.lane.b32.xlu0 %v944, 120
        %v4772 = vpop.permute.xlu0 %4771
        %v4776 = vsel %vm2132, %v2895, 0
        %v4779 = vsel %vm2132, %v2897, 0
        %4781 = vmatpush.msra.mxu0 0.0
        %4782 = vmatpush.msra.mxu0 0.0
        %4783 = vmatpush.msra.mxu0 0.0
        %4784 = vmatpush.msra.mxu0 0.0
        %4785 = vmatpush.msra.mxu0 0.0
        %4786 = vmatpush.msra.mxu0 0.0
        %4787 = vmatpush.msra.mxu0 0.0
        %4788 = vmatpush.msra.mxu0 0.0
        %4789 = vmatpush.msra.mxu0 0.0
        %4790 = vmatpush.msra.mxu0 0.0
        %4791 = vmatpush.msra.mxu0 0.0
        %4792 = vmatpush.msra.mxu0 0.0
        %4793 = vmatpush.msra.mxu0 0.0
        %4794 = vmatpush.msra.mxu0 0.0
        %4795 = vmatpush.msra.mxu0 %v4772
        %4796 = vmatpush.msra.mxu0 %v4770
        %4797 = vmatmul.f32.gmra.mxu0 %v4776
        %v4798 = vpop.f32.mrf.mxu0
        %v4799 = vadd.f32 0.0, %v4798
        %4800 = vmatmul.f32.gmra.mxu0 %v4779
        %v4801 = vpop.f32.mrf.mxu0
        %v4802 = vadd.f32 0.0, %v4801
        %4803 = vdwg.mxu0
        %v4804 = vrot.slane %v4344, 4
        %v4805 = vsel %vm497, %v4804, %v4274
        %v4806 = vrot.slane %v4274, 4
        %v4807 = vsel %vm497, %v4344, %v4806
        %v4809 = vunpack.c.l.s4 1983009808
        %v4810 = vunpack.c.0.s8 %v4809
        %v4811 = vperm.slane %v4805, %v4810
        %v4813 = vunpack.c.l.s4 1983009808
        %v4814 = vunpack.c.0.s8 %v4813
        %v4815 = vperm.slane %v4807, %v4814
        %v4816 = vrot.slane %v4379, 4
        %v4817 = vsel %vm497, %v4816, %v4309
        %v4818 = vrot.slane %v4309, 4
        %v4819 = vsel %vm497, %v4379, %v4818
        %v4821 = vunpack.c.l.s4 1983009808
        %v4822 = vunpack.c.0.s8 %v4821
        %v4823 = vperm.slane %v4817, %v4822
        %v4825 = vunpack.c.l.s4 1983009808
        %v4826 = vunpack.c.0.s8 %v4825
        %v4827 = vperm.slane %v4819, %v4826
        %v4828 = vrot.slane %v4484, 4
        %v4829 = vsel %vm497, %v4828, %v4414
        %v4830 = vrot.slane %v4414, 4
        %v4831 = vsel %vm497, %v4484, %v4830
        %v4833 = vunpack.c.l.s4 1983009808
        %v4834 = vunpack.c.0.s8 %v4833
        %v4835 = vperm.slane %v4829, %v4834
        %v4837 = vunpack.c.l.s4 1983009808
        %v4838 = vunpack.c.0.s8 %v4837
        %v4839 = vperm.slane %v4831, %v4838
        %v4840 = vrot.slane %v4519, 4
        %v4841 = vsel %vm497, %v4840, %v4449
        %v4842 = vrot.slane %v4449, 4
        %v4843 = vsel %vm497, %v4519, %v4842
        %v4845 = vunpack.c.l.s4 1983009808
        %v4846 = vunpack.c.0.s8 %v4845
        %v4847 = vperm.slane %v4841, %v4846
        %v4849 = vunpack.c.l.s4 1983009808
        %v4850 = vunpack.c.0.s8 %v4849
        %v4851 = vperm.slane %v4843, %v4850
        %v4852 = vrot.slane %v4823, 4
        %v4853 = vsel %vm497, %v4852, %v4811
        %v4854 = vrot.slane %v4811, 4
        %v4855 = vsel %vm497, %v4823, %v4854
        %v4857 = vunpack.c.l.s4 1934713408
        %v4858 = vunpack.c.0.s8 %v4857
        %v4859 = vperm.slane %v4853, %v4858
        %v4861 = vunpack.c.l.s4 1934713408
        %v4862 = vunpack.c.0.s8 %v4861
        %v4863 = vperm.slane %v4855, %v4862
        %v4864 = vrot.slane %v4827, 4
        %v4865 = vsel %vm497, %v4864, %v4815
        %v4866 = vrot.slane %v4815, 4
        %v4867 = vsel %vm497, %v4827, %v4866
        %v4869 = vunpack.c.l.s4 1934713408
        %v4870 = vunpack.c.0.s8 %v4869
        %v4871 = vperm.slane %v4865, %v4870
        %v4873 = vunpack.c.l.s4 1934713408
        %v4874 = vunpack.c.0.s8 %v4873
        %v4875 = vperm.slane %v4867, %v4874
        %v4876 = vrot.slane %v4847, 4
        %v4877 = vsel %vm497, %v4876, %v4835
        %v4878 = vrot.slane %v4835, 4
        %v4879 = vsel %vm497, %v4847, %v4878
        %v4881 = vunpack.c.l.s4 1934713408
        %v4882 = vunpack.c.0.s8 %v4881
        %v4883 = vperm.slane %v4877, %v4882
        %v4885 = vunpack.c.l.s4 1934713408
        %v4886 = vunpack.c.0.s8 %v4885
        %v4887 = vperm.slane %v4879, %v4886
        %v4888 = vrot.slane %v4851, 4
        %v4889 = vsel %vm497, %v4888, %v4839
        %v4890 = vrot.slane %v4839, 4
        %v4891 = vsel %vm497, %v4851, %v4890
        %v4893 = vunpack.c.l.s4 1934713408
        %v4894 = vunpack.c.0.s8 %v4893
        %v4895 = vperm.slane %v4889, %v4894
        %v4897 = vunpack.c.l.s4 1934713408
        %v4898 = vunpack.c.0.s8 %v4897
        %v4899 = vperm.slane %v4891, %v4898
        %v4900 = vrot.slane %v4883, 4
        %v4901 = vsel %vm497, %v4900, %v4859
        %v4902 = vrot.slane %v4859, 4
        %v4903 = vsel %vm497, %v4883, %v4902
        %v4904 = vrot.slane %v4887, 4
        %v4905 = vsel %vm497, %v4904, %v4863
        %v4906 = vrot.slane %v4863, 4
        %v4907 = vsel %vm497, %v4887, %v4906
        %v4908 = vrot.slane %v4895, 4
        %v4909 = vsel %vm497, %v4908, %v4871
        %v4910 = vrot.slane %v4871, 4
        %v4911 = vsel %vm497, %v4895, %v4910
        %v4912 = vrot.slane %v4899, 4
        %v4913 = vsel %vm497, %v4912, %v4875
        %v4914 = vrot.slane %v4875, 4
        %v4915 = vsel %vm497, %v4899, %v4914
        %v4916 = vrot.slane %v4624, 4
        %v4917 = vsel %vm497, %v4916, %v4554
        %v4918 = vrot.slane %v4554, 4
        %v4919 = vsel %vm497, %v4624, %v4918
        %v4921 = vunpack.c.l.s4 1983009808
        %v4922 = vunpack.c.0.s8 %v4921
        %v4923 = vperm.slane %v4917, %v4922
        %v4925 = vunpack.c.l.s4 1983009808
        %v4926 = vunpack.c.0.s8 %v4925
        %v4927 = vperm.slane %v4919, %v4926
        %v4928 = vrot.slane %v4659, 4
        %v4929 = vsel %vm497, %v4928, %v4589
        %v4930 = vrot.slane %v4589, 4
        %v4931 = vsel %vm497, %v4659, %v4930
        %v4933 = vunpack.c.l.s4 1983009808
        %v4934 = vunpack.c.0.s8 %v4933
        %v4935 = vperm.slane %v4929, %v4934
        %v4937 = vunpack.c.l.s4 1983009808
        %v4938 = vunpack.c.0.s8 %v4937
        %v4939 = vperm.slane %v4931, %v4938
        %v4940 = vrot.slane %v4764, 4
        %v4941 = vsel %vm497, %v4940, %v4694
        %v4942 = vrot.slane %v4694, 4
        %v4943 = vsel %vm497, %v4764, %v4942
        %v4945 = vunpack.c.l.s4 1983009808
        %v4946 = vunpack.c.0.s8 %v4945
        %v4947 = vperm.slane %v4941, %v4946
        %v4949 = vunpack.c.l.s4 1983009808
        %v4950 = vunpack.c.0.s8 %v4949
        %v4951 = vperm.slane %v4943, %v4950
        %v4952 = vrot.slane %v4799, 4
        %v4953 = vsel %vm497, %v4952, %v4729
        %v4954 = vrot.slane %v4729, 4
        %v4955 = vsel %vm497, %v4799, %v4954
        %v4957 = vunpack.c.l.s4 1983009808
        %v4958 = vunpack.c.0.s8 %v4957
        %v4959 = vperm.slane %v4953, %v4958
        %v4961 = vunpack.c.l.s4 1983009808
        %v4962 = vunpack.c.0.s8 %v4961
        %v4963 = vperm.slane %v4955, %v4962
        %v4964 = vrot.slane %v4935, 4
        %v4965 = vsel %vm497, %v4964, %v4923
        %v4966 = vrot.slane %v4923, 4
        %v4967 = vsel %vm497, %v4935, %v4966
        %v4969 = vunpack.c.l.s4 1934713408
        %v4970 = vunpack.c.0.s8 %v4969
        %v4971 = vperm.slane %v4965, %v4970
        %v4973 = vunpack.c.l.s4 1934713408
        %v4974 = vunpack.c.0.s8 %v4973
        %v4975 = vperm.slane %v4967, %v4974
        %v4976 = vrot.slane %v4939, 4
        %v4977 = vsel %vm497, %v4976, %v4927
        %v4978 = vrot.slane %v4927, 4
        %v4979 = vsel %vm497, %v4939, %v4978
        %v4981 = vunpack.c.l.s4 1934713408
        %v4982 = vunpack.c.0.s8 %v4981
        %v4983 = vperm.slane %v4977, %v4982
        %v4985 = vunpack.c.l.s4 1934713408
        %v4986 = vunpack.c.0.s8 %v4985
        %v4987 = vperm.slane %v4979, %v4986
        %v4988 = vrot.slane %v4959, 4
        %v4989 = vsel %vm497, %v4988, %v4947
        %v4990 = vrot.slane %v4947, 4
        %v4991 = vsel %vm497, %v4959, %v4990
        %v4993 = vunpack.c.l.s4 1934713408
        %v4994 = vunpack.c.0.s8 %v4993
        %v4995 = vperm.slane %v4989, %v4994
        %v4997 = vunpack.c.l.s4 1934713408
        %v4998 = vunpack.c.0.s8 %v4997
        %v4999 = vperm.slane %v4991, %v4998
        %v5000 = vrot.slane %v4963, 4
        %v5001 = vsel %vm497, %v5000, %v4951
        %v5002 = vrot.slane %v4951, 4
        %v5003 = vsel %vm497, %v4963, %v5002
        %v5005 = vunpack.c.l.s4 1934713408
        %v5006 = vunpack.c.0.s8 %v5005
        %v5007 = vperm.slane %v5001, %v5006
        %v5009 = vunpack.c.l.s4 1934713408
        %v5010 = vunpack.c.0.s8 %v5009
        %v5011 = vperm.slane %v5003, %v5010
        %v5012 = vrot.slane %v4995, 4
        %v5013 = vsel %vm497, %v5012, %v4971
        %v5014 = vrot.slane %v4971, 4
        %v5015 = vsel %vm497, %v4995, %v5014
        %v5016 = vrot.slane %v4999, 4
        %v5017 = vsel %vm497, %v5016, %v4975
        %v5018 = vrot.slane %v4975, 4
        %v5019 = vsel %vm497, %v4999, %v5018
        %v5020 = vrot.slane %v5007, 4
        %v5021 = vsel %vm497, %v5020, %v4983
        %v5022 = vrot.slane %v4983, 4
        %v5023 = vsel %vm497, %v5007, %v5022
        %v5024 = vrot.slane %v5011, 4
        %v5025 = vsel %vm497, %v5024, %v4987
        %v5026 = vrot.slane %v4987, 4
        %v5027 = vsel %vm497, %v5011, %v5026
        %v5028 = vrot.slane %v4347, 4
        %v5029 = vsel %vm497, %v5028, %v4277
        %v5030 = vrot.slane %v4277, 4
        %v5031 = vsel %vm497, %v4347, %v5030
        %v5033 = vunpack.c.l.s4 1983009808
        %v5034 = vunpack.c.0.s8 %v5033
        %v5035 = vperm.slane %v5029, %v5034
        %v5037 = vunpack.c.l.s4 1983009808
        %v5038 = vunpack.c.0.s8 %v5037
        %v5039 = vperm.slane %v5031, %v5038
        %v5040 = vrot.slane %v4382, 4
        %v5041 = vsel %vm497, %v5040, %v4312
        %v5042 = vrot.slane %v4312, 4
        %v5043 = vsel %vm497, %v4382, %v5042
        %v5045 = vunpack.c.l.s4 1983009808
        %v5046 = vunpack.c.0.s8 %v5045
        %v5047 = vperm.slane %v5041, %v5046
        %v5049 = vunpack.c.l.s4 1983009808
        %v5050 = vunpack.c.0.s8 %v5049
        %v5051 = vperm.slane %v5043, %v5050
        %v5052 = vrot.slane %v4487, 4
        %v5053 = vsel %vm497, %v5052, %v4417
        %v5054 = vrot.slane %v4417, 4
        %v5055 = vsel %vm497, %v4487, %v5054
        %v5057 = vunpack.c.l.s4 1983009808
        %v5058 = vunpack.c.0.s8 %v5057
        %v5059 = vperm.slane %v5053, %v5058
        %v5061 = vunpack.c.l.s4 1983009808
        %v5062 = vunpack.c.0.s8 %v5061
        %v5063 = vperm.slane %v5055, %v5062
        %v5064 = vrot.slane %v4522, 4
        %v5065 = vsel %vm497, %v5064, %v4452
        %v5066 = vrot.slane %v4452, 4
        %v5067 = vsel %vm497, %v4522, %v5066
        %v5069 = vunpack.c.l.s4 1983009808
        %v5070 = vunpack.c.0.s8 %v5069
        %v5071 = vperm.slane %v5065, %v5070
        %v5073 = vunpack.c.l.s4 1983009808
        %v5074 = vunpack.c.0.s8 %v5073
        %v5075 = vperm.slane %v5067, %v5074
        %v5076 = vrot.slane %v5047, 4
        %v5077 = vsel %vm497, %v5076, %v5035
        %v5078 = vrot.slane %v5035, 4
        %v5079 = vsel %vm497, %v5047, %v5078
        %v5081 = vunpack.c.l.s4 1934713408
        %v5082 = vunpack.c.0.s8 %v5081
        %v5083 = vperm.slane %v5077, %v5082
        %v5085 = vunpack.c.l.s4 1934713408
        %v5086 = vunpack.c.0.s8 %v5085
        %v5087 = vperm.slane %v5079, %v5086
        %v5088 = vrot.slane %v5051, 4
        %v5089 = vsel %vm497, %v5088, %v5039
        %v5090 = vrot.slane %v5039, 4
        %v5091 = vsel %vm497, %v5051, %v5090
        %v5093 = vunpack.c.l.s4 1934713408
        %v5094 = vunpack.c.0.s8 %v5093
        %v5095 = vperm.slane %v5089, %v5094
        %v5097 = vunpack.c.l.s4 1934713408
        %v5098 = vunpack.c.0.s8 %v5097
        %v5099 = vperm.slane %v5091, %v5098
        %v5100 = vrot.slane %v5071, 4
        %v5101 = vsel %vm497, %v5100, %v5059
        %v5102 = vrot.slane %v5059, 4
        %v5103 = vsel %vm497, %v5071, %v5102
        %v5105 = vunpack.c.l.s4 1934713408
        %v5106 = vunpack.c.0.s8 %v5105
        %v5107 = vperm.slane %v5101, %v5106
        %v5109 = vunpack.c.l.s4 1934713408
        %v5110 = vunpack.c.0.s8 %v5109
        %v5111 = vperm.slane %v5103, %v5110
        %v5112 = vrot.slane %v5075, 4
        %v5113 = vsel %vm497, %v5112, %v5063
        %v5114 = vrot.slane %v5063, 4
        %v5115 = vsel %vm497, %v5075, %v5114
        %v5117 = vunpack.c.l.s4 1934713408
        %v5118 = vunpack.c.0.s8 %v5117
        %v5119 = vperm.slane %v5113, %v5118
        %v5121 = vunpack.c.l.s4 1934713408
        %v5122 = vunpack.c.0.s8 %v5121
        %v5123 = vperm.slane %v5115, %v5122
        %v5124 = vrot.slane %v5107, 4
        %v5125 = vsel %vm497, %v5124, %v5083
        %v5126 = vrot.slane %v5083, 4
        %v5127 = vsel %vm497, %v5107, %v5126
        %v5128 = vrot.slane %v5111, 4
        %v5129 = vsel %vm497, %v5128, %v5087
        %v5130 = vrot.slane %v5087, 4
        %v5131 = vsel %vm497, %v5111, %v5130
        %v5132 = vrot.slane %v5119, 4
        %v5133 = vsel %vm497, %v5132, %v5095
        %v5134 = vrot.slane %v5095, 4
        %v5135 = vsel %vm497, %v5119, %v5134
        %v5136 = vrot.slane %v5123, 4
        %v5137 = vsel %vm497, %v5136, %v5099
        %v5138 = vrot.slane %v5099, 4
        %v5139 = vsel %vm497, %v5123, %v5138
        %v5140 = vrot.slane %v4627, 4
        %v5141 = vsel %vm497, %v5140, %v4557
        %v5142 = vrot.slane %v4557, 4
        %v5143 = vsel %vm497, %v4627, %v5142
        %v5145 = vunpack.c.l.s4 1983009808
        %v5146 = vunpack.c.0.s8 %v5145
        %v5147 = vperm.slane %v5141, %v5146
        %v5149 = vunpack.c.l.s4 1983009808
        %v5150 = vunpack.c.0.s8 %v5149
        %v5151 = vperm.slane %v5143, %v5150
        %v5152 = vrot.slane %v4662, 4
        %v5153 = vsel %vm497, %v5152, %v4592
        %v5154 = vrot.slane %v4592, 4
        %v5155 = vsel %vm497, %v4662, %v5154
        %v5157 = vunpack.c.l.s4 1983009808
        %v5158 = vunpack.c.0.s8 %v5157
        %v5159 = vperm.slane %v5153, %v5158
        %v5161 = vunpack.c.l.s4 1983009808
        %v5162 = vunpack.c.0.s8 %v5161
        %v5163 = vperm.slane %v5155, %v5162
        %v5164 = vrot.slane %v4767, 4
        %v5165 = vsel %vm497, %v5164, %v4697
        %v5166 = vrot.slane %v4697, 4
        %v5167 = vsel %vm497, %v4767, %v5166
        %v5169 = vunpack.c.l.s4 1983009808
        %v5170 = vunpack.c.0.s8 %v5169
        %v5171 = vperm.slane %v5165, %v5170
        %v5173 = vunpack.c.l.s4 1983009808
        %v5174 = vunpack.c.0.s8 %v5173
        %v5175 = vperm.slane %v5167, %v5174
        %v5176 = vrot.slane %v4802, 4
        %v5177 = vsel %vm497, %v5176, %v4732
        %v5178 = vrot.slane %v4732, 4
        %v5179 = vsel %vm497, %v4802, %v5178
        %v5181 = vunpack.c.l.s4 1983009808
        %v5182 = vunpack.c.0.s8 %v5181
        %v5183 = vperm.slane %v5177, %v5182
        %v5185 = vunpack.c.l.s4 1983009808
        %v5186 = vunpack.c.0.s8 %v5185
        %v5187 = vperm.slane %v5179, %v5186
        %v5188 = vrot.slane %v5159, 4
        %v5189 = vsel %vm497, %v5188, %v5147
        %v5190 = vrot.slane %v5147, 4
        %v5191 = vsel %vm497, %v5159, %v5190
        %v5193 = vunpack.c.l.s4 1934713408
        %v5194 = vunpack.c.0.s8 %v5193
        %v5195 = vperm.slane %v5189, %v5194
        %v5197 = vunpack.c.l.s4 1934713408
        %v5198 = vunpack.c.0.s8 %v5197
        %v5199 = vperm.slane %v5191, %v5198
        %v5200 = vrot.slane %v5163, 4
        %v5201 = vsel %vm497, %v5200, %v5151
        %v5202 = vrot.slane %v5151, 4
        %v5203 = vsel %vm497, %v5163, %v5202
        %v5205 = vunpack.c.l.s4 1934713408
        %v5206 = vunpack.c.0.s8 %v5205
        %v5207 = vperm.slane %v5201, %v5206
        %v5209 = vunpack.c.l.s4 1934713408
        %v5210 = vunpack.c.0.s8 %v5209
        %v5211 = vperm.slane %v5203, %v5210
        %v5212 = vrot.slane %v5183, 4
        %v5213 = vsel %vm497, %v5212, %v5171
        %v5214 = vrot.slane %v5171, 4
        %v5215 = vsel %vm497, %v5183, %v5214
        %v5217 = vunpack.c.l.s4 1934713408
        %v5218 = vunpack.c.0.s8 %v5217
        %v5219 = vperm.slane %v5213, %v5218
        %v5221 = vunpack.c.l.s4 1934713408
        %v5222 = vunpack.c.0.s8 %v5221
        %v5223 = vperm.slane %v5215, %v5222
        %v5224 = vrot.slane %v5187, 4
        %v5225 = vsel %vm497, %v5224, %v5175
        %v5226 = vrot.slane %v5175, 4
        %v5227 = vsel %vm497, %v5187, %v5226
        %v5229 = vunpack.c.l.s4 1934713408
        %v5230 = vunpack.c.0.s8 %v5229
        %v5231 = vperm.slane %v5225, %v5230
        %v5233 = vunpack.c.l.s4 1934713408
        %v5234 = vunpack.c.0.s8 %v5233
        %v5235 = vperm.slane %v5227, %v5234
        %v5236 = vrot.slane %v5219, 4
        %v5237 = vsel %vm497, %v5236, %v5195
        %v5238 = vrot.slane %v5195, 4
        %v5239 = vsel %vm497, %v5219, %v5238
        %v5240 = vrot.slane %v5223, 4
        %v5241 = vsel %vm497, %v5240, %v5199
        %v5242 = vrot.slane %v5199, 4
        %v5243 = vsel %vm497, %v5223, %v5242
        %v5244 = vrot.slane %v5231, 4
        %v5245 = vsel %vm497, %v5244, %v5207
        %v5246 = vrot.slane %v5207, 4
        %v5247 = vsel %vm497, %v5231, %v5246
        %v5248 = vrot.slane %v5235, 4
        %v5249 = vsel %vm497, %v5248, %v5211
        %v5250 = vrot.slane %v5211, 4
        %v5251 = vsel %vm497, %v5235, %v5250
        %5252 = vrot.lane.b32.xlu0 %v401, 120
        %v5253 = vpop.permute.xlu0 %5252
        %5254 = vrot.lane.b32.xlu0 %v404, 120
        %v5255 = vpop.permute.xlu0 %5254
        %v5259 = vsel %vm2132, %v3139, 0
        %v5262 = vsel %vm2132, %v3141, 0
        %5264 = vmatpush.msra.mxu0 0.0
        %5265 = vmatpush.msra.mxu0 0.0
        %5266 = vmatpush.msra.mxu0 0.0
        %5267 = vmatpush.msra.mxu0 0.0
        %5268 = vmatpush.msra.mxu0 0.0
        %5269 = vmatpush.msra.mxu0 0.0
        %5270 = vmatpush.msra.mxu0 0.0
        %5271 = vmatpush.msra.mxu0 0.0
        %5272 = vmatpush.msra.mxu0 0.0
        %5273 = vmatpush.msra.mxu0 0.0
        %5274 = vmatpush.msra.mxu0 0.0
        %5275 = vmatpush.msra.mxu0 0.0
        %5276 = vmatpush.msra.mxu0 0.0
        %5277 = vmatpush.msra.mxu0 0.0
        %5278 = vmatpush.msra.mxu0 %v5255
        %5279 = vmatpush.msra.mxu0 %v5253
        %5280 = vmatmul.f32.gmra.mxu0 %v5259
        %v5281 = vpop.f32.mrf.mxu0
        %v5282 = vadd.f32 0.0, %v5281
        %5283 = vmatmul.f32.gmra.mxu0 %v5262
        %v5284 = vpop.f32.mrf.mxu0
        %v5285 = vadd.f32 0.0, %v5284
        %5286 = vdwg.mxu0
        %5287 = vrot.lane.b32.xlu0 %v407, 120
        %v5288 = vpop.permute.xlu0 %5287
        %5289 = vrot.lane.b32.xlu0 %v410, 120
        %v5290 = vpop.permute.xlu0 %5289
        %v5294 = vsel %vm2132, %v3143, 0
        %v5297 = vsel %vm2132, %v3145, 0
        %5299 = vmatpush.msra.mxu0 0.0
        %5300 = vmatpush.msra.mxu0 0.0
        %5301 = vmatpush.msra.mxu0 0.0
        %5302 = vmatpush.msra.mxu0 0.0
        %5303 = vmatpush.msra.mxu0 0.0
        %5304 = vmatpush.msra.mxu0 0.0
        %5305 = vmatpush.msra.mxu0 0.0
        %5306 = vmatpush.msra.mxu0 0.0
        %5307 = vmatpush.msra.mxu0 0.0
        %5308 = vmatpush.msra.mxu0 0.0
        %5309 = vmatpush.msra.mxu0 0.0
        %5310 = vmatpush.msra.mxu0 0.0
        %5311 = vmatpush.msra.mxu0 0.0
        %5312 = vmatpush.msra.mxu0 0.0
        %5313 = vmatpush.msra.mxu0 %v5290
        %5314 = vmatpush.msra.mxu0 %v5288
        %5315 = vmatmul.f32.gmra.mxu0 %v5294
        %v5316 = vpop.f32.mrf.mxu0
        %v5317 = vadd.f32 0.0, %v5316
        %5318 = vmatmul.f32.gmra.mxu0 %v5297
        %v5319 = vpop.f32.mrf.mxu0
        %v5320 = vadd.f32 0.0, %v5319
        %5321 = vdwg.mxu0
        %5322 = vrot.lane.b32.xlu0 %v413, 120
        %v5323 = vpop.permute.xlu0 %5322
        %5324 = vrot.lane.b32.xlu0 %v416, 120
        %v5325 = vpop.permute.xlu0 %5324
        %v5329 = vsel %vm2132, %v3147, 0
        %v5332 = vsel %vm2132, %v3149, 0
        %5334 = vmatpush.msra.mxu0 0.0
        %5335 = vmatpush.msra.mxu0 0.0
        %5336 = vmatpush.msra.mxu0 0.0
        %5337 = vmatpush.msra.mxu0 0.0
        %5338 = vmatpush.msra.mxu0 0.0
        %5339 = vmatpush.msra.mxu0 0.0
        %5340 = vmatpush.msra.mxu0 0.0
        %5341 = vmatpush.msra.mxu0 0.0
        %5342 = vmatpush.msra.mxu0 0.0
        %5343 = vmatpush.msra.mxu0 0.0
        %5344 = vmatpush.msra.mxu0 0.0
        %5345 = vmatpush.msra.mxu0 0.0
        %5346 = vmatpush.msra.mxu0 0.0
        %5347 = vmatpush.msra.mxu0 0.0
        %5348 = vmatpush.msra.mxu0 %v5325
        %5349 = vmatpush.msra.mxu0 %v5323
        %5350 = vmatmul.f32.gmra.mxu0 %v5329
        %v5351 = vpop.f32.mrf.mxu0
        %v5352 = vadd.f32 0.0, %v5351
        %5353 = vmatmul.f32.gmra.mxu0 %v5332
        %v5354 = vpop.f32.mrf.mxu0
        %v5355 = vadd.f32 0.0, %v5354
        %5356 = vdwg.mxu0
        %5357 = vrot.lane.b32.xlu0 %v419, 120
        %v5358 = vpop.permute.xlu0 %5357
        %5359 = vrot.lane.b32.xlu0 %v422, 120
        %v5360 = vpop.permute.xlu0 %5359
        %v5364 = vsel %vm2132, %v3151, 0
        %v5367 = vsel %vm2132, %v3153, 0
        %5369 = vmatpush.msra.mxu0 0.0
        %5370 = vmatpush.msra.mxu0 0.0
        %5371 = vmatpush.msra.mxu0 0.0
        %5372 = vmatpush.msra.mxu0 0.0
        %5373 = vmatpush.msra.mxu0 0.0
        %5374 = vmatpush.msra.mxu0 0.0
        %5375 = vmatpush.msra.mxu0 0.0
        %5376 = vmatpush.msra.mxu0 0.0
        %5377 = vmatpush.msra.mxu0 0.0
        %5378 = vmatpush.msra.mxu0 0.0
        %5379 = vmatpush.msra.mxu0 0.0
        %5380 = vmatpush.msra.mxu0 0.0
        %5381 = vmatpush.msra.mxu0 0.0
        %5382 = vmatpush.msra.mxu0 0.0
        %5383 = vmatpush.msra.mxu0 %v5360
        %5384 = vmatpush.msra.mxu0 %v5358
        %5385 = vmatmul.f32.gmra.mxu0 %v5364
        %v5386 = vpop.f32.mrf.mxu0
        %v5387 = vadd.f32 0.0, %v5386
        %5388 = vmatmul.f32.gmra.mxu0 %v5367
        %v5389 = vpop.f32.mrf.mxu0
        %v5390 = vadd.f32 0.0, %v5389
        %5391 = vdwg.mxu0
        %5392 = vrot.lane.b32.xlu0 %v425, 120
        %v5393 = vpop.permute.xlu0 %5392
        %5394 = vrot.lane.b32.xlu0 %v428, 120
        %v5395 = vpop.permute.xlu0 %5394
        %v5399 = vsel %vm2132, %v3155, 0
        %v5402 = vsel %vm2132, %v3157, 0
        %5404 = vmatpush.msra.mxu0 0.0
        %5405 = vmatpush.msra.mxu0 0.0
        %5406 = vmatpush.msra.mxu0 0.0
        %5407 = vmatpush.msra.mxu0 0.0
        %5408 = vmatpush.msra.mxu0 0.0
        %5409 = vmatpush.msra.mxu0 0.0
        %5410 = vmatpush.msra.mxu0 0.0
        %5411 = vmatpush.msra.mxu0 0.0
        %5412 = vmatpush.msra.mxu0 0.0
        %5413 = vmatpush.msra.mxu0 0.0
        %5414 = vmatpush.msra.mxu0 0.0
        %5415 = vmatpush.msra.mxu0 0.0
        %5416 = vmatpush.msra.mxu0 0.0
        %5417 = vmatpush.msra.mxu0 0.0
        %5418 = vmatpush.msra.mxu0 %v5395
        %5419 = vmatpush.msra.mxu0 %v5393
        %5420 = vmatmul.f32.gmra.mxu0 %v5399
        %v5421 = vpop.f32.mrf.mxu0
        %v5422 = vadd.f32 0.0, %v5421
        %5423 = vmatmul.f32.gmra.mxu0 %v5402
        %v5424 = vpop.f32.mrf.mxu0
        %v5425 = vadd.f32 0.0, %v5424
        %5426 = vdwg.mxu0
        %5427 = vrot.lane.b32.xlu0 %v431, 120
        %v5428 = vpop.permute.xlu0 %5427
        %5429 = vrot.lane.b32.xlu0 %v434, 120
        %v5430 = vpop.permute.xlu0 %5429
        %v5434 = vsel %vm2132, %v3159, 0
        %v5437 = vsel %vm2132, %v3161, 0
        %5439 = vmatpush.msra.mxu0 0.0
        %5440 = vmatpush.msra.mxu0 0.0
        %5441 = vmatpush.msra.mxu0 0.0
        %5442 = vmatpush.msra.mxu0 0.0
        %5443 = vmatpush.msra.mxu0 0.0
        %5444 = vmatpush.msra.mxu0 0.0
        %5445 = vmatpush.msra.mxu0 0.0
        %5446 = vmatpush.msra.mxu0 0.0
        %5447 = vmatpush.msra.mxu0 0.0
        %5448 = vmatpush.msra.mxu0 0.0
        %5449 = vmatpush.msra.mxu0 0.0
        %5450 = vmatpush.msra.mxu0 0.0
        %5451 = vmatpush.msra.mxu0 0.0
        %5452 = vmatpush.msra.mxu0 0.0
        %5453 = vmatpush.msra.mxu0 %v5430
        %5454 = vmatpush.msra.mxu0 %v5428
        %5455 = vmatmul.f32.gmra.mxu0 %v5434
        %v5456 = vpop.f32.mrf.mxu0
        %v5457 = vadd.f32 0.0, %v5456
        %5458 = vmatmul.f32.gmra.mxu0 %v5437
        %v5459 = vpop.f32.mrf.mxu0
        %v5460 = vadd.f32 0.0, %v5459
        %5461 = vdwg.mxu0
        %5462 = vrot.lane.b32.xlu0 %v437, 120
        %v5463 = vpop.permute.xlu0 %5462
        %5464 = vrot.lane.b32.xlu0 %v440, 120
        %v5465 = vpop.permute.xlu0 %5464
        %v5469 = vsel %vm2132, %v3163, 0
        %v5472 = vsel %vm2132, %v3165, 0
        %5474 = vmatpush.msra.mxu0 0.0
        %5475 = vmatpush.msra.mxu0 0.0
        %5476 = vmatpush.msra.mxu0 0.0
        %5477 = vmatpush.msra.mxu0 0.0
        %5478 = vmatpush.msra.mxu0 0.0
        %5479 = vmatpush.msra.mxu0 0.0
        %5480 = vmatpush.msra.mxu0 0.0
        %5481 = vmatpush.msra.mxu0 0.0
        %5482 = vmatpush.msra.mxu0 0.0
        %5483 = vmatpush.msra.mxu0 0.0
        %5484 = vmatpush.msra.mxu0 0.0
        %5485 = vmatpush.msra.mxu0 0.0
        %5486 = vmatpush.msra.mxu0 0.0
        %5487 = vmatpush.msra.mxu0 0.0
        %5488 = vmatpush.msra.mxu0 %v5465
        %5489 = vmatpush.msra.mxu0 %v5463
        %5490 = vmatmul.f32.gmra.mxu0 %v5469
        %v5491 = vpop.f32.mrf.mxu0
        %v5492 = vadd.f32 0.0, %v5491
        %5493 = vmatmul.f32.gmra.mxu0 %v5472
        %v5494 = vpop.f32.mrf.mxu0
        %v5495 = vadd.f32 0.0, %v5494
        %5496 = vdwg.mxu0
        %5497 = vrot.lane.b32.xlu0 %v443, 120
        %v5498 = vpop.permute.xlu0 %5497
        %5499 = vrot.lane.b32.xlu0 %v446, 120
        %v5500 = vpop.permute.xlu0 %5499
        %v5504 = vsel %vm2132, %v3167, 0
        %v5507 = vsel %vm2132, %v3169, 0
        %5509 = vmatpush.msra.mxu0 0.0
        %5510 = vmatpush.msra.mxu0 0.0
        %5511 = vmatpush.msra.mxu0 0.0
        %5512 = vmatpush.msra.mxu0 0.0
        %5513 = vmatpush.msra.mxu0 0.0
        %5514 = vmatpush.msra.mxu0 0.0
        %5515 = vmatpush.msra.mxu0 0.0
        %5516 = vmatpush.msra.mxu0 0.0
        %5517 = vmatpush.msra.mxu0 0.0
        %5518 = vmatpush.msra.mxu0 0.0
        %5519 = vmatpush.msra.mxu0 0.0
        %5520 = vmatpush.msra.mxu0 0.0
        %5521 = vmatpush.msra.mxu0 0.0
        %5522 = vmatpush.msra.mxu0 0.0
        %5523 = vmatpush.msra.mxu0 %v5500
        %5524 = vmatpush.msra.mxu0 %v5498
        %5525 = vmatmul.f32.gmra.mxu0 %v5504
        %v5526 = vpop.f32.mrf.mxu0
        %v5527 = vadd.f32 0.0, %v5526
        %5528 = vmatmul.f32.gmra.mxu0 %v5507
        %v5529 = vpop.f32.mrf.mxu0
        %v5530 = vadd.f32 0.0, %v5529
        %5531 = vdwg.mxu0
        %5532 = vrot.lane.b32.xlu0 %v449, 120
        %v5533 = vpop.permute.xlu0 %5532
        %5534 = vrot.lane.b32.xlu0 %v452, 120
        %v5535 = vpop.permute.xlu0 %5534
        %v5539 = vsel %vm2132, %v3171, 0
        %v5542 = vsel %vm2132, %v3173, 0
        %5544 = vmatpush.msra.mxu0 0.0
        %5545 = vmatpush.msra.mxu0 0.0
        %5546 = vmatpush.msra.mxu0 0.0
        %5547 = vmatpush.msra.mxu0 0.0
        %5548 = vmatpush.msra.mxu0 0.0
        %5549 = vmatpush.msra.mxu0 0.0
        %5550 = vmatpush.msra.mxu0 0.0
        %5551 = vmatpush.msra.mxu0 0.0
        %5552 = vmatpush.msra.mxu0 0.0
        %5553 = vmatpush.msra.mxu0 0.0
        %5554 = vmatpush.msra.mxu0 0.0
        %5555 = vmatpush.msra.mxu0 0.0
        %5556 = vmatpush.msra.mxu0 0.0
        %5557 = vmatpush.msra.mxu0 0.0
        %5558 = vmatpush.msra.mxu0 %v5535
        %5559 = vmatpush.msra.mxu0 %v5533
        %5560 = vmatmul.f32.gmra.mxu0 %v5539
        %v5561 = vpop.f32.mrf.mxu0
        %v5562 = vadd.f32 0.0, %v5561
        %5563 = vmatmul.f32.gmra.mxu0 %v5542
        %v5564 = vpop.f32.mrf.mxu0
        %v5565 = vadd.f32 0.0, %v5564
        %5566 = vdwg.mxu0
        %5567 = vrot.lane.b32.xlu0 %v455, 120
        %v5568 = vpop.permute.xlu0 %5567
        %5569 = vrot.lane.b32.xlu0 %v458, 120
        %v5570 = vpop.permute.xlu0 %5569
        %v5574 = vsel %vm2132, %v3175, 0
        %v5577 = vsel %vm2132, %v3177, 0
        %5579 = vmatpush.msra.mxu0 0.0
        %5580 = vmatpush.msra.mxu0 0.0
        %5581 = vmatpush.msra.mxu0 0.0
        %5582 = vmatpush.msra.mxu0 0.0
        %5583 = vmatpush.msra.mxu0 0.0
        %5584 = vmatpush.msra.mxu0 0.0
        %5585 = vmatpush.msra.mxu0 0.0
        %5586 = vmatpush.msra.mxu0 0.0
        %5587 = vmatpush.msra.mxu0 0.0
        %5588 = vmatpush.msra.mxu0 0.0
        %5589 = vmatpush.msra.mxu0 0.0
        %5590 = vmatpush.msra.mxu0 0.0
        %5591 = vmatpush.msra.mxu0 0.0
        %5592 = vmatpush.msra.mxu0 0.0
        %5593 = vmatpush.msra.mxu0 %v5570
        %5594 = vmatpush.msra.mxu0 %v5568
        %5595 = vmatmul.f32.gmra.mxu0 %v5574
        %v5596 = vpop.f32.mrf.mxu0
        %v5597 = vadd.f32 0.0, %v5596
        %5598 = vmatmul.f32.gmra.mxu0 %v5577
        %v5599 = vpop.f32.mrf.mxu0
        %v5600 = vadd.f32 0.0, %v5599
        %5601 = vdwg.mxu0
        %5602 = vrot.lane.b32.xlu0 %v461, 120
        %v5603 = vpop.permute.xlu0 %5602
        %5604 = vrot.lane.b32.xlu0 %v464, 120
        %v5605 = vpop.permute.xlu0 %5604
        %v5609 = vsel %vm2132, %v3179, 0
        %v5612 = vsel %vm2132, %v3181, 0
        %5614 = vmatpush.msra.mxu0 0.0
        %5615 = vmatpush.msra.mxu0 0.0
        %5616 = vmatpush.msra.mxu0 0.0
        %5617 = vmatpush.msra.mxu0 0.0
        %5618 = vmatpush.msra.mxu0 0.0
        %5619 = vmatpush.msra.mxu0 0.0
        %5620 = vmatpush.msra.mxu0 0.0
        %5621 = vmatpush.msra.mxu0 0.0
        %5622 = vmatpush.msra.mxu0 0.0
        %5623 = vmatpush.msra.mxu0 0.0
        %5624 = vmatpush.msra.mxu0 0.0
        %5625 = vmatpush.msra.mxu0 0.0
        %5626 = vmatpush.msra.mxu0 0.0
        %5627 = vmatpush.msra.mxu0 0.0
        %5628 = vmatpush.msra.mxu0 %v5605
        %5629 = vmatpush.msra.mxu0 %v5603
        %5630 = vmatmul.f32.gmra.mxu0 %v5609
        %v5631 = vpop.f32.mrf.mxu0
        %v5632 = vadd.f32 0.0, %v5631
        %5633 = vmatmul.f32.gmra.mxu0 %v5612
        %v5634 = vpop.f32.mrf.mxu0
        %v5635 = vadd.f32 0.0, %v5634
        %5636 = vdwg.mxu0
        %5637 = vrot.lane.b32.xlu0 %v467, 120
        %v5638 = vpop.permute.xlu0 %5637
        %5639 = vrot.lane.b32.xlu0 %v470, 120
        %v5640 = vpop.permute.xlu0 %5639
        %v5644 = vsel %vm2132, %v3183, 0
        %v5647 = vsel %vm2132, %v3185, 0
        %5649 = vmatpush.msra.mxu0 0.0
        %5650 = vmatpush.msra.mxu0 0.0
        %5651 = vmatpush.msra.mxu0 0.0
        %5652 = vmatpush.msra.mxu0 0.0
        %5653 = vmatpush.msra.mxu0 0.0
        %5654 = vmatpush.msra.mxu0 0.0
        %5655 = vmatpush.msra.mxu0 0.0
        %5656 = vmatpush.msra.mxu0 0.0
        %5657 = vmatpush.msra.mxu0 0.0
        %5658 = vmatpush.msra.mxu0 0.0
        %5659 = vmatpush.msra.mxu0 0.0
        %5660 = vmatpush.msra.mxu0 0.0
        %5661 = vmatpush.msra.mxu0 0.0
        %5662 = vmatpush.msra.mxu0 0.0
        %5663 = vmatpush.msra.mxu0 %v5640
        %5664 = vmatpush.msra.mxu0 %v5638
        %5665 = vmatmul.f32.gmra.mxu0 %v5644
        %v5666 = vpop.f32.mrf.mxu0
        %v5667 = vadd.f32 0.0, %v5666
        %5668 = vmatmul.f32.gmra.mxu0 %v5647
        %v5669 = vpop.f32.mrf.mxu0
        %v5670 = vadd.f32 0.0, %v5669
        %5671 = vdwg.mxu0
        %5672 = vrot.lane.b32.xlu0 %v473, 120
        %v5673 = vpop.permute.xlu0 %5672
        %5674 = vrot.lane.b32.xlu0 %v476, 120
        %v5675 = vpop.permute.xlu0 %5674
        %v5679 = vsel %vm2132, %v3187, 0
        %v5682 = vsel %vm2132, %v3189, 0
        %5684 = vmatpush.msra.mxu0 0.0
        %5685 = vmatpush.msra.mxu0 0.0
        %5686 = vmatpush.msra.mxu0 0.0
        %5687 = vmatpush.msra.mxu0 0.0
        %5688 = vmatpush.msra.mxu0 0.0
        %5689 = vmatpush.msra.mxu0 0.0
        %5690 = vmatpush.msra.mxu0 0.0
        %5691 = vmatpush.msra.mxu0 0.0
        %5692 = vmatpush.msra.mxu0 0.0
        %5693 = vmatpush.msra.mxu0 0.0
        %5694 = vmatpush.msra.mxu0 0.0
        %5695 = vmatpush.msra.mxu0 0.0
        %5696 = vmatpush.msra.mxu0 0.0
        %5697 = vmatpush.msra.mxu0 0.0
        %5698 = vmatpush.msra.mxu0 %v5675
        %5699 = vmatpush.msra.mxu0 %v5673
        %5700 = vmatmul.f32.gmra.mxu0 %v5679
        %v5701 = vpop.f32.mrf.mxu0
        %v5702 = vadd.f32 0.0, %v5701
        %5703 = vmatmul.f32.gmra.mxu0 %v5682
        %v5704 = vpop.f32.mrf.mxu0
        %v5705 = vadd.f32 0.0, %v5704
        %5706 = vdwg.mxu0
        %5707 = vrot.lane.b32.xlu0 %v479, 120
        %v5708 = vpop.permute.xlu0 %5707
        %5709 = vrot.lane.b32.xlu0 %v482, 120
        %v5710 = vpop.permute.xlu0 %5709
        %v5714 = vsel %vm2132, %v3191, 0
        %v5717 = vsel %vm2132, %v3193, 0
        %5719 = vmatpush.msra.mxu0 0.0
        %5720 = vmatpush.msra.mxu0 0.0
        %5721 = vmatpush.msra.mxu0 0.0
        %5722 = vmatpush.msra.mxu0 0.0
        %5723 = vmatpush.msra.mxu0 0.0
        %5724 = vmatpush.msra.mxu0 0.0
        %5725 = vmatpush.msra.mxu0 0.0
        %5726 = vmatpush.msra.mxu0 0.0
        %5727 = vmatpush.msra.mxu0 0.0
        %5728 = vmatpush.msra.mxu0 0.0
        %5729 = vmatpush.msra.mxu0 0.0
        %5730 = vmatpush.msra.mxu0 0.0
        %5731 = vmatpush.msra.mxu0 0.0
        %5732 = vmatpush.msra.mxu0 0.0
        %5733 = vmatpush.msra.mxu0 %v5710
        %5734 = vmatpush.msra.mxu0 %v5708
        %5735 = vmatmul.f32.gmra.mxu0 %v5714
        %v5736 = vpop.f32.mrf.mxu0
        %v5737 = vadd.f32 0.0, %v5736
        %5738 = vmatmul.f32.gmra.mxu0 %v5717
        %v5739 = vpop.f32.mrf.mxu0
        %v5740 = vadd.f32 0.0, %v5739
        %5741 = vdwg.mxu0
        %5742 = vrot.lane.b32.xlu0 %v485, 120
        %v5743 = vpop.permute.xlu0 %5742
        %5744 = vrot.lane.b32.xlu0 %v488, 120
        %v5745 = vpop.permute.xlu0 %5744
        %v5749 = vsel %vm2132, %v3195, 0
        %v5752 = vsel %vm2132, %v3197, 0
        %5754 = vmatpush.msra.mxu0 0.0
        %5755 = vmatpush.msra.mxu0 0.0
        %5756 = vmatpush.msra.mxu0 0.0
        %5757 = vmatpush.msra.mxu0 0.0
        %5758 = vmatpush.msra.mxu0 0.0
        %5759 = vmatpush.msra.mxu0 0.0
        %5760 = vmatpush.msra.mxu0 0.0
        %5761 = vmatpush.msra.mxu0 0.0
        %5762 = vmatpush.msra.mxu0 0.0
        %5763 = vmatpush.msra.mxu0 0.0
        %5764 = vmatpush.msra.mxu0 0.0
        %5765 = vmatpush.msra.mxu0 0.0
        %5766 = vmatpush.msra.mxu0 0.0
        %5767 = vmatpush.msra.mxu0 0.0
        %5768 = vmatpush.msra.mxu0 %v5745
        %5769 = vmatpush.msra.mxu0 %v5743
        %5770 = vmatmul.f32.gmra.mxu0 %v5749
        %v5771 = vpop.f32.mrf.mxu0
        %v5772 = vadd.f32 0.0, %v5771
        %5773 = vmatmul.f32.gmra.mxu0 %v5752
        %v5774 = vpop.f32.mrf.mxu0
        %v5775 = vadd.f32 0.0, %v5774
        %5776 = vdwg.mxu0
        %5777 = vrot.lane.b32.xlu0 %v491, 120
        %v5778 = vpop.permute.xlu0 %5777
        %5779 = vrot.lane.b32.xlu0 %v494, 120
        %v5780 = vpop.permute.xlu0 %5779
        %v5784 = vsel %vm2132, %v3199, 0
        %v5787 = vsel %vm2132, %v3201, 0
        %5789 = vmatpush.msra.mxu0 0.0
        %5790 = vmatpush.msra.mxu0 0.0
        %5791 = vmatpush.msra.mxu0 0.0
        %5792 = vmatpush.msra.mxu0 0.0
        %5793 = vmatpush.msra.mxu0 0.0
        %5794 = vmatpush.msra.mxu0 0.0
        %5795 = vmatpush.msra.mxu0 0.0
        %5796 = vmatpush.msra.mxu0 0.0
        %5797 = vmatpush.msra.mxu0 0.0
        %5798 = vmatpush.msra.mxu0 0.0
        %5799 = vmatpush.msra.mxu0 0.0
        %5800 = vmatpush.msra.mxu0 0.0
        %5801 = vmatpush.msra.mxu0 0.0
        %5802 = vmatpush.msra.mxu0 0.0
        %5803 = vmatpush.msra.mxu0 %v5780
        %5804 = vmatpush.msra.mxu0 %v5778
        %5805 = vmatmul.f32.gmra.mxu0 %v5784
        %v5806 = vpop.f32.mrf.mxu0
        %v5807 = vadd.f32 0.0, %v5806
        %5808 = vmatmul.f32.gmra.mxu0 %v5787
        %v5809 = vpop.f32.mrf.mxu0
        %v5810 = vadd.f32 0.0, %v5809
        %5811 = vdwg.mxu0
        %s5812 = sld [smem:[#allocation2]]
        %v5813 = vadd.f32 %v4901, %v5282
        %v5814 = vadd.f32 %v5013, %v5285
        %v5815 = vadd.f32 %v4903, %v5317
        %v5816 = vadd.f32 %v5015, %v5320
        %v5817 = vadd.f32 %v4905, %v5352
        %v5818 = vadd.f32 %v5017, %v5355
        %v5819 = vadd.f32 %v4907, %v5387
        %v5820 = vadd.f32 %v5019, %v5390
        %v5821 = vadd.f32 %v4909, %v5422
        %v5822 = vadd.f32 %v5021, %v5425
        %v5823 = vadd.f32 %v4911, %v5457
        %v5824 = vadd.f32 %v5023, %v5460
        %v5825 = vadd.f32 %v4913, %v5492
        %v5826 = vadd.f32 %v5025, %v5495
        %v5827 = vadd.f32 %v4915, %v5527
        %v5828 = vadd.f32 %v5027, %v5530
        %v5829 = vadd.f32 %v5125, %v5562
        %v5830 = vadd.f32 %v5237, %v5565
        %v5831 = vadd.f32 %v5127, %v5597
        %v5832 = vadd.f32 %v5239, %v5600
        %v5833 = vadd.f32 %v5129, %v5632
        %v5834 = vadd.f32 %v5241, %v5635
        %v5835 = vadd.f32 %v5131, %v5667
        %v5836 = vadd.f32 %v5243, %v5670
        %v5837 = vadd.f32 %v5133, %v5702
        %v5838 = vadd.f32 %v5245, %v5705
        %v5839 = vadd.f32 %v5135, %v5737
        %v5840 = vadd.f32 %v5247, %v5740
        %v5841 = vadd.f32 %v5137, %v5772
        %v5842 = vadd.f32 %v5249, %v5775
        %v5843 = vadd.f32 %v5139, %v5807
        %v5844 = vadd.f32 %v5251, %v5810
        %5846 = vset.pattern.permute.xlu0 0
        %5847 = vperm.xlu0 %5846, %v3809
        %v5848 = vpop.permute.xlu0 %5847
        %5851 = vset.pattern.permute.xlu0 0
        %5852 = vperm.xlu0 %5851, %v3823
        %v5853 = vpop.permute.xlu0 %5852
        %5856 = vset.pattern.permute.xlu0 0
        %5857 = vperm.xlu0 %5856, %v3837
        %v5858 = vpop.permute.xlu0 %5857
        %5861 = vset.pattern.permute.xlu0 0
        %5862 = vperm.xlu0 %5861, %v3851
        %v5863 = vpop.permute.xlu0 %5862
        %5866 = vset.pattern.permute.xlu0 0
        %5867 = vperm.xlu0 %5866, %v3865
        %v5868 = vpop.permute.xlu0 %5867
        %5871 = vset.pattern.permute.xlu0 0
        %5872 = vperm.xlu0 %5871, %v3879
        %v5873 = vpop.permute.xlu0 %5872
        %5876 = vset.pattern.permute.xlu0 0
        %5877 = vperm.xlu0 %5876, %v3893
        %v5878 = vpop.permute.xlu0 %5877
        %5881 = vset.pattern.permute.xlu0 0
        %5882 = vperm.xlu0 %5881, %v3907
        %v5883 = vpop.permute.xlu0 %5882
        %5886 = vset.pattern.permute.xlu0 0
        %5887 = vperm.xlu0 %5886, %v3921
        %v5888 = vpop.permute.xlu0 %5887
        %5891 = vset.pattern.permute.xlu0 0
        %5892 = vperm.xlu0 %5891, %v3935
        %v5893 = vpop.permute.xlu0 %5892
        %5896 = vset.pattern.permute.xlu0 0
        %5897 = vperm.xlu0 %5896, %v3949
        %v5898 = vpop.permute.xlu0 %5897
        %5901 = vset.pattern.permute.xlu0 0
        %5902 = vperm.xlu0 %5901, %v3963
        %v5903 = vpop.permute.xlu0 %5902
        %5906 = vset.pattern.permute.xlu0 0
        %5907 = vperm.xlu0 %5906, %v3977
        %v5908 = vpop.permute.xlu0 %5907
        %5911 = vset.pattern.permute.xlu0 0
        %5912 = vperm.xlu0 %5911, %v3991
        %v5913 = vpop.permute.xlu0 %5912
        %5916 = vset.pattern.permute.xlu0 0
        %5917 = vperm.xlu0 %5916, %v4005
        %v5918 = vpop.permute.xlu0 %5917
        %5921 = vset.pattern.permute.xlu0 0
        %5922 = vperm.xlu0 %5921, %v4019
        %v5923 = vpop.permute.xlu0 %5922
        %5926 = vset.pattern.permute.xlu0 0
        %5927 = vperm.xlu0 %5926, %v4033
        %v5928 = vpop.permute.xlu0 %5927
        %5931 = vset.pattern.permute.xlu0 0
        %5932 = vperm.xlu0 %5931, %v4047
        %v5933 = vpop.permute.xlu0 %5932
        %5936 = vset.pattern.permute.xlu0 0
        %5937 = vperm.xlu0 %5936, %v4061
        %v5938 = vpop.permute.xlu0 %5937
        %5941 = vset.pattern.permute.xlu0 0
        %5942 = vperm.xlu0 %5941, %v4075
        %v5943 = vpop.permute.xlu0 %5942
        %5946 = vset.pattern.permute.xlu0 0
        %5947 = vperm.xlu0 %5946, %v4089
        %v5948 = vpop.permute.xlu0 %5947
        %5951 = vset.pattern.permute.xlu0 0
        %5952 = vperm.xlu0 %5951, %v4103
        %v5953 = vpop.permute.xlu0 %5952
        %5956 = vset.pattern.permute.xlu0 0
        %5957 = vperm.xlu0 %5956, %v4117
        %v5958 = vpop.permute.xlu0 %5957
        %5961 = vset.pattern.permute.xlu0 0
        %5962 = vperm.xlu0 %5961, %v4131
        %v5963 = vpop.permute.xlu0 %5962
        %5966 = vset.pattern.permute.xlu0 0
        %5967 = vperm.xlu0 %5966, %v4145
        %v5968 = vpop.permute.xlu0 %5967
        %5971 = vset.pattern.permute.xlu0 0
        %5972 = vperm.xlu0 %5971, %v4159
        %v5973 = vpop.permute.xlu0 %5972
        %5976 = vset.pattern.permute.xlu0 0
        %5977 = vperm.xlu0 %5976, %v4173
        %v5978 = vpop.permute.xlu0 %5977
        %5981 = vset.pattern.permute.xlu0 0
        %5982 = vperm.xlu0 %5981, %v4187
        %v5983 = vpop.permute.xlu0 %5982
        %5986 = vset.pattern.permute.xlu0 0
        %5987 = vperm.xlu0 %5986, %v4201
        %v5988 = vpop.permute.xlu0 %5987
        %5991 = vset.pattern.permute.xlu0 0
        %5992 = vperm.xlu0 %5991, %v4215
        %v5993 = vpop.permute.xlu0 %5992
        %5996 = vset.pattern.permute.xlu0 0
        %5997 = vperm.xlu0 %5996, %v4229
        %v5998 = vpop.permute.xlu0 %5997
        %6001 = vset.pattern.permute.xlu0 0
        %6002 = vperm.xlu0 %6001, %v4243
        %v6003 = vpop.permute.xlu0 %6002
        %v6005 = vmul.f32 %v5848, %v5813
        %v6006 = vmul.f32 %v5853, %v5814
        %v6007 = vmul.f32 %v5858, %v5815
        %v6008 = vmul.f32 %v5863, %v5816
        %v6009 = vmul.f32 %v5868, %v5817
        %v6010 = vmul.f32 %v5873, %v5818
        %v6011 = vmul.f32 %v5878, %v5819
        %v6012 = vmul.f32 %v5883, %v5820
        %v6013 = vmul.f32 %v5888, %v5821
        %v6014 = vmul.f32 %v5893, %v5822
        %v6015 = vmul.f32 %v5898, %v5823
        %v6016 = vmul.f32 %v5903, %v5824
        %v6017 = vmul.f32 %v5908, %v5825
        %v6018 = vmul.f32 %v5913, %v5826
        %v6019 = vmul.f32 %v5918, %v5827
        %v6020 = vmul.f32 %v5923, %v5828
        %v6021 = vmul.f32 %v5928, %v5829
        %v6022 = vmul.f32 %v5933, %v5830
        %v6023 = vmul.f32 %v5938, %v5831
        %v6024 = vmul.f32 %v5943, %v5832
        %v6025 = vmul.f32 %v5948, %v5833
        %v6026 = vmul.f32 %v5953, %v5834
        %v6027 = vmul.f32 %v5958, %v5835
        %v6028 = vmul.f32 %v5963, %v5836
        %v6029 = vmul.f32 %v5968, %v5837
        %v6030 = vmul.f32 %v5973, %v5838
        %v6031 = vmul.f32 %v5978, %v5839
        %v6032 = vmul.f32 %v5983, %v5840
        %v6033 = vmul.f32 %v5988, %v5841
        %v6034 = vmul.f32 %v5993, %v5842
        %v6035 = vmul.f32 %v5998, %v5843
        %v6036 = vmul.f32 %v6003, %v5844
        %v6037 = vstv %s5812
        %v6038 = vmul.f32 %v6037, %v6005
        %v6039 = vmul.f32 %v6037, %v6006
        %v6040 = vmul.f32 %v6037, %v6007
        %v6041 = vmul.f32 %v6037, %v6008
        %v6042 = vmul.f32 %v6037, %v6009
        %v6043 = vmul.f32 %v6037, %v6010
        %v6044 = vmul.f32 %v6037, %v6011
        %v6045 = vmul.f32 %v6037, %v6012
        %v6046 = vmul.f32 %v6037, %v6013
        %v6047 = vmul.f32 %v6037, %v6014
        %v6048 = vmul.f32 %v6037, %v6015
        %v6049 = vmul.f32 %v6037, %v6016
        %v6050 = vmul.f32 %v6037, %v6017
        %v6051 = vmul.f32 %v6037, %v6018
        %v6052 = vmul.f32 %v6037, %v6019
        %v6053 = vmul.f32 %v6037, %v6020
        %v6054 = vmul.f32 %v6037, %v6021
        %v6055 = vmul.f32 %v6037, %v6022
        %v6056 = vmul.f32 %v6037, %v6023
        %v6057 = vmul.f32 %v6037, %v6024
        %v6058 = vmul.f32 %v6037, %v6025
        %v6059 = vmul.f32 %v6037, %v6026
        %v6060 = vmul.f32 %v6037, %v6027
        %v6061 = vmul.f32 %v6037, %v6028
        %v6062 = vmul.f32 %v6037, %v6029
        %v6063 = vmul.f32 %v6037, %v6030
        %v6064 = vmul.f32 %v6037, %v6031
        %v6065 = vmul.f32 %v6037, %v6032
        %v6066 = vmul.f32 %v6037, %v6033
        %v6067 = vmul.f32 %v6037, %v6034
        %v6068 = vmul.f32 %v6037, %v6035
        %v6069 = vmul.f32 %v6037, %v6036
        %v6070 = vadd.f32 %v6038, %v246
        %v6071 = vadd.f32 %v6039, %v247
        %v6072 = vadd.f32 %v6040, %v248
        %v6073 = vadd.f32 %v6041, %v249
        %v6074 = vadd.f32 %v6042, %v250
        %v6075 = vadd.f32 %v6043, %v251
        %v6076 = vadd.f32 %v6044, %v252
        %v6077 = vadd.f32 %v6045, %v253
        %v6078 = vadd.f32 %v6046, %v254
        %v6079 = vadd.f32 %v6047, %v255
        %v6080 = vadd.f32 %v6048, %v256
        %v6081 = vadd.f32 %v6049, %v257
        %v6082 = vadd.f32 %v6050, %v258
        %v6083 = vadd.f32 %v6051, %v259
        %v6084 = vadd.f32 %v6052, %v260
        %v6085 = vadd.f32 %v6053, %v261
        %v6086 = vadd.f32 %v6054, %v262
        %v6087 = vadd.f32 %v6055, %v263
        %v6088 = vadd.f32 %v6056, %v264
        %v6089 = vadd.f32 %v6057, %v265
        %v6090 = vadd.f32 %v6058, %v266
        %v6091 = vadd.f32 %v6059, %v267
        %v6092 = vadd.f32 %v6060, %v268
        %v6093 = vadd.f32 %v6061, %v269
        %v6094 = vadd.f32 %v6062, %v270
        %v6095 = vadd.f32 %v6063, %v271
        %v6096 = vadd.f32 %v6064, %v272
        %v6097 = vadd.f32 %v6065, %v273
        %v6098 = vadd.f32 %v6066, %v274
        %v6099 = vadd.f32 %v6067, %v275
        %v6100 = vadd.f32 %v6068, %v276
        %v6101 = vadd.f32 %v6069, %v277
        %6102 = vst.msk [vmem:[%s245] sm:$0xff] %vm286, %v6070
        %6103 = vst.msk [vmem:[%s245 + $0x8] sm:$0xff] %vm286, %v6071
        %6104 = vst.msk [vmem:[%s245 + $0x10] sm:$0xff] %vm286, %v6072
        %6105 = vst.msk [vmem:[%s245 + $0x18] sm:$0xff] %vm286, %v6073
        %6106 = vst.msk [vmem:[%s245 + $0x20] sm:$0xff] %vm286, %v6074
        %6107 = vst.msk [vmem:[%s245 + $0x28] sm:$0xff] %vm286, %v6075
        %6108 = vst.msk [vmem:[%s245 + $0x30] sm:$0xff] %vm286, %v6076
        %6109 = vst.msk [vmem:[%s245 + $0x38] sm:$0xff] %vm286, %v6077
        %6110 = vst.msk [vmem:[%s245 + $0x40] sm:$0xff] %vm286, %v6078
        %6111 = vst.msk [vmem:[%s245 + $0x48] sm:$0xff] %vm286, %v6079
        %6112 = vst.msk [vmem:[%s245 + $0x50] sm:$0xff] %vm286, %v6080
        %6113 = vst.msk [vmem:[%s245 + $0x58] sm:$0xff] %vm286, %v6081
        %6114 = vst.msk [vmem:[%s245 + $0x60] sm:$0xff] %vm286, %v6082
        %6115 = vst.msk [vmem:[%s245 + $0x68] sm:$0xff] %vm286, %v6083
        %6116 = vst.msk [vmem:[%s245 + $0x70] sm:$0xff] %vm286, %v6084
        %6117 = vst.msk [vmem:[%s245 + $0x78] sm:$0xff] %vm286, %v6085
        %6118 = vst.msk [vmem:[%s245 + $0x80] sm:$0xff] %vm286, %v6086
        %6119 = vst.msk [vmem:[%s245 + $0x88] sm:$0xff] %vm286, %v6087
        %6120 = vst.msk [vmem:[%s245 + $0x90] sm:$0xff] %vm286, %v6088
        %6121 = vst.msk [vmem:[%s245 + $0x98] sm:$0xff] %vm286, %v6089
        %6122 = vst.msk [vmem:[%s245 + $0xa0] sm:$0xff] %vm286, %v6090
        %6123 = vst.msk [vmem:[%s245 + $0xa8] sm:$0xff] %vm286, %v6091
        %6124 = vst.msk [vmem:[%s245 + $0xb0] sm:$0xff] %vm286, %v6092
        %6125 = vst.msk [vmem:[%s245 + $0xb8] sm:$0xff] %vm286, %v6093
        %6126 = vst.msk [vmem:[%s245 + $0xc0] sm:$0xff] %vm286, %v6094
        %6127 = vst.msk [vmem:[%s245 + $0xc8] sm:$0xff] %vm286, %v6095
        %6128 = vst.msk [vmem:[%s245 + $0xd0] sm:$0xff] %vm286, %v6096
        %6129 = vst.msk [vmem:[%s245 + $0xd8] sm:$0xff] %vm286, %v6097
        %6130 = vst.msk [vmem:[%s245 + $0xe0] sm:$0xff] %vm286, %v6098
        %6131 = vst.msk [vmem:[%s245 + $0xe8] sm:$0xff] %vm286, %v6099
        %6132 = vst.msk [vmem:[%s245 + $0xf0] sm:$0xff] %vm286, %v6100
        %6133 = vst.msk [vmem:[%s245 + $0xf8] sm:$0xff] %vm286, %v6101
        %s6134 = sand.u32 %s141, 1
        %s6135 = scalar_lea.sflag [#allocation5], %s6134
        %s6136 = sand.u32 %s141, 1
        %s6137 = smul.addr %s6136, 256
        %s6138 = scalar_lea.vmem [#allocation6], %s6137
        // Predicated region
        $region45: #{criss_cross_attention.1} parent=39 // pred_check
          %p6139 = pneg %p151
        $region46: #{criss_cross_attention.1} parent=39 // pred_check_branch
          %6141 = sbr.rel (%p6139) target = $region48
        $region47: #{criss_cross_attention.1} parent=39 // pred_region
          %6143 = vsyncadd %s6135, 0
          %s6144 = smul.addr %s23, 32
          %s6145 = smul.addr %s6144, 8
          %s6146 = scalar_lea.hbm %s5, %s6145
          %s6147 = sshll.u32 %s6138, 4
          %s6148 = int_to_ptr.vmem [resolvable:$true] %s6147
          %s6149 = sshll.u32 %s6146, 4
          %s6150 = int_to_ptr.hbm [resolvable:$true] %s6149
          %6155 = dma.vmem_to_hbm [thread:$0]  %s6148, 4096, %s6150, %s6135, 128, 128, 8
        $region48: #{criss_cross_attention.1} parent=39 // pred_fallthru
          _
      $region40: #{criss_cross_attention.1} parent=5 // pred_fallthru
        _
      %p6156 = scmp.le.s32.totalorder 2, %s18
      // Predicated region
      $region49: #{criss_cross_attention.1} parent=5 // pred_check
        %p6157 = pneg %p6156
      $region50: #{criss_cross_attention.1} parent=5 // pred_check_branch
        %6159 = sbr.rel (%p6157) target = $region52
      $region51: #{criss_cross_attention.1} parent=5 // pred_region
        %s6160 = ssub.s32 %s18, 2
        // Predicated region
        $region53: #{criss_cross_attention.1} parent=51 // pred_check
          %p6161 = pneg %p157
        $region54: #{criss_cross_attention.1} parent=51 // pred_check_branch
          %6163 = sbr.rel (%p6161) target = $region56
        $region55: #{criss_cross_attention.1} parent=51 // pred_region
          %s6164 = sand.u32 %s142, 1
          %s6165 = scalar_lea.sflag [#allocation5], %s6164
          %s6166 = sand.u32 %s142, 1
          %s6167 = smul.addr %s6166, 256
          %s6168 = scalar_lea.vmem [#allocation6], %s6167
          %6170 = dma.done %s6165, 4096
        $region56: #{criss_cross_attention.1} parent=51 // pred_fallthru
          _
      $region52: #{criss_cross_attention.1} parent=5 // pred_fallthru
        _
    $region6: #{criss_cross_attention.1} parent=1 // loop_footer
      %s22 = sadd.s32 1, %s18
    $region7: #{criss_cross_attention.1} parent=1 // loop_footer_branch
      %17 = sbr.rel target = $region3
    $region8: #{criss_cross_attention.1} parent=1 // loop_exit
      _
    %6171 = vsyncpa [#allocation4], 1
    %s6172 = scalar_lea.sflag [#allocation4], 1
    %6173 = vsyncpa %s6172, 1
    %6174 = vsyncpa [#allocation5], 1
    %s6175 = scalar_lea.sflag [#allocation5], 1
    %6176 = vsyncpa %s6175, 1

</llo_original>
